<compile_context>
chip_gen: v6e
topology: v6e:2x2x1
jax: 0.10.0
libtpu: 0.0.40
codegen_flags: <defaults>
</compile_context>

<pallas_src>
import functools

import jax
import jax.numpy as jnp
from jax import lax
from jax.experimental import pallas as pl
from jax.experimental.pallas import tpu as pltpu

GN_EPS = 1e-5
NUM_GROUPS = 8


# ------------------------------ kernel helpers -------------------------------

def _silu(v):
    return v * jax.nn.sigmoid(v)


def _group_stats(s, ss, pool, count, eps):
    """Per-channel (mean, inv_std) from per-channel sums via a group-pool matmul.

    s, ss : (1, C) per-channel sum / sum-of-squares.
    pool  : (C, C) constant with pool[i, j] = 1 iff channels i, j share a group.
    """
    gsum = jnp.dot(s, pool, preferred_element_type=jnp.float32)     # (1, C)
    gsq = jnp.dot(ss, pool, preferred_element_type=jnp.float32)     # (1, C)
    mean = gsum / count
    var = jnp.maximum(gsq / count - mean * mean, 0.0)   # clamp: E[x^2]-m^2 >= 0
    inv = lax.rsqrt(var + eps)
    return mean, inv


# ------------------------------- kernel bodies --------------------------------

def _gn_conv_gn_kernel(xp_ref, mask_ref, g1g_ref, g1b_ref, pool1_ref,
                       w1_ref, b1_ref, g2g_ref, g2b_ref, pool2_ref,
                       o_ref, g1_scr, *, h, w, num_groups, eps):
    """GN1 + SiLU + Conv3x3 (9 shifted matmuls) + bias + GN2 + SiLU, one sample."""
    hp, wp, cin = xp_ref.shape            # (h+2, w+2, cin), zero-padded input
    cout = o_ref.shape[-1]
    hw = h * w

    xp = xp_ref[...]                                           # (hp, wp, cin)

    # --- GroupNorm(8, cin): the zero padding contributes nothing to the sums.
    srow = jnp.sum(xp, axis=0)                                 # (wp, cin)
    sqrow = jnp.sum(xp * xp, axis=0)                           # (wp, cin)
    s = jnp.sum(srow, axis=0, keepdims=True)                   # (1, cin)
    ss = jnp.sum(sqrow, axis=0, keepdims=True)                 # (1, cin)
    cnt1 = jnp.float32(hw * (cin // num_groups))
    mean1, inv1 = _group_stats(s, ss, pool1_ref[...], cnt1, eps)
    a1 = (inv1 * g1g_ref[...]).reshape(1, 1, cin)
    c1off = (g1b_ref[...] - mean1 * inv1 * g1g_ref[...]).reshape(1, 1, cin)
    # SiLU, then re-zero the halo so the shifted matmuls see true zero padding.
    g1_scr[...] = _silu(xp * a1 + c1off) * mask_ref[...]       # (hp, wp, cin)

    # --- Conv3x3 as 9 shifted (HW, Cin) @ (Cin, Cout) MXU matmuls (f32 acc).
    acc = jnp.zeros((hw, cout), dtype=jnp.float32)
    for dy in range(3):
        for dx in range(3):
            tap = g1_scr[dy:dy + h, dx:dx + w, :].reshape(hw, cin)
            acc = acc + jnp.dot(tap, w1_ref[dy, dx, :, :],
                                preferred_element_type=jnp.float32)
    c1 = acc + b1_ref[...]                                     # (hw, cout)

    # --- GroupNorm(8, cout) + SiLU on the conv1 output.
    s2 = jnp.sum(c1, axis=0, keepdims=True)                    # (1, cout)
    ss2 = jnp.sum(c1 * c1, axis=0, keepdims=True)              # (1, cout)
    cnt2 = jnp.float32(hw * (cout // num_groups))
    mean2, inv2 = _group_stats(s2, ss2, pool2_ref[...], cnt2, eps)
    g2 = _silu((c1 - mean2) * inv2 * g2g_ref[...] + g2b_ref[...])

    o_ref[...] = g2.reshape(h, w, cout)


def _conv_film_skip_kernel(g2p_ref, xp_ref, t_ref, w2_ref, b2_ref,
                           tws_ref, twh_ref, tbs_ref, tbh_ref,
                           wsk_ref, bsk_ref, o_ref, *, h, w):
    """Conv3x3 (9 shifted matmuls) + bias + time-FiLM + 1x1 skip + residual."""
    cout = o_ref.shape[-1]
    cin = xp_ref.shape[-1]
    hw = h * w

    # --- Conv3x3 on the zero-padded GN2/SiLU activations.
    acc = jnp.zeros((hw, cout), dtype=jnp.float32)
    for dy in range(3):
        for dx in range(3):
            tap = g2p_ref[dy:dy + h, dx:dx + w, :].reshape(hw, cout)
            acc = acc + jnp.dot(tap, w2_ref[dy, dx, :, :],
                                preferred_element_type=jnp.float32)
    hcur = acc + b2_ref[...]                                   # (hw, cout)

    # --- time_mlp (SiLU -> Linear, pre-chunked weights), folded in as FiLM.
    ts = _silu(t_ref[pl.program_id(0)])                        # (1, tdim)
    film_scale = (jnp.dot(ts, tws_ref[...],
                          preferred_element_type=jnp.float32) + tbs_ref[...])
    film_shift = (jnp.dot(ts, twh_ref[...],
                          preferred_element_type=jnp.float32) + tbh_ref[...])
    hcur = hcur * (1.0 + film_scale) + film_shift

    # --- skip: 1x1 conv on x (interior of the padded tile) + residual add.
    xin = xp_ref[1:h + 1, 1:w + 1, :].reshape(hw, cin)
    skip = (jnp.dot(xin, wsk_ref[...],
                    preferred_element_type=jnp.float32) + bsk_ref[...])

    o_ref[...] = (hcur + skip).reshape(h, w, cout)


# ----------------------------- wrapper-side helpers ----------------------------

def _const_spec(shape):
    nd = len(shape)
    return pl.BlockSpec(shape, lambda i: (0,) * nd)


def _group_pool(c, groups):
    gid = jnp.arange(c, dtype=jnp.int32) // (c // groups)
    return (gid[:, None] == gid[None, :]).astype(jnp.float32)       # (C, C)


def _interior_mask(h, w):
    r = jnp.arange(h + 2)
    c = jnp.arange(w + 2)
    m = ((r >= 1) & (r <= h))[:, None] & ((c >= 1) & (c <= w))[None, :]
    return m.astype(jnp.float32)[:, :, None]                        # (h+2, w+2, 1)


def time_res_block(x_nchw, t_embed, params):
    """Pallas forward pass matching TimeResBlock.forward (NCHW in / NCHW out)."""
    n, cin, h, w = x_nchw.shape
    cout = params["conv1_w"].shape[-1]
    tdim = t_embed.shape[-1]
    hp, wp = h + 2, w + 2
    hw = h * w

    # NHWC internally: channels on the lane axis. Pad spatially once (cheap,
    # ~27% of x) so both 3x3 convs run as uniform shifted matmuls in-kernel.
    x_nhwc = jnp.transpose(x_nchw, (0, 2, 3, 1)).astype(jnp.float32)
    x_pad = jnp.pad(x_nhwc, ((0, 0), (1, 1), (1, 1), (0, 0)))
    mask = _interior_mask(h, w)
    pool1 = _group_pool(cin, NUM_GROUPS)
    pool2 = _group_pool(cout, NUM_GROUPS)
    t3 = t_embed.astype(jnp.float32).reshape(n, 1, tdim)

    # ---- kernel A: GN1 + SiLU + conv1 + bias + GN2 + SiLU (per sample) ------
    kern_a = functools.partial(_gn_conv_gn_kernel, h=h, w=w,
                               num_groups=NUM_GROUPS, eps=GN_EPS)
    cost_a = pl.CostEstimate(
        flops=n * (18 * hw * cin * cout + 4 * (cin * cin + cout * cout)),
        transcendentals=n * (hp * wp * cin + hw * cout),
        bytes_accessed=4 * (n * hp * wp * cin + n * hw * cout + hp * wp
                            + cin * cin + cout * cout + 9 * cin * cout
                            + 2 * cin + 4 * cout))
    g2 = pl.pallas_call(
        kern_a,
        out_shape=jax.ShapeDtypeStruct((n, h, w, cout), jnp.float32),
        grid=(n,),
        in_specs=[pl.BlockSpec((None, hp, wp, cin), lambda i: (i, 0, 0, 0)),
                  _const_spec((hp, wp, 1)),
                  _const_spec((1, cin)), _const_spec((1, cin)),
                  _const_spec((cin, cin)),
                  _const_spec((3, 3, cin, cout)), _const_spec((1, cout)),
                  _const_spec((1, cout)), _const_spec((1, cout)),
                  _const_spec((cout, cout))],
        out_specs=pl.BlockSpec((None, h, w, cout), lambda i: (i, 0, 0, 0)),
        scratch_shapes=[pltpu.VMEM((hp, wp, cin), jnp.float32)],
        compiler_params=pltpu.CompilerParams(dimension_semantics=("parallel",)),
        cost_estimate=cost_a,
    )(x_pad, mask, params["gn1_gamma"], params["gn1_beta"], pool1,
      params["conv1_w"], params["conv1_b"],
      params["gn2_gamma"], params["gn2_beta"], pool2)

    # Zero-pad the intermediate activations for conv2 (layout plumbing in XLA).
    g2_pad = jnp.pad(g2, ((0, 0), (1, 1), (1, 1), (0, 0)))

    # ---- kernel B: conv2 + bias + FiLM(time_mlp) + 1x1 skip + residual ------
    kern_b = functools.partial(_conv_film_skip_kernel, h=h, w=w)
    cost_b = pl.CostEstimate(
        flops=n * (18 * hw * cout * cout + 2 * hw * cin * cout
                   + 4 * tdim * cout + 4 * hw * cout),
        transcendentals=n * tdim,
        bytes_accessed=4 * (n * hp * wp * (cout + cin) + n * hw * cout
                            + 9 * cout * cout + cin * cout + 2 * tdim * cout
                            + n * tdim + 5 * cout))
    out_nhwc = pl.pallas_call(
        kern_b,
        out_shape=jax.ShapeDtypeStruct((n, h, w, cout), jnp.float32),
        grid=(n,),
        in_specs=[pl.BlockSpec((None, hp, wp, cout), lambda i: (i, 0, 0, 0)),
                  pl.BlockSpec((None, hp, wp, cin), lambda i: (i, 0, 0, 0)),
                  _const_spec((n, 1, tdim)),
                  _const_spec((3, 3, cout, cout)), _const_spec((1, cout)),
                  _const_spec((tdim, cout)), _const_spec((tdim, cout)),
                  _const_spec((1, cout)), _const_spec((1, cout)),
                  _const_spec((cin, cout)), _const_spec((1, cout))],
        out_specs=pl.BlockSpec((None, h, w, cout), lambda i: (i, 0, 0, 0)),
        compiler_params=pltpu.CompilerParams(dimension_semantics=("parallel",)),
        cost_estimate=cost_b,
    )(g2_pad, x_pad, t3, params["conv2_w"], params["conv2_b"],
      params["time_w_scale"], params["time_w_shift"],
      params["time_b_scale"], params["time_b_shift"],
      params["skip_w"], params["skip_b"])

    return jnp.transpose(out_nhwc, (0, 3, 1, 2))


# ------------------------------ pure-JAX reference ------------------------------

def time_res_block_ref(x_nchw, t_embed, params):
    x = jnp.transpose(x_nchw, (0, 2, 3, 1)).astype(jnp.float32)
    cout = params["conv1_w"].shape[-1]

    def silu(v):
        return v * jax.nn.sigmoid(v)

    def gn(v, gamma, beta):
        nb, hh, ww, cc = v.shape
        gs = cc // NUM_GROUPS
        vr = v.reshape(nb, hh * ww, NUM_GROUPS, gs)
        mean = vr.mean(axis=(1, 3), keepdims=True)
        var = ((vr - mean) ** 2).mean(axis=(1, 3), keepdims=True)
        vn = ((vr - mean) / jnp.sqrt(var + GN_EPS)).reshape(nb, hh, ww, cc)
        return vn * gamma.reshape(1, 1, 1, cc) + beta.reshape(1, 1, 1, cc)

    def conv3(v, w_hwio, b):
        y = lax.conv_general_dilated(
            v, w_hwio, (1, 1), "SAME",
            dimension_numbers=("NHWC", "HWIO", "NHWC"),
            precision=lax.Precision.HIGHEST)
        return y + b.reshape(1, 1, 1, -1)

    ts = silu(t_embed.astype(jnp.float32))
    scale = ts @ params["time_w_scale"] + params["time_b_scale"][0]
    shift = ts @ params["time_w_shift"] + params["time_b_shift"][0]

    hcur = silu(gn(x, params["gn1_gamma"], params["gn1_beta"]))
    hcur = conv3(hcur, params["conv1_w"], params["conv1_b"])
    hcur = silu(gn(hcur, params["gn2_gamma"], params["gn2_beta"]))
    hcur = conv3(hcur, params["conv2_w"], params["conv2_b"])
    hcur = hcur * (1.0 + scale[:, None, None, :]) + shift[:, None, None, :]
    skip = (jnp.einsum("nhwc,cd->nhwd", x, params["skip_w"],
                       precision=lax.Precision.HIGHEST)
            + params["skip_b"].reshape(1, 1, 1, cout))
    return jnp.transpose(hcur + skip, (0, 3, 1, 2))


# ------------------------------------- main --------------------------------------

if __name__ == "__main__":
    in_dim, out_dim, time_embed_dim = 16, 32, 32
    batch, height, width = 2, 16, 16

    key = jax.random.PRNGKey(0)
    ks = jax.random.split(key, 16)

    def rnd(k, shape, scl=1.0):
        return jax.random.normal(k, shape, dtype=jnp.float32) * scl

    params = {
        # time_mlp Linear(time_embed_dim, 2*out_dim), pre-split into the
        # (scale, shift) chunks once at parameter setup.
        "time_w_scale": rnd(ks[0], (time_embed_dim, out_dim), time_embed_dim ** -0.5),
        "time_w_shift": rnd(ks[1], (time_embed_dim, out_dim), time_embed_dim ** -0.5),
        "time_b_scale": rnd(ks[2], (1, out_dim), 0.1),
        "time_b_shift": rnd(ks[3], (1, out_dim), 0.1),
        # GroupNorm(8, in_dim) affine params.
        "gn1_gamma": 1.0 + rnd(ks[4], (1, in_dim), 0.1),
        "gn1_beta": rnd(ks[5], (1, in_dim), 0.1),
        # Conv2d(in_dim, out_dim, 3, padding=1) in HWIO layout.
        "conv1_w": rnd(ks[6], (3, 3, in_dim, out_dim), (9 * in_dim) ** -0.5),
        "conv1_b": rnd(ks[7], (1, out_dim), 0.1),
        # GroupNorm(8, out_dim) affine params.
        "gn2_gamma": 1.0 + rnd(ks[8], (1, out_dim), 0.1),
        "gn2_beta": rnd(ks[9], (1, out_dim), 0.1),
        # Conv2d(out_dim, out_dim, 3, padding=1) in HWIO layout.
        "conv2_w": rnd(ks[10], (3, 3, out_dim, out_dim), (9 * out_dim) ** -0.5),
        "conv2_b": rnd(ks[11], (1, out_dim), 0.1),
    }
    if in_dim != out_dim:
        # skip = Conv2d(in_dim, out_dim, 1)
        params["skip_w"] = rnd(ks[12], (in_dim, out_dim), in_dim ** -0.5)
        params["skip_b"] = rnd(ks[13], (1, out_dim), 0.1)
    else:
        # skip = nn.Identity(), expressed as a 1x1 conv with identity weights.
        params["skip_w"] = jnp.eye(in_dim, dtype=jnp.float32)
        params["skip_b"] = jnp.zeros((1, out_dim), dtype=jnp.float32)

    x = rnd(ks[14], (batch, in_dim, height, width))
    t_embed = rnd(ks[15], (batch, time_embed_dim))

    out = jax.block_until_ready(time_res_block(x, t_embed, params))
    ref = jax.block_until_ready(time_res_block_ref(x, t_embed, params))

    assert out.shape == (batch, out_dim, height, width), out.shape
    max_err = float(jnp.max(jnp.abs(out - ref)))
    assert jnp.allclose(out, ref, atol=2e-2, rtol=2e-2), f"mismatch: {max_err}"

    print("KERNEL_OK")
</pallas_src>

<mosaic_0001>
module attributes {stable_mosaic.version = 11 : i64} {
  func.func @_gn_conv_gn_kernel(%arg0: i32, %arg1: memref<1x18x18x16xf32, #tpu.memory_space<vmem>>, %arg2: memref<18x18x1xf32, #tpu.memory_space<vmem>>, %arg3: memref<1x16xf32, #tpu.memory_space<vmem>>, %arg4: memref<1x16xf32, #tpu.memory_space<vmem>>, %arg5: memref<16x16xf32, #tpu.memory_space<vmem>>, %arg6: memref<3x3x16x32xf32, #tpu.memory_space<vmem>>, %arg7: memref<1x32xf32, #tpu.memory_space<vmem>>, %arg8: memref<1x32xf32, #tpu.memory_space<vmem>>, %arg9: memref<1x32xf32, #tpu.memory_space<vmem>>, %arg10: memref<32x32xf32, #tpu.memory_space<vmem>>, %arg11: memref<1x16x16x32xf32, #tpu.memory_space<vmem>>, %arg12: memref<18x18x16xf32, #tpu.memory_space<vmem>>) attributes {dimension_semantics = [#tpu.dimension_semantics<parallel>], iteration_bounds = array<i64: 2>, scalar_prefetch = 0 : i64, scratch_operands = 1 : i64, tpu.core_type = #tpu.core_type<tc>, window_params = [{transform_indices = @transform_0, window_bounds = array<i64: 1, 18, 18, 16>}, {pipeline_mode = #tpu.pipeline_mode<synchronous>, transform_indices = @transform_1, window_bounds = array<i64: 18, 18, 1>}, {pipeline_mode = #tpu.pipeline_mode<synchronous>, transform_indices = @transform_2, window_bounds = array<i64: 1, 16>}, {pipeline_mode = #tpu.pipeline_mode<synchronous>, transform_indices = @transform_3, window_bounds = array<i64: 1, 16>}, {pipeline_mode = #tpu.pipeline_mode<synchronous>, transform_indices = @transform_4, window_bounds = array<i64: 16, 16>}, {pipeline_mode = #tpu.pipeline_mode<synchronous>, transform_indices = @transform_5, window_bounds = array<i64: 3, 3, 16, 32>}, {pipeline_mode = #tpu.pipeline_mode<synchronous>, transform_indices = @transform_6, window_bounds = array<i64: 1, 32>}, {pipeline_mode = #tpu.pipeline_mode<synchronous>, transform_indices = @transform_7, window_bounds = array<i64: 1, 32>}, {pipeline_mode = #tpu.pipeline_mode<synchronous>, transform_indices = @transform_8, window_bounds = array<i64: 1, 32>}, {pipeline_mode = #tpu.pipeline_mode<synchronous>, transform_indices = @transform_9, window_bounds = array<i64: 32, 32>}, {transform_indices = @transform_10, window_bounds = array<i64: 1, 16, 16, 32>}]} {
    %c0 = arith.constant 0 : index
    %c0_0 = arith.constant 0 : index
    %c0_1 = arith.constant 0 : index
    %c0_2 = arith.constant 0 : index
    %0 = vector.load %arg1[%c0, %c0_0, %c0_1, %c0_2] : memref<1x18x18x16xf32, #tpu.memory_space<vmem>>, vector<1x18x18x16xf32>
    %1 = vector.shape_cast %0 : vector<1x18x18x16xf32> to vector<18x18x16xf32>
    %cst = arith.constant dense<0.000000e+00> : vector<18x16xf32>
    %2 = vector.multi_reduction <add>, %1, %cst [0] : vector<18x18x16xf32> to vector<18x16xf32>
    %3 = arith.mulf %1, %1 : vector<18x18x16xf32>
    %cst_3 = arith.constant dense<0.000000e+00> : vector<18x16xf32>
    %4 = vector.multi_reduction <add>, %3, %cst_3 [0] : vector<18x18x16xf32> to vector<18x16xf32>
    %cst_4 = arith.constant dense<0.000000e+00> : vector<16xf32>
    %5 = vector.multi_reduction <add>, %2, %cst_4 [0] : vector<18x16xf32> to vector<16xf32>
    %6 = vector.shape_cast %5 : vector<16xf32> to vector<1x16xf32>
    %cst_5 = arith.constant dense<0.000000e+00> : vector<16xf32>
    %7 = vector.multi_reduction <add>, %4, %cst_5 [0] : vector<18x16xf32> to vector<16xf32>
    %8 = vector.shape_cast %7 : vector<16xf32> to vector<1x16xf32>
    %c0_6 = arith.constant 0 : index
    %c0_7 = arith.constant 0 : index
    %9 = vector.load %arg5[%c0_6, %c0_7] : memref<16x16xf32, #tpu.memory_space<vmem>>, vector<16x16xf32>
    %cst_8 = arith.constant dense<0.000000e+00> : vector<1x16xf32>
    %10 = tpu.matmul %6, %9, %cst_8 {dimension_numbers = #tpu.dot_dimension_numbers<[1], [0], [0], [1], [0, 0, 1, 1], [], []>} : vector<1x16xf32>, vector<16x16xf32>, vector<1x16xf32> -> vector<1x16xf32>
    %cst_9 = arith.constant dense<0.000000e+00> : vector<1x16xf32>
    %11 = tpu.matmul %8, %9, %cst_9 {dimension_numbers = #tpu.dot_dimension_numbers<[1], [0], [0], [1], [0, 0, 1, 1], [], []>} : vector<1x16xf32>, vector<16x16xf32>, vector<1x16xf32> -> vector<1x16xf32>
    %cst_10 = arith.constant 5.120000e+02 : f32
    %12 = vector.broadcast %cst_10 : f32 to vector<1x16xf32>
    %13 = arith.divf %10, %12 : vector<1x16xf32>
    %cst_11 = arith.constant 5.120000e+02 : f32
    %14 = vector.broadcast %cst_11 : f32 to vector<1x16xf32>
    %15 = arith.divf %11, %14 : vector<1x16xf32>
    %16 = arith.mulf %13, %13 : vector<1x16xf32>
    %17 = arith.subf %15, %16 : vector<1x16xf32>
    %cst_12 = arith.constant 0.000000e+00 : f32
    %18 = vector.broadcast %cst_12 : f32 to vector<1x16xf32>
    %19 = arith.maximumf %17, %18 : vector<1x16xf32>
    %cst_13 = arith.constant 9.99999974E-6 : f32
    %20 = vector.broadcast %cst_13 : f32 to vector<1x16xf32>
    %21 = arith.addf %19, %20 : vector<1x16xf32>
    %22 = math.rsqrt %21 : vector<1x16xf32>
    %c0_14 = arith.constant 0 : index
    %c0_15 = arith.constant 0 : index
    %23 = vector.load %arg3[%c0_14, %c0_15] : memref<1x16xf32, #tpu.memory_space<vmem>>, vector<1x16xf32>
    %24 = arith.mulf %22, %23 : vector<1x16xf32>
    %25 = vector.shape_cast %24 : vector<1x16xf32> to vector<1x1x16xf32>
    %c0_16 = arith.constant 0 : index
    %c0_17 = arith.constant 0 : index
    %26 = vector.load %arg4[%c0_16, %c0_17] : memref<1x16xf32, #tpu.memory_space<vmem>>, vector<1x16xf32>
    %27 = arith.mulf %13, %22 : vector<1x16xf32>
    %c0_18 = arith.constant 0 : index
    %c0_19 = arith.constant 0 : index
    %28 = vector.load %arg3[%c0_18, %c0_19] : memref<1x16xf32, #tpu.memory_space<vmem>>, vector<1x16xf32>
    %29 = arith.mulf %27, %28 : vector<1x16xf32>
    %30 = arith.subf %26, %29 : vector<1x16xf32>
    %31 = vector.shape_cast %30 : vector<1x16xf32> to vector<1x1x16xf32>
    %32 = vector.broadcast %25 : vector<1x1x16xf32> to vector<18x18x16xf32>
    %33 = arith.mulf %1, %32 : vector<18x18x16xf32>
    %34 = vector.broadcast %31 : vector<1x1x16xf32> to vector<18x18x16xf32>
    %35 = arith.addf %33, %34 : vector<18x18x16xf32>
    %36 = arith.negf %35 : vector<18x18x16xf32>
    %37 = math.exp %36 : vector<18x18x16xf32>
    %cst_20 = arith.constant 1.000000e+00 : f32
    %38 = vector.broadcast %cst_20 : f32 to vector<18x18x16xf32>
    %39 = arith.addf %38, %37 : vector<18x18x16xf32>
    %40 = arith.divf %38, %39 : vector<18x18x16xf32>
    %41 = arith.mulf %35, %40 : vector<18x18x16xf32>
    %c0_21 = arith.constant 0 : index
    %c0_22 = arith.constant 0 : index
    %c0_23 = arith.constant 0 : index
    %42 = vector.load %arg2[%c0_21, %c0_22, %c0_23] : memref<18x18x1xf32, #tpu.memory_space<vmem>>, vector<18x18x1xf32>
    %43 = vector.broadcast %42 : vector<18x18x1xf32> to vector<18x18x16xf32>
    %44 = arith.mulf %41, %43 : vector<18x18x16xf32>
    %c0_24 = arith.constant 0 : index
    %c0_25 = arith.constant 0 : index
    %c0_26 = arith.constant 0 : index
    %45 = vector.load %arg12[%c0_24, %c0_25, %c0_26] : memref<18x18x16xf32, #tpu.memory_space<vmem>>, vector<18x18x16xf32>
    tpu.vector_store %arg12[%c0_24, %c0_25, %c0_26], %44 {strides = array<i32>} : memref<18x18x16xf32, #tpu.memory_space<vmem>>, vector<18x18x16xf32>,
    %cst_27 = arith.constant 0.000000e+00 : f32
    %46 = vector.broadcast %cst_27 : f32 to vector<256x32xf32>
    %c0_28 = arith.constant 0 : index
    %c0_29 = arith.constant 0 : index
    %c0_30 = arith.constant 0 : index
    %47 = vector.load %arg12[%c0_28, %c0_29, %c0_30] : memref<18x18x16xf32, #tpu.memory_space<vmem>>, vector<16x16x16xf32>
    %48 = vector.shape_cast %47 : vector<16x16x16xf32> to vector<256x16xf32>
    %c0_31 = arith.constant 0 : index
    %c0_32 = arith.constant 0 : index
    %c0_33 = arith.constant 0 : index
    %c0_34 = arith.constant 0 : index
    %49 = vector.load %arg6[%c0_31, %c0_32, %c0_33, %c0_34] : memref<3x3x16x32xf32, #tpu.memory_space<vmem>>, vector<1x1x16x32xf32>
    %50 = vector.shape_cast %49 : vector<1x1x16x32xf32> to vector<16x32xf32>
    %cst_35 = arith.constant dense<0.000000e+00> : vector<256x32xf32>
    %51 = tpu.matmul %48, %50, %cst_35 {dimension_numbers = #tpu.dot_dimension_numbers<[1], [0], [0], [1], [0, 0, 1, 1], [], []>} : vector<256x16xf32>, vector<16x32xf32>, vector<256x32xf32> -> vector<256x32xf32>
    %52 = arith.addf %46, %51 : vector<256x32xf32>
    %c0_36 = arith.constant 0 : index
    %c1 = arith.constant 1 : index
    %c0_37 = arith.constant 0 : index
    %53 = vector.load %arg12[%c0_36, %c1, %c0_37] : memref<18x18x16xf32, #tpu.memory_space<vmem>>, vector<16x16x16xf32>
    %54 = vector.shape_cast %53 : vector<16x16x16xf32> to vector<256x16xf32>
    %c0_38 = arith.constant 0 : index
    %c1_39 = arith.constant 1 : index
    %c0_40 = arith.constant 0 : index
    %c0_41 = arith.constant 0 : index
    %55 = vector.load %arg6[%c0_38, %c1_39, %c0_40, %c0_41] : memref<3x3x16x32xf32, #tpu.memory_space<vmem>>, vector<1x1x16x32xf32>
    %56 = vector.shape_cast %55 : vector<1x1x16x32xf32> to vector<16x32xf32>
    %cst_42 = arith.constant dense<0.000000e+00> : vector<256x32xf32>
    %57 = tpu.matmul %54, %56, %cst_42 {dimension_numbers = #tpu.dot_dimension_numbers<[1], [0], [0], [1], [0, 0, 1, 1], [], []>} : vector<256x16xf32>, vector<16x32xf32>, vector<256x32xf32> -> vector<256x32xf32>
    %58 = arith.addf %52, %57 : vector<256x32xf32>
    %c0_43 = arith.constant 0 : index
    %c2 = arith.constant 2 : index
    %c0_44 = arith.constant 0 : index
    %59 = vector.load %arg12[%c0_43, %c2, %c0_44] : memref<18x18x16xf32, #tpu.memory_space<vmem>>, vector<16x16x16xf32>
    %60 = vector.shape_cast %59 : vector<16x16x16xf32> to vector<256x16xf32>
    %c0_45 = arith.constant 0 : index
    %c2_46 = arith.constant 2 : index
    %c0_47 = arith.constant 0 : index
    %c0_48 = arith.constant 0 : index
    %61 = vector.load %arg6[%c0_45, %c2_46, %c0_47, %c0_48] : memref<3x3x16x32xf32, #tpu.memory_space<vmem>>, vector<1x1x16x32xf32>
    %62 = vector.shape_cast %61 : vector<1x1x16x32xf32> to vector<16x32xf32>
    %cst_49 = arith.constant dense<0.000000e+00> : vector<256x32xf32>
    %63 = tpu.matmul %60, %62, %cst_49 {dimension_numbers = #tpu.dot_dimension_numbers<[1], [0], [0], [1], [0, 0, 1, 1], [], []>} : vector<256x16xf32>, vector<16x32xf32>, vector<256x32xf32> -> vector<256x32xf32>
    %64 = arith.addf %58, %63 : vector<256x32xf32>
    %c1_50 = arith.constant 1 : index
    %c0_51 = arith.constant 0 : index
    %c0_52 = arith.constant 0 : index
    %65 = vector.load %arg12[%c1_50, %c0_51, %c0_52] : memref<18x18x16xf32, #tpu.memory_space<vmem>>, vector<16x16x16xf32>
    %66 = vector.shape_cast %65 : vector<16x16x16xf32> to vector<256x16xf32>
    %c1_53 = arith.constant 1 : index
    %c0_54 = arith.constant 0 : index
    %c0_55 = arith.constant 0 : index
    %c0_56 = arith.constant 0 : index
    %67 = vector.load %arg6[%c1_53, %c0_54, %c0_55, %c0_56] : memref<3x3x16x32xf32, #tpu.memory_space<vmem>>, vector<1x1x16x32xf32>
    %68 = vector.shape_cast %67 : vector<1x1x16x32xf32> to vector<16x32xf32>
    %cst_57 = arith.constant dense<0.000000e+00> : vector<256x32xf32>
    %69 = tpu.matmul %66, %68, %cst_57 {dimension_numbers = #tpu.dot_dimension_numbers<[1], [0], [0], [1], [0, 0, 1, 1], [], []>} : vector<256x16xf32>, vector<16x32xf32>, vector<256x32xf32> -> vector<256x32xf32>
    %70 = arith.addf %64, %69 : vector<256x32xf32>
    %c1_58 = arith.constant 1 : index
    %c1_59 = arith.constant 1 : index
    %c0_60 = arith.constant 0 : index
    %71 = vector.load %arg12[%c1_58, %c1_59, %c0_60] : memref<18x18x16xf32, #tpu.memory_space<vmem>>, vector<16x16x16xf32>
    %72 = vector.shape_cast %71 : vector<16x16x16xf32> to vector<256x16xf32>
    %c1_61 = arith.constant 1 : index
    %c1_62 = arith.constant 1 : index
    %c0_63 = arith.constant 0 : index
    %c0_64 = arith.constant 0 : index
    %73 = vector.load %arg6[%c1_61, %c1_62, %c0_63, %c0_64] : memref<3x3x16x32xf32, #tpu.memory_space<vmem>>, vector<1x1x16x32xf32>
    %74 = vector.shape_cast %73 : vector<1x1x16x32xf32> to vector<16x32xf32>
    %cst_65 = arith.constant dense<0.000000e+00> : vector<256x32xf32>
    %75 = tpu.matmul %72, %74, %cst_65 {dimension_numbers = #tpu.dot_dimension_numbers<[1], [0], [0], [1], [0, 0, 1, 1], [], []>} : vector<256x16xf32>, vector<16x32xf32>, vector<256x32xf32> -> vector<256x32xf32>
    %76 = arith.addf %70, %75 : vector<256x32xf32>
    %c1_66 = arith.constant 1 : index
    %c2_67 = arith.constant 2 : index
    %c0_68 = arith.constant 0 : index
    %77 = vector.load %arg12[%c1_66, %c2_67, %c0_68] : memref<18x18x16xf32, #tpu.memory_space<vmem>>, vector<16x16x16xf32>
    %78 = vector.shape_cast %77 : vector<16x16x16xf32> to vector<256x16xf32>
    %c1_69 = arith.constant 1 : index
    %c2_70 = arith.constant 2 : index
    %c0_71 = arith.constant 0 : index
    %c0_72 = arith.constant 0 : index
    %79 = vector.load %arg6[%c1_69, %c2_70, %c0_71, %c0_72] : memref<3x3x16x32xf32, #tpu.memory_space<vmem>>, vector<1x1x16x32xf32>
    %80 = vector.shape_cast %79 : vector<1x1x16x32xf32> to vector<16x32xf32>
    %cst_73 = arith.constant dense<0.000000e+00> : vector<256x32xf32>
    %81 = tpu.matmul %78, %80, %cst_73 {dimension_numbers = #tpu.dot_dimension_numbers<[1], [0], [0], [1], [0, 0, 1, 1], [], []>} : vector<256x16xf32>, vector<16x32xf32>, vector<256x32xf32> -> vector<256x32xf32>
    %82 = arith.addf %76, %81 : vector<256x32xf32>
    %c2_74 = arith.constant 2 : index
    %c0_75 = arith.constant 0 : index
    %c0_76 = arith.constant 0 : index
    %83 = vector.load %arg12[%c2_74, %c0_75, %c0_76] : memref<18x18x16xf32, #tpu.memory_space<vmem>>, vector<16x16x16xf32>
    %84 = vector.shape_cast %83 : vector<16x16x16xf32> to vector<256x16xf32>
    %c2_77 = arith.constant 2 : index
    %c0_78 = arith.constant 0 : index
    %c0_79 = arith.constant 0 : index
    %c0_80 = arith.constant 0 : index
    %85 = vector.load %arg6[%c2_77, %c0_78, %c0_79, %c0_80] : memref<3x3x16x32xf32, #tpu.memory_space<vmem>>, vector<1x1x16x32xf32>
    %86 = vector.shape_cast %85 : vector<1x1x16x32xf32> to vector<16x32xf32>
    %cst_81 = arith.constant dense<0.000000e+00> : vector<256x32xf32>
    %87 = tpu.matmul %84, %86, %cst_81 {dimension_numbers = #tpu.dot_dimension_numbers<[1], [0], [0], [1], [0, 0, 1, 1], [], []>} : vector<256x16xf32>, vector<16x32xf32>, vector<256x32xf32> -> vector<256x32xf32>
    %88 = arith.addf %82, %87 : vector<256x32xf32>
    %c2_82 = arith.constant 2 : index
    %c1_83 = arith.constant 1 : index
    %c0_84 = arith.constant 0 : index
    %89 = vector.load %arg12[%c2_82, %c1_83, %c0_84] : memref<18x18x16xf32, #tpu.memory_space<vmem>>, vector<16x16x16xf32>
    %90 = vector.shape_cast %89 : vector<16x16x16xf32> to vector<256x16xf32>
    %c2_85 = arith.constant 2 : index
    %c1_86 = arith.constant 1 : index
    %c0_87 = arith.constant 0 : index
    %c0_88 = arith.constant 0 : index
    %91 = vector.load %arg6[%c2_85, %c1_86, %c0_87, %c0_88] : memref<3x3x16x32xf32, #tpu.memory_space<vmem>>, vector<1x1x16x32xf32>
    %92 = vector.shape_cast %91 : vector<1x1x16x32xf32> to vector<16x32xf32>
    %cst_89 = arith.constant dense<0.000000e+00> : vector<256x32xf32>
    %93 = tpu.matmul %90, %92, %cst_89 {dimension_numbers = #tpu.dot_dimension_numbers<[1], [0], [0], [1], [0, 0, 1, 1], [], []>} : vector<256x16xf32>, vector<16x32xf32>, vector<256x32xf32> -> vector<256x32xf32>
    %94 = arith.addf %88, %93 : vector<256x32xf32>
    %c2_90 = arith.constant 2 : index
    %c2_91 = arith.constant 2 : index
    %c0_92 = arith.constant 0 : index
    %95 = vector.load %arg12[%c2_90, %c2_91, %c0_92] : memref<18x18x16xf32, #tpu.memory_space<vmem>>, vector<16x16x16xf32>
    %96 = vector.shape_cast %95 : vector<16x16x16xf32> to vector<256x16xf32>
    %c2_93 = arith.constant 2 : index
    %c2_94 = arith.constant 2 : index
    %c0_95 = arith.constant 0 : index
    %c0_96 = arith.constant 0 : index
    %97 = vector.load %arg6[%c2_93, %c2_94, %c0_95, %c0_96] : memref<3x3x16x32xf32, #tpu.memory_space<vmem>>, vector<1x1x16x32xf32>
    %98 = vector.shape_cast %97 : vector<1x1x16x32xf32> to vector<16x32xf32>
    %cst_97 = arith.constant dense<0.000000e+00> : vector<256x32xf32>
    %99 = tpu.matmul %96, %98, %cst_97 {dimension_numbers = #tpu.dot_dimension_numbers<[1], [0], [0], [1], [0, 0, 1, 1], [], []>} : vector<256x16xf32>, vector<16x32xf32>, vector<256x32xf32> -> vector<256x32xf32>
    %100 = arith.addf %94, %99 : vector<256x32xf32>
    %c0_98 = arith.constant 0 : index
    %c0_99 = arith.constant 0 : index
    %101 = vector.load %arg7[%c0_98, %c0_99] : memref<1x32xf32, #tpu.memory_space<vmem>>, vector<1x32xf32>
    %102 = vector.broadcast %101 : vector<1x32xf32> to vector<256x32xf32>
    %103 = arith.addf %100, %102 : vector<256x32xf32>
    %cst_100 = arith.constant dense<0.000000e+00> : vector<32xf32>
    %104 = vector.multi_reduction <add>, %103, %cst_100 [0] : vector<256x32xf32> to vector<32xf32>
    %105 = vector.shape_cast %104 : vector<32xf32> to vector<1x32xf32>
    %106 = arith.mulf %103, %103 : vector<256x32xf32>
    %cst_101 = arith.constant dense<0.000000e+00> : vector<32xf32>
    %107 = vector.multi_reduction <add>, %106, %cst_101 [0] : vector<256x32xf32> to vector<32xf32>
    %108 = vector.shape_cast %107 : vector<32xf32> to vector<1x32xf32>
    %c0_102 = arith.constant 0 : index
    %c0_103 = arith.constant 0 : index
    %109 = vector.load %arg10[%c0_102, %c0_103] : memref<32x32xf32, #tpu.memory_space<vmem>>, vector<32x32xf32>
    %cst_104 = arith.constant dense<0.000000e+00> : vector<1x32xf32>
    %110 = tpu.matmul %105, %109, %cst_104 {dimension_numbers = #tpu.dot_dimension_numbers<[1], [0], [0], [1], [0, 0, 1, 1], [], []>} : vector<1x32xf32>, vector<32x32xf32>, vector<1x32xf32> -> vector<1x32xf32>
    %cst_105 = arith.constant dense<0.000000e+00> : vector<1x32xf32>
    %111 = tpu.matmul %108, %109, %cst_105 {dimension_numbers = #tpu.dot_dimension_numbers<[1], [0], [0], [1], [0, 0, 1, 1], [], []>} : vector<1x32xf32>, vector<32x32xf32>, vector<1x32xf32> -> vector<1x32xf32>
    %cst_106 = arith.constant 1.024000e+03 : f32
    %112 = vector.broadcast %cst_106 : f32 to vector<1x32xf32>
    %113 = arith.divf %110, %112 : vector<1x32xf32>
    %cst_107 = arith.constant 1.024000e+03 : f32
    %114 = vector.broadcast %cst_107 : f32 to vector<1x32xf32>
    %115 = arith.divf %111, %114 : vector<1x32xf32>
    %116 = arith.mulf %113, %113 : vector<1x32xf32>
    %117 = arith.subf %115, %116 : vector<1x32xf32>
    %cst_108 = arith.constant 0.000000e+00 : f32
    %118 = vector.broadcast %cst_108 : f32 to vector<1x32xf32>
    %119 = arith.maximumf %117, %118 : vector<1x32xf32>
    %cst_109 = arith.constant 9.99999974E-6 : f32
    %120 = vector.broadcast %cst_109 : f32 to vector<1x32xf32>
    %121 = arith.addf %119, %120 : vector<1x32xf32>
    %122 = math.rsqrt %121 : vector<1x32xf32>
    %123 = vector.broadcast %113 : vector<1x32xf32> to vector<256x32xf32>
    %124 = arith.subf %103, %123 : vector<256x32xf32>
    %125 = vector.broadcast %122 : vector<1x32xf32> to vector<256x32xf32>
    %126 = arith.mulf %124, %125 : vector<256x32xf32>
    %c0_110 = arith.constant 0 : index
    %c0_111 = arith.constant 0 : index
    %127 = vector.load %arg8[%c0_110, %c0_111] : memref<1x32xf32, #tpu.memory_space<vmem>>, vector<1x32xf32>
    %128 = vector.broadcast %127 : vector<1x32xf32> to vector<256x32xf32>
    %129 = arith.mulf %126, %128 : vector<256x32xf32>
    %c0_112 = arith.constant 0 : index
    %c0_113 = arith.constant 0 : index
    %130 = vector.load %arg9[%c0_112, %c0_113] : memref<1x32xf32, #tpu.memory_space<vmem>>, vector<1x32xf32>
    %131 = vector.broadcast %130 : vector<1x32xf32> to vector<256x32xf32>
    %132 = arith.addf %129, %131 : vector<256x32xf32>
    %133 = arith.negf %132 : vector<256x32xf32>
    %134 = math.exp %133 : vector<256x32xf32>
    %cst_114 = arith.constant 1.000000e+00 : f32
    %135 = vector.broadcast %cst_114 : f32 to vector<256x32xf32>
    %136 = arith.addf %135, %134 : vector<256x32xf32>
    %137 = arith.divf %135, %136 : vector<256x32xf32>
    %138 = arith.mulf %132, %137 : vector<256x32xf32>
    %139 = vector.shape_cast %138 : vector<256x32xf32> to vector<16x16x32xf32>
    %c0_115 = arith.constant 0 : index
    %c0_116 = arith.constant 0 : index
    %c0_117 = arith.constant 0 : index
    %c0_118 = arith.constant 0 : index
    %140 = vector.load %arg11[%c0_115, %c0_116, %c0_117, %c0_118] : memref<1x16x16x32xf32, #tpu.memory_space<vmem>>, vector<1x16x16x32xf32>
    %141 = vector.shape_cast %140 : vector<1x16x16x32xf32> to vector<16x16x32xf32>
    %142 = vector.shape_cast %139 : vector<16x16x32xf32> to vector<1x16x16x32xf32>
    tpu.vector_store %arg11[%c0_115, %c0_116, %c0_117, %c0_118], %142 {strides = array<i32>} : memref<1x16x16x32xf32, #tpu.memory_space<vmem>>, vector<1x16x16x32xf32>,
    return
  }
  func.func @transform_0(%arg0: i32) -> (i32, i32, i32, i32) {
    %c0_i32 = arith.constant 0 : i32
    %c0_i32_0 = arith.constant 0 : i32
    %c0_i32_1 = arith.constant 0 : i32
    %c0_i32_2 = arith.constant 0 : i32
    return %arg0, %c0_i32, %c0_i32_0, %c0_i32_1 : i32, i32, i32, i32
  }
  func.func @transform_1(%arg0: i32) -> (i32, i32, i32) {
    %c0_i32 = arith.constant 0 : i32
    %c0_i32_0 = arith.constant 0 : i32
    %c0_i32_1 = arith.constant 0 : i32
    %c0_i32_2 = arith.constant 0 : i32
    return %c0_i32, %c0_i32_0, %c0_i32_1 : i32, i32, i32
  }
  func.func @transform_2(%arg0: i32) -> (i32, i32) {
    %c0_i32 = arith.constant 0 : i32
    %c0_i32_0 = arith.constant 0 : i32
    %c0_i32_1 = arith.constant 0 : i32
    return %c0_i32, %c0_i32_0 : i32, i32
  }
  func.func @transform_3(%arg0: i32) -> (i32, i32) {
    %c0_i32 = arith.constant 0 : i32
    %c0_i32_0 = arith.constant 0 : i32
    %c0_i32_1 = arith.constant 0 : i32
    return %c0_i32, %c0_i32_0 : i32, i32
  }
  func.func @transform_4(%arg0: i32) -> (i32, i32) {
    %c0_i32 = arith.constant 0 : i32
    %c0_i32_0 = arith.constant 0 : i32
    %c0_i32_1 = arith.constant 0 : i32
    return %c0_i32, %c0_i32_0 : i32, i32
  }
  func.func @transform_5(%arg0: i32) -> (i32, i32, i32, i32) {
    %c0_i32 = arith.constant 0 : i32
    %c0_i32_0 = arith.constant 0 : i32
    %c0_i32_1 = arith.constant 0 : i32
    %c0_i32_2 = arith.constant 0 : i32
    %c0_i32_3 = arith.constant 0 : i32
    return %c0_i32, %c0_i32_0, %c0_i32_1, %c0_i32_2 : i32, i32, i32, i32
  }
  func.func @transform_6(%arg0: i32) -> (i32, i32) {
    %c0_i32 = arith.constant 0 : i32
    %c0_i32_0 = arith.constant 0 : i32
    %c0_i32_1 = arith.constant 0 : i32
    return %c0_i32, %c0_i32_0 : i32, i32
  }
  func.func @transform_7(%arg0: i32) -> (i32, i32) {
    %c0_i32 = arith.constant 0 : i32
    %c0_i32_0 = arith.constant 0 : i32
    %c0_i32_1 = arith.constant 0 : i32
    return %c0_i32, %c0_i32_0 : i32, i32
  }
  func.func @transform_8(%arg0: i32) -> (i32, i32) {
    %c0_i32 = arith.constant 0 : i32
    %c0_i32_0 = arith.constant 0 : i32
    %c0_i32_1 = arith.constant 0 : i32
    return %c0_i32, %c0_i32_0 : i32, i32
  }
  func.func @transform_9(%arg0: i32) -> (i32, i32) {
    %c0_i32 = arith.constant 0 : i32
    %c0_i32_0 = arith.constant 0 : i32
    %c0_i32_1 = arith.constant 0 : i32
    return %c0_i32, %c0_i32_0 : i32, i32
  }
  func.func @transform_10(%arg0: i32) -> (i32, i32, i32, i32) {
    %c0_i32 = arith.constant 0 : i32
    %c0_i32_0 = arith.constant 0 : i32
    %c0_i32_1 = arith.constant 0 : i32
    %c0_i32_2 = arith.constant 0 : i32
    return %arg0, %c0_i32, %c0_i32_0, %c0_i32_1 : i32, i32, i32, i32
  }
}

</mosaic_0001>

<llo_original>
// kernel: tpu_custom_call.1
$region0: #{tpu_custom_call.1}
  #allocation0 [shape = 'u32[]', space=smem, size = 0x4, offset = 0x4, fixed_abs, tag = 'smem constant byte address 0x4 - core index']
  #allocation1 [shape = 'u32[144,128]{1,0:T(1,128)}', space=vmem, size = 0x12000, scoped, tag = 'internal scratch']
  #allocation2 [shape = 'f32[18,18,16]{2,1,0:T(8,128)}', space=vmem, size = 0x36000, scoped, tag = 'scratch operand']
  %s0 = inlined_call_operand.vmem [shape: f32[2,18,18,16], index: 0, kind: input, shape index: {}]
  %s1 = inlined_call_operand.vmem [shape: f32[18,18,1], index: 1, kind: input, shape index: {}]
  %s2 = inlined_call_operand.vmem [shape: f32[1,16], index: 2, kind: input, shape index: {}]
  %s3 = inlined_call_operand.vmem [shape: f32[1,16], index: 3, kind: input, shape index: {}]
  %s4 = inlined_call_operand.vmem [shape: f32[16,16], index: 4, kind: input, shape index: {}]
  %s5 = inlined_call_operand.vmem [shape: f32[3,3,16,32], index: 5, kind: input, shape index: {}]
  %s6 = inlined_call_operand.vmem [shape: f32[1,32], index: 6, kind: input, shape index: {}]
  %s7 = inlined_call_operand.vmem [shape: f32[1,32], index: 7, kind: input, shape index: {}]
  %s8 = inlined_call_operand.vmem [shape: f32[1,32], index: 8, kind: input, shape index: {}]
  %s9 = inlined_call_operand.vmem [shape: f32[32,32], index: 9, kind: input, shape index: {}]
  %s10 = inlined_call_operand.hbm [shape: f32[2,16,16,32], index: 10, kind: output, shape index: {}]
  %s11 = sld [smem:[#allocation0]]
  $region73: #{tpu_custom_call.1} parent=0
    _
  %s13 = ssub.s32 1, %s11
  %s14 = scalar_select 0, %s13, %s11
  $region1: #{tpu_custom_call.1} parent=0
    #allocation3 [shape = 'u8[262144]{0}', space=vmem, size = 0x40000, scoped, tag = 'output window, operand 0']
    #allocation4 [shape = 's32[2]{0}', space=sflag, size = 0x8, scoped, tag = 'scoped memory for tpu_custom_call.1']
    %15 = vsyncpa [#allocation4], 0
    %s16 = scalar_lea.sflag [#allocation4], 1
    %17 = vsyncpa %s16, 0
    loop: start=0, step=1, limit=4
    $region2: #{tpu_custom_call.1} parent=1 // loop_pre_header
      _
    $region3: #{tpu_custom_call.1} parent=1 // loop_header
      %s19 = sphi 0, %s23
      %p20 = scmp.ge.s32.totalorder %s19, 4
      %s29 = sphi 0, %s31
      %s32 = sphi 0, %s29
      %s33 = sphi 0, %s32
      %s49 = sphi 0, %s33
      %s53 = sphi 0, %s53
      %s55 = sphi 0, %s53
      %s56 = sphi 0, %s55
      %s70 = sphi 0, %s56
      %s74 = sphi 0, %s74
      %s76 = sphi 0, %s74
      %s77 = sphi 0, %s76
      %s91 = sphi 0, %s77
      %s95 = sphi 0, %s95
      %s97 = sphi 0, %s95
      %s98 = sphi 0, %s97
      %s112 = sphi 0, %s98
      %s116 = sphi 0, %s116
      %s118 = sphi 0, %s116
      %s119 = sphi 0, %s118
      %s133 = sphi 0, %s119
      %s137 = sphi 0, %s137
      %s139 = sphi 0, %s137
      %s140 = sphi 0, %s139
      %s154 = sphi 0, %s140
      %s158 = sphi 0, %s158
      %s160 = sphi 0, %s158
      %s161 = sphi 0, %s160
      %s175 = sphi 0, %s161
      %s179 = sphi 0, %s179
      %s181 = sphi 0, %s179
      %s182 = sphi 0, %s181
      %s196 = sphi 0, %s182
      %s200 = sphi 0, %s200
      %s202 = sphi 0, %s200
      %s203 = sphi 0, %s202
      %s217 = sphi 0, %s203
      %s221 = sphi 0, %s221
      %s223 = sphi 0, %s221
      %s224 = sphi 0, %s223
      %s238 = sphi 0, %s224
      %s244 = sphi 0, %s246
      %s247 = sphi 0, %s244
      %s248 = sphi 0, %s247
      %s264 = sphi 0, %s248
    $region4: #{tpu_custom_call.1} parent=1 // loop_header_branch
      %22 = sbr.rel (%p20) target = $region8
    $region5: #{tpu_custom_call.1} parent=1 // loop_body
      %s24 = ssub.s32 %s19, 1
      %s25 = ssub.s32 %s19, 2
      %s26 = sadd.s32 %s19, 1
      %s27 = ssub.s32 %s19, %s26
      %p28 = scmp.eq.s32.totalorder %s27, 0
      %s30 = sadd.s32 %s29, 1
      %s31 = scalar_select %p28, %s29, %s30
      %p34 = pneg %p28
      %p35 = scmp.eq.s32.totalorder %s19, 1
      %p36 = por %p34, %p35
      %p37 = scmp.ne.s32.totalorder %s29, %s32
      %p38 = scmp.eq.s32.totalorder %s19, 0
      %p39 = por %p37, %p38
      %p40 = scmp.ne.s32.totalorder %s29, %s32
      %p41 = scmp.eq.s32.totalorder %s24, 1
      %p42 = por %p40, %p41
      %p43 = scmp.ne.s32.totalorder %s32, %s33
      %p44 = scmp.eq.s32.totalorder %s24, 0
      %p45 = por %p43, %p44
      %p46 = scmp.ne.s32.totalorder %s32, %s33
      %p47 = scmp.eq.s32.totalorder %s25, 1
      %p48 = por %p46, %p47
      %p50 = scmp.ne.s32.totalorder %s33, %s49
      %p51 = scmp.eq.s32.totalorder %s25, 0
      %p52 = por %p50, %p51
      %s54 = sadd.s32 %s53, 1
      %p57 = scmp.eq.s32.totalorder %s19, 1
      %p58 = scmp.ne.s32.totalorder %s53, %s55
      %p59 = scmp.eq.s32.totalorder %s19, 0
      %p60 = por %p58, %p59
      %p61 = scmp.ne.s32.totalorder %s53, %s55
      %p62 = scmp.eq.s32.totalorder %s24, 1
      %p63 = por %p61, %p62
      %p64 = scmp.ne.s32.totalorder %s55, %s56
      %p65 = scmp.eq.s32.totalorder %s24, 0
      %p66 = por %p64, %p65
      %p67 = scmp.ne.s32.totalorder %s55, %s56
      %p68 = scmp.eq.s32.totalorder %s25, 1
      %p69 = por %p67, %p68
      %p71 = scmp.ne.s32.totalorder %s56, %s70
      %p72 = scmp.eq.s32.totalorder %s25, 0
      %p73 = por %p71, %p72
      %s75 = sadd.s32 %s74, 1
      %p78 = scmp.eq.s32.totalorder %s19, 1
      %p79 = scmp.ne.s32.totalorder %s74, %s76
      %p80 = scmp.eq.s32.totalorder %s19, 0
      %p81 = por %p79, %p80
      %p82 = scmp.ne.s32.totalorder %s74, %s76
      %p83 = scmp.eq.s32.totalorder %s24, 1
      %p84 = por %p82, %p83
      %p85 = scmp.ne.s32.totalorder %s76, %s77
      %p86 = scmp.eq.s32.totalorder %s24, 0
      %p87 = por %p85, %p86
      %p88 = scmp.ne.s32.totalorder %s76, %s77
      %p89 = scmp.eq.s32.totalorder %s25, 1
      %p90 = por %p88, %p89
      %p92 = scmp.ne.s32.totalorder %s77, %s91
      %p93 = scmp.eq.s32.totalorder %s25, 0
      %p94 = por %p92, %p93
      %s96 = sadd.s32 %s95, 1
      %p99 = scmp.eq.s32.totalorder %s19, 1
      %p100 = scmp.ne.s32.totalorder %s95, %s97
      %p101 = scmp.eq.s32.totalorder %s19, 0
      %p102 = por %p100, %p101
      %p103 = scmp.ne.s32.totalorder %s95, %s97
      %p104 = scmp.eq.s32.totalorder %s24, 1
      %p105 = por %p103, %p104
      %p106 = scmp.ne.s32.totalorder %s97, %s98
      %p107 = scmp.eq.s32.totalorder %s24, 0
      %p108 = por %p106, %p107
      %p109 = scmp.ne.s32.totalorder %s97, %s98
      %p110 = scmp.eq.s32.totalorder %s25, 1
      %p111 = por %p109, %p110
      %p113 = scmp.ne.s32.totalorder %s98, %s112
      %p114 = scmp.eq.s32.totalorder %s25, 0
      %p115 = por %p113, %p114
      %s117 = sadd.s32 %s116, 1
      %p120 = scmp.eq.s32.totalorder %s19, 1
      %p121 = scmp.ne.s32.totalorder %s116, %s118
      %p122 = scmp.eq.s32.totalorder %s19, 0
      %p123 = por %p121, %p122
      %p124 = scmp.ne.s32.totalorder %s116, %s118
      %p125 = scmp.eq.s32.totalorder %s24, 1
      %p126 = por %p124, %p125
      %p127 = scmp.ne.s32.totalorder %s118, %s119
      %p128 = scmp.eq.s32.totalorder %s24, 0
      %p129 = por %p127, %p128
      %p130 = scmp.ne.s32.totalorder %s118, %s119
      %p131 = scmp.eq.s32.totalorder %s25, 1
      %p132 = por %p130, %p131
      %p134 = scmp.ne.s32.totalorder %s119, %s133
      %p135 = scmp.eq.s32.totalorder %s25, 0
      %p136 = por %p134, %p135
      %s138 = sadd.s32 %s137, 1
      %p141 = scmp.eq.s32.totalorder %s19, 1
      %p142 = scmp.ne.s32.totalorder %s137, %s139
      %p143 = scmp.eq.s32.totalorder %s19, 0
      %p144 = por %p142, %p143
      %p145 = scmp.ne.s32.totalorder %s137, %s139
      %p146 = scmp.eq.s32.totalorder %s24, 1
      %p147 = por %p145, %p146
      %p148 = scmp.ne.s32.totalorder %s139, %s140
      %p149 = scmp.eq.s32.totalorder %s24, 0
      %p150 = por %p148, %p149
      %p151 = scmp.ne.s32.totalorder %s139, %s140
      %p152 = scmp.eq.s32.totalorder %s25, 1
      %p153 = por %p151, %p152
      %p155 = scmp.ne.s32.totalorder %s140, %s154
      %p156 = scmp.eq.s32.totalorder %s25, 0
      %p157 = por %p155, %p156
      %s159 = sadd.s32 %s158, 1
      %p162 = scmp.eq.s32.totalorder %s19, 1
      %p163 = scmp.ne.s32.totalorder %s158, %s160
      %p164 = scmp.eq.s32.totalorder %s19, 0
      %p165 = por %p163, %p164
      %p166 = scmp.ne.s32.totalorder %s158, %s160
      %p167 = scmp.eq.s32.totalorder %s24, 1
      %p168 = por %p166, %p167
      %p169 = scmp.ne.s32.totalorder %s160, %s161
      %p170 = scmp.eq.s32.totalorder %s24, 0
      %p171 = por %p169, %p170
      %p172 = scmp.ne.s32.totalorder %s160, %s161
      %p173 = scmp.eq.s32.totalorder %s25, 1
      %p174 = por %p172, %p173
      %p176 = scmp.ne.s32.totalorder %s161, %s175
      %p177 = scmp.eq.s32.totalorder %s25, 0
      %p178 = por %p176, %p177
      %s180 = sadd.s32 %s179, 1
      %p183 = scmp.eq.s32.totalorder %s19, 1
      %p184 = scmp.ne.s32.totalorder %s179, %s181
      %p185 = scmp.eq.s32.totalorder %s19, 0
      %p186 = por %p184, %p185
      %p187 = scmp.ne.s32.totalorder %s179, %s181
      %p188 = scmp.eq.s32.totalorder %s24, 1
      %p189 = por %p187, %p188
      %p190 = scmp.ne.s32.totalorder %s181, %s182
      %p191 = scmp.eq.s32.totalorder %s24, 0
      %p192 = por %p190, %p191
      %p193 = scmp.ne.s32.totalorder %s181, %s182
      %p194 = scmp.eq.s32.totalorder %s25, 1
      %p195 = por %p193, %p194
      %p197 = scmp.ne.s32.totalorder %s182, %s196
      %p198 = scmp.eq.s32.totalorder %s25, 0
      %p199 = por %p197, %p198
      %s201 = sadd.s32 %s200, 1
      %p204 = scmp.eq.s32.totalorder %s19, 1
      %p205 = scmp.ne.s32.totalorder %s200, %s202
      %p206 = scmp.eq.s32.totalorder %s19, 0
      %p207 = por %p205, %p206
      %p208 = scmp.ne.s32.totalorder %s200, %s202
      %p209 = scmp.eq.s32.totalorder %s24, 1
      %p210 = por %p208, %p209
      %p211 = scmp.ne.s32.totalorder %s202, %s203
      %p212 = scmp.eq.s32.totalorder %s24, 0
      %p213 = por %p211, %p212
      %p214 = scmp.ne.s32.totalorder %s202, %s203
      %p215 = scmp.eq.s32.totalorder %s25, 1
      %p216 = por %p214, %p215
      %p218 = scmp.ne.s32.totalorder %s203, %s217
      %p219 = scmp.eq.s32.totalorder %s25, 0
      %p220 = por %p218, %p219
      %s222 = sadd.s32 %s221, 1
      %p225 = scmp.eq.s32.totalorder %s19, 1
      %p226 = scmp.ne.s32.totalorder %s221, %s223
      %p227 = scmp.eq.s32.totalorder %s19, 0
      %p228 = por %p226, %p227
      %p229 = scmp.ne.s32.totalorder %s221, %s223
      %p230 = scmp.eq.s32.totalorder %s24, 1
      %p231 = por %p229, %p230
      %p232 = scmp.ne.s32.totalorder %s223, %s224
      %p233 = scmp.eq.s32.totalorder %s24, 0
      %p234 = por %p232, %p233
      %p235 = scmp.ne.s32.totalorder %s223, %s224
      %p236 = scmp.eq.s32.totalorder %s25, 1
      %p237 = por %p235, %p236
      %p239 = scmp.ne.s32.totalorder %s224, %s238
      %p240 = scmp.eq.s32.totalorder %s25, 0
      %p241 = por %p239, %p240
      %s242 = ssub.s32 %s19, %s26
      %p243 = scmp.eq.s32.totalorder %s242, 0
      %s245 = sadd.s32 %s244, 1
      %s246 = scalar_select %p243, %s244, %s245
      %p249 = pneg %p243
      %p250 = scmp.eq.s32.totalorder %s19, 1
      %p251 = por %p249, %p250
      %p252 = scmp.ne.s32.totalorder %s244, %s247
      %p253 = scmp.eq.s32.totalorder %s19, 0
      %p254 = por %p252, %p253
      %p255 = scmp.ne.s32.totalorder %s244, %s247
      %p256 = scmp.eq.s32.totalorder %s24, 1
      %p257 = por %p255, %p256
      %p258 = scmp.ne.s32.totalorder %s247, %s248
      %p259 = scmp.eq.s32.totalorder %s24, 0
      %p260 = por %p258, %p259
      %p261 = scmp.ne.s32.totalorder %s247, %s248
      %p262 = scmp.eq.s32.totalorder %s25, 1
      %p263 = por %p261, %p262
      %p265 = scmp.ne.s32.totalorder %s248, %s264
      %p266 = scmp.eq.s32.totalorder %s25, 0
      %p267 = por %p265, %p266
      %p268 = scmp.le.s32.totalorder 1, %s19
      %p269 = scmp.lt.s32.totalorder %s19, 3
      %p270 = pnand %p268, %p269
      %p271 = pneg %p270
      // Predicated region
      $region9: #{tpu_custom_call.1} parent=5 // pred_check
        _
      $region10: #{tpu_custom_call.1} parent=5 // pred_check_branch
        %273 = sbr.rel (%p270) target = $region12
      $region11: #{tpu_custom_call.1} parent=5 // pred_region
        %s274 = ssub.s32 %s19, 1
        // Predicated region
        $region13: #{tpu_custom_call.1} parent=11 // pred_check
          %p275 = pneg %p66
        $region14: #{tpu_custom_call.1} parent=11 // pred_check_branch
          %277 = sbr.rel (%p275) target = $region16
        $region15: #{tpu_custom_call.1} parent=11 // pred_region
          _
        $region16: #{tpu_custom_call.1} parent=11 // pred_fallthru
          _
        // Predicated region
        $region17: #{tpu_custom_call.1} parent=11 // pred_check
          %p278 = pneg %p87
        $region18: #{tpu_custom_call.1} parent=11 // pred_check_branch
          %280 = sbr.rel (%p278) target = $region20
        $region19: #{tpu_custom_call.1} parent=11 // pred_region
          _
        $region20: #{tpu_custom_call.1} parent=11 // pred_fallthru
          _
        // Predicated region
        $region21: #{tpu_custom_call.1} parent=11 // pred_check
          %p281 = pneg %p108
        $region22: #{tpu_custom_call.1} parent=11 // pred_check_branch
          %283 = sbr.rel (%p281) target = $region24
        $region23: #{tpu_custom_call.1} parent=11 // pred_region
          _
        $region24: #{tpu_custom_call.1} parent=11 // pred_fallthru
          _
        // Predicated region
        $region25: #{tpu_custom_call.1} parent=11 // pred_check
          %p284 = pneg %p129
        $region26: #{tpu_custom_call.1} parent=11 // pred_check_branch
          %286 = sbr.rel (%p284) target = $region28
        $region27: #{tpu_custom_call.1} parent=11 // pred_region
          _
        $region28: #{tpu_custom_call.1} parent=11 // pred_fallthru
          _
        // Predicated region
        $region29: #{tpu_custom_call.1} parent=11 // pred_check
          %p287 = pneg %p150
        $region30: #{tpu_custom_call.1} parent=11 // pred_check_branch
          %289 = sbr.rel (%p287) target = $region32
        $region31: #{tpu_custom_call.1} parent=11 // pred_region
          _
        $region32: #{tpu_custom_call.1} parent=11 // pred_fallthru
          _
        // Predicated region
        $region33: #{tpu_custom_call.1} parent=11 // pred_check
          %p290 = pneg %p171
        $region34: #{tpu_custom_call.1} parent=11 // pred_check_branch
          %292 = sbr.rel (%p290) target = $region36
        $region35: #{tpu_custom_call.1} parent=11 // pred_region
          _
        $region36: #{tpu_custom_call.1} parent=11 // pred_fallthru
          _
        // Predicated region
        $region37: #{tpu_custom_call.1} parent=11 // pred_check
          %p293 = pneg %p192
        $region38: #{tpu_custom_call.1} parent=11 // pred_check_branch
          %295 = sbr.rel (%p293) target = $region40
        $region39: #{tpu_custom_call.1} parent=11 // pred_region
          _
        $region40: #{tpu_custom_call.1} parent=11 // pred_fallthru
          _
        // Predicated region
        $region41: #{tpu_custom_call.1} parent=11 // pred_check
          %p296 = pneg %p213
        $region42: #{tpu_custom_call.1} parent=11 // pred_check_branch
          %298 = sbr.rel (%p296) target = $region44
        $region43: #{tpu_custom_call.1} parent=11 // pred_region
          _
        $region44: #{tpu_custom_call.1} parent=11 // pred_fallthru
          _
        // Predicated region
        $region45: #{tpu_custom_call.1} parent=11 // pred_check
          %p299 = pneg %p234
        $region46: #{tpu_custom_call.1} parent=11 // pred_check_branch
          %301 = sbr.rel (%p299) target = $region48
        $region47: #{tpu_custom_call.1} parent=11 // pred_region
          _
        $region48: #{tpu_custom_call.1} parent=11 // pred_fallthru
          _
      $region12: #{tpu_custom_call.1} parent=5 // pred_fallthru
        _
      %p302 = scmp.lt.s32.totalorder %s19, 2
      // Predicated region
      $region49: #{tpu_custom_call.1} parent=5 // pred_check
        %p303 = pneg %p302
      $region50: #{tpu_custom_call.1} parent=5 // pred_check_branch
        %305 = sbr.rel (%p303) target = $region52
      $region51: #{tpu_custom_call.1} parent=5 // pred_region
        // Predicated region
        $region53: #{tpu_custom_call.1} parent=51 // pred_check
          %p306 = pneg %p39
        $region54: #{tpu_custom_call.1} parent=51 // pred_check_branch
          %308 = sbr.rel (%p306) target = $region56
        $region55: #{tpu_custom_call.1} parent=51 // pred_region
          %p309 = scmp.lt.s32.totalorder %s19, 1
          %s310 = scalar_select %p309, %s19, 1
          %s311 = smul.addr %s310, 54
          %s312 = smul.addr %s311, 8
          %s313 = scalar_lea.vmem %s0, %s312
        $region56: #{tpu_custom_call.1} parent=51 // pred_fallthru
          _
      $region52: #{tpu_custom_call.1} parent=5 // pred_fallthru
        _
      %p314 = scmp.le.s32.totalorder 1, %s19
      %p315 = scmp.lt.s32.totalorder %s19, 3
      %p316 = pnand %p314, %p315
      %p317 = pneg %p316
      // Predicated region
      $region57: #{tpu_custom_call.1} parent=5 // pred_check
        _
      $region58: #{tpu_custom_call.1} parent=5 // pred_check_branch
        %319 = sbr.rel (%p316) target = $region60
      $region59: #{tpu_custom_call.1} parent=5 // pred_region
        %s320 = ssub.s32 %s19, 1
        %p321 = scmp.lt.s32.totalorder %s24, 1
        %s322 = scalar_select %p321, %s24, 1
        %s323 = smul.addr %s322, 54
        %s324 = smul.addr %s323, 8
        %s325 = scalar_lea.vmem %s0, %s324
        %p326 = pneg %p45
        %p327 = pneg %p42
        %p328 = pneg %p66
        %p329 = pneg %p63
        %p330 = pneg %p87
        %p331 = pneg %p84
        %p332 = pneg %p108
        %p333 = pneg %p105
        %p334 = pneg %p129
        %p335 = pneg %p126
        %p336 = pneg %p150
        %p337 = pneg %p147
        %p338 = pneg %p171
        %p339 = pneg %p168
        %p340 = pneg %p192
        %p341 = pneg %p189
        %p342 = pneg %p213
        %p343 = pneg %p210
        %p344 = pneg %p234
        %p345 = pneg %p231
        %p346 = pneg %p260
        %p347 = pneg %p257
        %s348 = sand.u32 %s247, 1
        %s349 = scalar_lea.sflag [#allocation4], %s348
        %s350 = sand.u32 %s247, 1
        %s351 = smul.addr %s350, 256
        %s352 = scalar_lea.vmem [#allocation3], %s351
        %p353 = scmp.lt.s32.totalorder %s24, 1
        %s354 = scalar_select %p353, %s24, 1
        %s355 = smul.addr %s354, 54
        %s356 = smul.addr %s355, 8
        %s357 = scalar_lea.vmem %s0, %s356
        %v358 = vld [vmem:[%s357] sm:$0xff]
        %v359 = vld [vmem:[%s357 + $0x8] sm:$0xff]
        %v360 = vld [vmem:[%s357 + $0x10] sm:$0x3]
        %v361 = vld [vmem:[%s357 + $0x18] sm:$0xff]
        %v362 = vld [vmem:[%s357 + $0x20] sm:$0xff]
        %v363 = vld [vmem:[%s357 + $0x28] sm:$0x3]
        %v364 = vld [vmem:[%s357 + $0x30] sm:$0xff]
        %v365 = vld [vmem:[%s357 + $0x38] sm:$0xff]
        %v366 = vld [vmem:[%s357 + $0x40] sm:$0x3]
        %v367 = vld [vmem:[%s357 + $0x48] sm:$0xff]
        %v368 = vld [vmem:[%s357 + $0x50] sm:$0xff]
        %v369 = vld [vmem:[%s357 + $0x58] sm:$0x3]
        %v370 = vld [vmem:[%s357 + $0x60] sm:$0xff]
        %v371 = vld [vmem:[%s357 + $0x68] sm:$0xff]
        %v372 = vld [vmem:[%s357 + $0x70] sm:$0x3]
        %v373 = vld [vmem:[%s357 + $0x78] sm:$0xff]
        %v374 = vld [vmem:[%s357 + $0x80] sm:$0xff]
        %v375 = vld [vmem:[%s357 + $0x88] sm:$0x3]
        %v376 = vld [vmem:[%s357 + $0x90] sm:$0xff]
        %v377 = vld [vmem:[%s357 + $0x98] sm:$0xff]
        %v378 = vld [vmem:[%s357 + $0xa0] sm:$0x3]
        %v379 = vld [vmem:[%s357 + $0xa8] sm:$0xff]
        %v380 = vld [vmem:[%s357 + $0xb0] sm:$0xff]
        %v381 = vld [vmem:[%s357 + $0xb8] sm:$0x3]
        %v382 = vld [vmem:[%s357 + $0xc0] sm:$0xff]
        %v383 = vld [vmem:[%s357 + $0xc8] sm:$0xff]
        %v384 = vld [vmem:[%s357 + $0xd0] sm:$0x3]
        %v385 = vld [vmem:[%s357 + $0xd8] sm:$0xff]
        %v386 = vld [vmem:[%s357 + $0xe0] sm:$0xff]
        %v387 = vld [vmem:[%s357 + $0xe8] sm:$0x3]
        %v388 = vld [vmem:[%s357 + $0xf0] sm:$0xff]
        %v389 = vld [vmem:[%s357 + $0xf8] sm:$0xff]
        %v390 = vld [vmem:[%s357 + $0x100] sm:$0x3]
        %v391 = vld [vmem:[%s357 + $0x108] sm:$0xff]
        %v392 = vld [vmem:[%s357 + $0x110] sm:$0xff]
        %v393 = vld [vmem:[%s357 + $0x118] sm:$0x3]
        %v394 = vld [vmem:[%s357 + $0x120] sm:$0xff]
        %v395 = vld [vmem:[%s357 + $0x128] sm:$0xff]
        %v396 = vld [vmem:[%s357 + $0x130] sm:$0x3]
        %v397 = vld [vmem:[%s357 + $0x138] sm:$0xff]
        %v398 = vld [vmem:[%s357 + $0x140] sm:$0xff]
        %v399 = vld [vmem:[%s357 + $0x148] sm:$0x3]
        %v400 = vld [vmem:[%s357 + $0x150] sm:$0xff]
        %v401 = vld [vmem:[%s357 + $0x158] sm:$0xff]
        %v402 = vld [vmem:[%s357 + $0x160] sm:$0x3]
        %v403 = vld [vmem:[%s357 + $0x168] sm:$0xff]
        %v404 = vld [vmem:[%s357 + $0x170] sm:$0xff]
        %v405 = vld [vmem:[%s357 + $0x178] sm:$0x3]
        %v406 = vld [vmem:[%s357 + $0x180] sm:$0xff]
        %v407 = vld [vmem:[%s357 + $0x188] sm:$0xff]
        %v408 = vld [vmem:[%s357 + $0x190] sm:$0x3]
        %v409 = vld [vmem:[%s357 + $0x198] sm:$0xff]
        %v410 = vld [vmem:[%s357 + $0x1a0] sm:$0xff]
        %v411 = vld [vmem:[%s357 + $0x1a8] sm:$0x3]
        %vm412 = vcmask 130048
        %v413 = vsel %vm412, %v358, 0.0
        %v414 = vsel %vm412, %v361, 0.0
        %v415 = vadd.f32 %v413, %v414
        %v416 = vsel %vm412, %v364, 0.0
        %v417 = vadd.f32 %v415, %v416
        %v418 = vsel %vm412, %v367, 0.0
        %v419 = vadd.f32 %v417, %v418
        %v420 = vsel %vm412, %v370, 0.0
        %v421 = vadd.f32 %v419, %v420
        %v422 = vsel %vm412, %v373, 0.0
        %v423 = vadd.f32 %v421, %v422
        %v424 = vsel %vm412, %v376, 0.0
        %v425 = vadd.f32 %v423, %v424
        %v426 = vsel %vm412, %v379, 0.0
        %v427 = vadd.f32 %v425, %v426
        %v428 = vsel %vm412, %v382, 0.0
        %v429 = vadd.f32 %v427, %v428
        %v430 = vsel %vm412, %v385, 0.0
        %v431 = vadd.f32 %v429, %v430
        %v432 = vsel %vm412, %v388, 0.0
        %v433 = vadd.f32 %v431, %v432
        %v434 = vsel %vm412, %v391, 0.0
        %v435 = vadd.f32 %v433, %v434
        %v436 = vsel %vm412, %v394, 0.0
        %v437 = vadd.f32 %v435, %v436
        %v438 = vsel %vm412, %v397, 0.0
        %v439 = vadd.f32 %v437, %v438
        %v440 = vsel %vm412, %v400, 0.0
        %v441 = vadd.f32 %v439, %v440
        %v442 = vsel %vm412, %v403, 0.0
        %v443 = vadd.f32 %v441, %v442
        %v444 = vsel %vm412, %v406, 0.0
        %v445 = vadd.f32 %v443, %v444
        %v446 = vsel %vm412, %v409, 0.0
        %v447 = vadd.f32 %v445, %v446
        %v448 = vsel %vm412, %v359, 0.0
        %v449 = vsel %vm412, %v362, 0.0
        %v450 = vadd.f32 %v448, %v449
        %v451 = vsel %vm412, %v365, 0.0
        %v452 = vadd.f32 %v450, %v451
        %v453 = vsel %vm412, %v368, 0.0
        %v454 = vadd.f32 %v452, %v453
        %v455 = vsel %vm412, %v371, 0.0
        %v456 = vadd.f32 %v454, %v455
        %v457 = vsel %vm412, %v374, 0.0
        %v458 = vadd.f32 %v456, %v457
        %v459 = vsel %vm412, %v377, 0.0
        %v460 = vadd.f32 %v458, %v459
        %v461 = vsel %vm412, %v380, 0.0
        %v462 = vadd.f32 %v460, %v461
        %v463 = vsel %vm412, %v383, 0.0
        %v464 = vadd.f32 %v462, %v463
        %v465 = vsel %vm412, %v386, 0.0
        %v466 = vadd.f32 %v464, %v465
        %v467 = vsel %vm412, %v389, 0.0
        %v468 = vadd.f32 %v466, %v467
        %v469 = vsel %vm412, %v392, 0.0
        %v470 = vadd.f32 %v468, %v469
        %v471 = vsel %vm412, %v395, 0.0
        %v472 = vadd.f32 %v470, %v471
        %v473 = vsel %vm412, %v398, 0.0
        %v474 = vadd.f32 %v472, %v473
        %v475 = vsel %vm412, %v401, 0.0
        %v476 = vadd.f32 %v474, %v475
        %v477 = vsel %vm412, %v404, 0.0
        %v478 = vadd.f32 %v476, %v477
        %v479 = vsel %vm412, %v407, 0.0
        %v480 = vadd.f32 %v478, %v479
        %v481 = vsel %vm412, %v410, 0.0
        %v482 = vadd.f32 %v480, %v481
        %vm483 = vcmask 123904
        %v484 = vsel %vm483, %v360, 0.0
        %v485 = vsel %vm483, %v363, 0.0
        %v486 = vadd.f32 %v484, %v485
        %v487 = vsel %vm483, %v366, 0.0
        %v488 = vadd.f32 %v486, %v487
        %v489 = vsel %vm483, %v369, 0.0
        %v490 = vadd.f32 %v488, %v489
        %v491 = vsel %vm483, %v372, 0.0
        %v492 = vadd.f32 %v490, %v491
        %v493 = vsel %vm483, %v375, 0.0
        %v494 = vadd.f32 %v492, %v493
        %v495 = vsel %vm483, %v378, 0.0
        %v496 = vadd.f32 %v494, %v495
        %v497 = vsel %vm483, %v381, 0.0
        %v498 = vadd.f32 %v496, %v497
        %v499 = vsel %vm483, %v384, 0.0
        %v500 = vadd.f32 %v498, %v499
        %v501 = vsel %vm483, %v387, 0.0
        %v502 = vadd.f32 %v500, %v501
        %v503 = vsel %vm483, %v390, 0.0
        %v504 = vadd.f32 %v502, %v503
        %v505 = vsel %vm483, %v393, 0.0
        %v506 = vadd.f32 %v504, %v505
        %v507 = vsel %vm483, %v396, 0.0
        %v508 = vadd.f32 %v506, %v507
        %v509 = vsel %vm483, %v399, 0.0
        %v510 = vadd.f32 %v508, %v509
        %v511 = vsel %vm483, %v402, 0.0
        %v512 = vadd.f32 %v510, %v511
        %v513 = vsel %vm483, %v405, 0.0
        %v514 = vadd.f32 %v512, %v513
        %v515 = vsel %vm483, %v408, 0.0
        %v516 = vadd.f32 %v514, %v515
        %v517 = vsel %vm483, %v411, 0.0
        %v518 = vadd.f32 %v516, %v517
        %v519 = vmul.f32 %v358, %v358
        %v520 = vmul.f32 %v359, %v359
        %v521 = vmul.f32 %v360, %v360
        %v522 = vmul.f32 %v361, %v361
        %v523 = vmul.f32 %v362, %v362
        %v524 = vmul.f32 %v363, %v363
        %v525 = vmul.f32 %v364, %v364
        %v526 = vmul.f32 %v365, %v365
        %v527 = vmul.f32 %v366, %v366
        %v528 = vmul.f32 %v367, %v367
        %v529 = vmul.f32 %v368, %v368
        %v530 = vmul.f32 %v369, %v369
        %v531 = vmul.f32 %v370, %v370
        %v532 = vmul.f32 %v371, %v371
        %v533 = vmul.f32 %v372, %v372
        %v534 = vmul.f32 %v373, %v373
        %v535 = vmul.f32 %v374, %v374
        %v536 = vmul.f32 %v375, %v375
        %v537 = vmul.f32 %v376, %v376
        %v538 = vmul.f32 %v377, %v377
        %v539 = vmul.f32 %v378, %v378
        %v540 = vmul.f32 %v379, %v379
        %v541 = vmul.f32 %v380, %v380
        %v542 = vmul.f32 %v381, %v381
        %v543 = vmul.f32 %v382, %v382
        %v544 = vmul.f32 %v383, %v383
        %v545 = vmul.f32 %v384, %v384
        %v546 = vmul.f32 %v385, %v385
        %v547 = vmul.f32 %v386, %v386
        %v548 = vmul.f32 %v387, %v387
        %v549 = vmul.f32 %v388, %v388
        %v550 = vmul.f32 %v389, %v389
        %v551 = vmul.f32 %v390, %v390
        %v552 = vmul.f32 %v391, %v391
        %v553 = vmul.f32 %v392, %v392
        %v554 = vmul.f32 %v393, %v393
        %v555 = vmul.f32 %v394, %v394
        %v556 = vmul.f32 %v395, %v395
        %v557 = vmul.f32 %v396, %v396
        %v558 = vmul.f32 %v397, %v397
        %v559 = vmul.f32 %v398, %v398
        %v560 = vmul.f32 %v399, %v399
        %v561 = vmul.f32 %v400, %v400
        %v562 = vmul.f32 %v401, %v401
        %v563 = vmul.f32 %v402, %v402
        %v564 = vmul.f32 %v403, %v403
        %v565 = vmul.f32 %v404, %v404
        %v566 = vmul.f32 %v405, %v405
        %v567 = vmul.f32 %v406, %v406
        %v568 = vmul.f32 %v407, %v407
        %v569 = vmul.f32 %v408, %v408
        %v570 = vmul.f32 %v409, %v409
        %v571 = vmul.f32 %v410, %v410
        %v572 = vmul.f32 %v411, %v411
        %v573 = vsel %vm412, %v519, 0.0
        %v574 = vsel %vm412, %v522, 0.0
        %v575 = vadd.f32 %v573, %v574
        %v576 = vsel %vm412, %v525, 0.0
        %v577 = vadd.f32 %v575, %v576
        %v578 = vsel %vm412, %v528, 0.0
        %v579 = vadd.f32 %v577, %v578
        %v580 = vsel %vm412, %v531, 0.0
        %v581 = vadd.f32 %v579, %v580
        %v582 = vsel %vm412, %v534, 0.0
        %v583 = vadd.f32 %v581, %v582
        %v584 = vsel %vm412, %v537, 0.0
        %v585 = vadd.f32 %v583, %v584
        %v586 = vsel %vm412, %v540, 0.0
        %v587 = vadd.f32 %v585, %v586
        %v588 = vsel %vm412, %v543, 0.0
        %v589 = vadd.f32 %v587, %v588
        %v590 = vsel %vm412, %v546, 0.0
        %v591 = vadd.f32 %v589, %v590
        %v592 = vsel %vm412, %v549, 0.0
        %v593 = vadd.f32 %v591, %v592
        %v594 = vsel %vm412, %v552, 0.0
        %v595 = vadd.f32 %v593, %v594
        %v596 = vsel %vm412, %v555, 0.0
        %v597 = vadd.f32 %v595, %v596
        %v598 = vsel %vm412, %v558, 0.0
        %v599 = vadd.f32 %v597, %v598
        %v600 = vsel %vm412, %v561, 0.0
        %v601 = vadd.f32 %v599, %v600
        %v602 = vsel %vm412, %v564, 0.0
        %v603 = vadd.f32 %v601, %v602
        %v604 = vsel %vm412, %v567, 0.0
        %v605 = vadd.f32 %v603, %v604
        %v606 = vsel %vm412, %v570, 0.0
        %v607 = vadd.f32 %v605, %v606
        %v608 = vsel %vm412, %v520, 0.0
        %v609 = vsel %vm412, %v523, 0.0
        %v610 = vadd.f32 %v608, %v609
        %v611 = vsel %vm412, %v526, 0.0
        %v612 = vadd.f32 %v610, %v611
        %v613 = vsel %vm412, %v529, 0.0
        %v614 = vadd.f32 %v612, %v613
        %v615 = vsel %vm412, %v532, 0.0
        %v616 = vadd.f32 %v614, %v615
        %v617 = vsel %vm412, %v535, 0.0
        %v618 = vadd.f32 %v616, %v617
        %v619 = vsel %vm412, %v538, 0.0
        %v620 = vadd.f32 %v618, %v619
        %v621 = vsel %vm412, %v541, 0.0
        %v622 = vadd.f32 %v620, %v621
        %v623 = vsel %vm412, %v544, 0.0
        %v624 = vadd.f32 %v622, %v623
        %v625 = vsel %vm412, %v547, 0.0
        %v626 = vadd.f32 %v624, %v625
        %v627 = vsel %vm412, %v550, 0.0
        %v628 = vadd.f32 %v626, %v627
        %v629 = vsel %vm412, %v553, 0.0
        %v630 = vadd.f32 %v628, %v629
        %v631 = vsel %vm412, %v556, 0.0
        %v632 = vadd.f32 %v630, %v631
        %v633 = vsel %vm412, %v559, 0.0
        %v634 = vadd.f32 %v632, %v633
        %v635 = vsel %vm412, %v562, 0.0
        %v636 = vadd.f32 %v634, %v635
        %v637 = vsel %vm412, %v565, 0.0
        %v638 = vadd.f32 %v636, %v637
        %v639 = vsel %vm412, %v568, 0.0
        %v640 = vadd.f32 %v638, %v639
        %v641 = vsel %vm412, %v571, 0.0
        %v642 = vadd.f32 %v640, %v641
        %v643 = vsel %vm483, %v521, 0.0
        %v644 = vsel %vm483, %v524, 0.0
        %v645 = vadd.f32 %v643, %v644
        %v646 = vsel %vm483, %v527, 0.0
        %v647 = vadd.f32 %v645, %v646
        %v648 = vsel %vm483, %v530, 0.0
        %v649 = vadd.f32 %v647, %v648
        %v650 = vsel %vm483, %v533, 0.0
        %v651 = vadd.f32 %v649, %v650
        %v652 = vsel %vm483, %v536, 0.0
        %v653 = vadd.f32 %v651, %v652
        %v654 = vsel %vm483, %v539, 0.0
        %v655 = vadd.f32 %v653, %v654
        %v656 = vsel %vm483, %v542, 0.0
        %v657 = vadd.f32 %v655, %v656
        %v658 = vsel %vm483, %v545, 0.0
        %v659 = vadd.f32 %v657, %v658
        %v660 = vsel %vm483, %v548, 0.0
        %v661 = vadd.f32 %v659, %v660
        %v662 = vsel %vm483, %v551, 0.0
        %v663 = vadd.f32 %v661, %v662
        %v664 = vsel %vm483, %v554, 0.0
        %v665 = vadd.f32 %v663, %v664
        %v666 = vsel %vm483, %v557, 0.0
        %v667 = vadd.f32 %v665, %v666
        %v668 = vsel %vm483, %v560, 0.0
        %v669 = vadd.f32 %v667, %v668
        %v670 = vsel %vm483, %v563, 0.0
        %v671 = vadd.f32 %v669, %v670
        %v672 = vsel %vm483, %v566, 0.0
        %v673 = vadd.f32 %v671, %v672
        %v674 = vsel %vm483, %v569, 0.0
        %v675 = vadd.f32 %v673, %v674
        %v676 = vsel %vm483, %v572, 0.0
        %v677 = vadd.f32 %v675, %v676
        %v678 = vsel %vm412, %v447, 0.0
        %v679 = vsel %vm412, %v482, 0.0
        %v680 = vadd.f32 %v678, %v679
        %v681 = vsel %vm483, %v518, 0.0
        %v682 = vadd.f32 %v680, %v681
        %v683 = vrot.slane %v682, 4
        %v684 = vadd.f32 %v682, %v683
        %v685 = vrot.slane %v684, 2
        %v686 = vadd.f32 %v684, %v685
        %v687 = vrot.slane %v686, 1
        %v688 = vadd.f32 %v686, %v687
        %v689 = vsel %vm412, %v607, 0.0
        %v690 = vsel %vm412, %v642, 0.0
        %v691 = vadd.f32 %v689, %v690
        %v692 = vsel %vm483, %v677, 0.0
        %v693 = vadd.f32 %v691, %v692
        %v694 = vrot.slane %v693, 4
        %v695 = vadd.f32 %v693, %v694
        %v696 = vrot.slane %v695, 2
        %v697 = vadd.f32 %v695, %v696
        %v698 = vrot.slane %v697, 1
        %v699 = vadd.f32 %v697, %v698
        %v700 = vld [vmem:[%s4] sm:$0xff]
        %v701 = vld [vmem:[%s4 + $0x8] sm:$0xff]
        %v703 = vsel %vm412, %v688, 0
        %705 = vmatprep.subr.mxu0 0.0
        %706 = vmatpush1.msra.mxu0 0.0
        %707 = vmatprep.subr.mxu0 0.0
        %708 = vmatpush1.msra.mxu0 0.0
        %709 = vmatprep.subr.mxu0 0.0
        %710 = vmatpush1.msra.mxu0 0.0
        %711 = vmatprep.subr.mxu0 0.0
        %712 = vmatpush1.msra.mxu0 0.0
        %713 = vmatprep.subr.mxu0 0.0
        %714 = vmatpush1.msra.mxu0 0.0
        %715 = vmatprep.subr.mxu0 0.0
        %716 = vmatpush1.msra.mxu0 0.0
        %717 = vmatprep.subr.mxu0 0.0
        %718 = vmatpush1.msra.mxu0 0.0
        %719 = vmatprep.subr.mxu0 0.0
        %720 = vmatpush1.msra.mxu0 0.0
        %721 = vmatprep.subr.mxu0 0.0
        %722 = vmatpush1.msra.mxu0 0.0
        %723 = vmatprep.subr.mxu0 0.0
        %724 = vmatpush1.msra.mxu0 0.0
        %725 = vmatprep.subr.mxu0 0.0
        %726 = vmatpush1.msra.mxu0 0.0
        %727 = vmatprep.subr.mxu0 0.0
        %728 = vmatpush1.msra.mxu0 0.0
        %729 = vmatprep.subr.mxu0 0.0
        %730 = vmatpush1.msra.mxu0 0.0
        %731 = vmatprep.subr.mxu0 0.0
        %732 = vmatpush1.msra.mxu0 0.0
        %733 = vmatprep.subr.mxu0 0.0
        %734 = vmatpush1.msra.mxu0 %v701
        %735 = vmatprep.subr.mxu0 0.0
        %736 = vmatpush1.msra.mxu0 %v700
        %737 = vmatprep.subr.mxu0 0.0
        %738 = vmatpush2.msra.mxu0 0.0
        %739 = vmatprep.subr.mxu0 0.0
        %740 = vmatpush2.msra.mxu0 0.0
        %741 = vmatprep.subr.mxu0 0.0
        %742 = vmatpush2.msra.mxu0 0.0
        %743 = vmatprep.subr.mxu0 0.0
        %744 = vmatpush2.msra.mxu0 0.0
        %745 = vmatprep.subr.mxu0 0.0
        %746 = vmatpush2.msra.mxu0 0.0
        %747 = vmatprep.subr.mxu0 0.0
        %748 = vmatpush2.msra.mxu0 0.0
        %749 = vmatprep.subr.mxu0 0.0
        %750 = vmatpush2.msra.mxu0 0.0
        %751 = vmatprep.subr.mxu0 0.0
        %752 = vmatpush2.msra.mxu0 0.0
        %753 = vmatprep.subr.mxu0 0.0
        %754 = vmatpush2.msra.mxu0 0.0
        %755 = vmatprep.subr.mxu0 0.0
        %756 = vmatpush2.msra.mxu0 0.0
        %757 = vmatprep.subr.mxu0 0.0
        %758 = vmatpush2.msra.mxu0 0.0
        %759 = vmatprep.subr.mxu0 0.0
        %760 = vmatpush2.msra.mxu0 0.0
        %761 = vmatprep.subr.mxu0 0.0
        %762 = vmatpush2.msra.mxu0 0.0
        %763 = vmatprep.subr.mxu0 0.0
        %764 = vmatpush2.msra.mxu0 0.0
        %765 = vmatprep.subr.mxu0 0.0
        %766 = vmatpush2.msra.mxu0 0.0
        %767 = vmatprep.subr.mxu0 0.0
        %768 = vmatpush2.msra.mxu0 0.0
        %769 = vmatprep.mubr.f32.mxu0 0.0
        %770 = vmatmul.mubr.f32.gmra.mxu0 %v703
        %v771 = vpop.f32.mrf.mxu0
        %v772 = vadd.f32 0.0, %v771
        %v773 = vpop.f32.mrf.mxu0
        %774 = vdwg.mxu0
        %v776 = vsel %vm412, %v699, 0
        %778 = vmatprep.subr.mxu0 0.0
        %779 = vmatpush1.msra.mxu0 0.0
        %780 = vmatprep.subr.mxu0 0.0
        %781 = vmatpush1.msra.mxu0 0.0
        %782 = vmatprep.subr.mxu0 0.0
        %783 = vmatpush1.msra.mxu0 0.0
        %784 = vmatprep.subr.mxu0 0.0
        %785 = vmatpush1.msra.mxu0 0.0
        %786 = vmatprep.subr.mxu0 0.0
        %787 = vmatpush1.msra.mxu0 0.0
        %788 = vmatprep.subr.mxu0 0.0
        %789 = vmatpush1.msra.mxu0 0.0
        %790 = vmatprep.subr.mxu0 0.0
        %791 = vmatpush1.msra.mxu0 0.0
        %792 = vmatprep.subr.mxu0 0.0
        %793 = vmatpush1.msra.mxu0 0.0
        %794 = vmatprep.subr.mxu0 0.0
        %795 = vmatpush1.msra.mxu0 0.0
        %796 = vmatprep.subr.mxu0 0.0
        %797 = vmatpush1.msra.mxu0 0.0
        %798 = vmatprep.subr.mxu0 0.0
        %799 = vmatpush1.msra.mxu0 0.0
        %800 = vmatprep.subr.mxu0 0.0
        %801 = vmatpush1.msra.mxu0 0.0
        %802 = vmatprep.subr.mxu0 0.0
        %803 = vmatpush1.msra.mxu0 0.0
        %804 = vmatprep.subr.mxu0 0.0
        %805 = vmatpush1.msra.mxu0 0.0
        %806 = vmatprep.subr.mxu0 0.0
        %807 = vmatpush1.msra.mxu0 %v701
        %808 = vmatprep.subr.mxu0 0.0
        %809 = vmatpush1.msra.mxu0 %v700
        %810 = vmatprep.subr.mxu0 0.0
        %811 = vmatpush2.msra.mxu0 0.0
        %812 = vmatprep.subr.mxu0 0.0
        %813 = vmatpush2.msra.mxu0 0.0
        %814 = vmatprep.subr.mxu0 0.0
        %815 = vmatpush2.msra.mxu0 0.0
        %816 = vmatprep.subr.mxu0 0.0
        %817 = vmatpush2.msra.mxu0 0.0
        %818 = vmatprep.subr.mxu0 0.0
        %819 = vmatpush2.msra.mxu0 0.0
        %820 = vmatprep.subr.mxu0 0.0
        %821 = vmatpush2.msra.mxu0 0.0
        %822 = vmatprep.subr.mxu0 0.0
        %823 = vmatpush2.msra.mxu0 0.0
        %824 = vmatprep.subr.mxu0 0.0
        %825 = vmatpush2.msra.mxu0 0.0
        %826 = vmatprep.subr.mxu0 0.0
        %827 = vmatpush2.msra.mxu0 0.0
        %828 = vmatprep.subr.mxu0 0.0
        %829 = vmatpush2.msra.mxu0 0.0
        %830 = vmatprep.subr.mxu0 0.0
        %831 = vmatpush2.msra.mxu0 0.0
        %832 = vmatprep.subr.mxu0 0.0
        %833 = vmatpush2.msra.mxu0 0.0
        %834 = vmatprep.subr.mxu0 0.0
        %835 = vmatpush2.msra.mxu0 0.0
        %836 = vmatprep.subr.mxu0 0.0
        %837 = vmatpush2.msra.mxu0 0.0
        %838 = vmatprep.subr.mxu0 0.0
        %839 = vmatpush2.msra.mxu0 0.0
        %840 = vmatprep.subr.mxu0 0.0
        %841 = vmatpush2.msra.mxu0 0.0
        %842 = vmatprep.mubr.f32.mxu0 0.0
        %843 = vmatmul.mubr.f32.gmra.mxu0 %v776
        %v844 = vpop.f32.mrf.mxu0
        %v845 = vadd.f32 0.0, %v844
        %v846 = vpop.f32.mrf.mxu0
        %847 = vdwg.mxu0
        %v848 = vrcp.pop 512.0
        %v849 = vmul.f32 %v772, %v848
        %v850 = vmul.f32 %v845, %v848
        %v851 = vmul.f32 %v849, %v849
        %v852 = vsub.f32 %v850, %v851
        %v853 = vmax.f32 %v852, 0.0
        %v854 = vadd.f32 %v853, 1e-05
        %v855 = vrsqrt.pop %v854
        %v856 = vld [vmem:[%s2] sm:$0x1]
        %v857 = vmul.f32 %v855, %v856
        %v858 = vld [vmem:[%s3] sm:$0x1]
        %v859 = vmul.f32 %v849, %v855
        %v860 = vmul.f32 %v859, %v856
        %v861 = vsub.f32 %v858, %v860
        %v862 = vlaneseq
        %v863 = vshrl.u32 %v862, 7
        %v864 = vsub.s32 0, %v863
        %v865 = vrot.slane %v857, %v864
        %v866 = vmul.f32 %v358, %v865
        %v867 = vmul.f32 %v359, %v865
        %v868 = vmul.f32 %v360, %v865
        %v869 = vmul.f32 %v361, %v865
        %v870 = vmul.f32 %v362, %v865
        %v871 = vmul.f32 %v363, %v865
        %v872 = vmul.f32 %v364, %v865
        %v873 = vmul.f32 %v365, %v865
        %v874 = vmul.f32 %v366, %v865
        %v875 = vmul.f32 %v367, %v865
        %v876 = vmul.f32 %v368, %v865
        %v877 = vmul.f32 %v369, %v865
        %v878 = vmul.f32 %v370, %v865
        %v879 = vmul.f32 %v371, %v865
        %v880 = vmul.f32 %v372, %v865
        %v881 = vmul.f32 %v373, %v865
        %v882 = vmul.f32 %v374, %v865
        %v883 = vmul.f32 %v375, %v865
        %v884 = vmul.f32 %v376, %v865
        %v885 = vmul.f32 %v377, %v865
        %v886 = vmul.f32 %v378, %v865
        %v887 = vmul.f32 %v379, %v865
        %v888 = vmul.f32 %v380, %v865
        %v889 = vmul.f32 %v381, %v865
        %v890 = vmul.f32 %v382, %v865
        %v891 = vmul.f32 %v383, %v865
        %v892 = vmul.f32 %v384, %v865
        %v893 = vmul.f32 %v385, %v865
        %v894 = vmul.f32 %v386, %v865
        %v895 = vmul.f32 %v387, %v865
        %v896 = vmul.f32 %v388, %v865
        %v897 = vmul.f32 %v389, %v865
        %v898 = vmul.f32 %v390, %v865
        %v899 = vmul.f32 %v391, %v865
        %v900 = vmul.f32 %v392, %v865
        %v901 = vmul.f32 %v393, %v865
        %v902 = vmul.f32 %v394, %v865
        %v903 = vmul.f32 %v395, %v865
        %v904 = vmul.f32 %v396, %v865
        %v905 = vmul.f32 %v397, %v865
        %v906 = vmul.f32 %v398, %v865
        %v907 = vmul.f32 %v399, %v865
        %v908 = vmul.f32 %v400, %v865
        %v909 = vmul.f32 %v401, %v865
        %v910 = vmul.f32 %v402, %v865
        %v911 = vmul.f32 %v403, %v865
        %v912 = vmul.f32 %v404, %v865
        %v913 = vmul.f32 %v405, %v865
        %v914 = vmul.f32 %v406, %v865
        %v915 = vmul.f32 %v407, %v865
        %v916 = vmul.f32 %v408, %v865
        %v917 = vmul.f32 %v409, %v865
        %v918 = vmul.f32 %v410, %v865
        %v919 = vmul.f32 %v411, %v865
        %v921 = vlaneseq
        %v922 = vshrl.u32 %v921, 7
        %v923 = vsub.s32 0, %v922
        %v924 = vrot.slane %v861, %v923
        %v926 = vadd.f32 %v866, %v924
        %v927 = vadd.f32 %v867, %v924
        %v928 = vadd.f32 %v868, %v924
        %v929 = vadd.f32 %v869, %v924
        %v930 = vadd.f32 %v870, %v924
        %v931 = vadd.f32 %v871, %v924
        %v932 = vadd.f32 %v872, %v924
        %v933 = vadd.f32 %v873, %v924
        %v934 = vadd.f32 %v874, %v924
        %v935 = vadd.f32 %v875, %v924
        %v936 = vadd.f32 %v876, %v924
        %v937 = vadd.f32 %v877, %v924
        %v938 = vadd.f32 %v878, %v924
        %v939 = vadd.f32 %v879, %v924
        %v940 = vadd.f32 %v880, %v924
        %v941 = vadd.f32 %v881, %v924
        %v942 = vadd.f32 %v882, %v924
        %v943 = vadd.f32 %v883, %v924
        %v944 = vadd.f32 %v884, %v924
        %v945 = vadd.f32 %v885, %v924
        %v946 = vadd.f32 %v886, %v924
        %v947 = vadd.f32 %v887, %v924
        %v948 = vadd.f32 %v888, %v924
        %v949 = vadd.f32 %v889, %v924
        %v950 = vadd.f32 %v890, %v924
        %v951 = vadd.f32 %v891, %v924
        %v952 = vadd.f32 %v892, %v924
        %v953 = vadd.f32 %v893, %v924
        %v954 = vadd.f32 %v894, %v924
        %v955 = vadd.f32 %v895, %v924
        %v956 = vadd.f32 %v896, %v924
        %v957 = vadd.f32 %v897, %v924
        %v958 = vadd.f32 %v898, %v924
        %v959 = vadd.f32 %v899, %v924
        %v960 = vadd.f32 %v900, %v924
        %v961 = vadd.f32 %v901, %v924
        %v962 = vadd.f32 %v902, %v924
        %v963 = vadd.f32 %v903, %v924
        %v964 = vadd.f32 %v904, %v924
        %v965 = vadd.f32 %v905, %v924
        %v966 = vadd.f32 %v906, %v924
        %v967 = vadd.f32 %v907, %v924
        %v968 = vadd.f32 %v908, %v924
        %v969 = vadd.f32 %v909, %v924
        %v970 = vadd.f32 %v910, %v924
        %v971 = vadd.f32 %v911, %v924
        %v972 = vadd.f32 %v912, %v924
        %v973 = vadd.f32 %v913, %v924
        %v974 = vadd.f32 %v914, %v924
        %v975 = vadd.f32 %v915, %v924
        %v976 = vadd.f32 %v916, %v924
        %v977 = vadd.f32 %v917, %v924
        %v978 = vadd.f32 %v918, %v924
        %v979 = vadd.f32 %v919, %v924
        %v980 = vxor.u32 %v926, 2147483648
        %v981 = vxor.u32 %v927, 2147483648
        %v982 = vxor.u32 %v928, 2147483648
        %v983 = vxor.u32 %v929, 2147483648
        %v984 = vxor.u32 %v930, 2147483648
        %v985 = vxor.u32 %v931, 2147483648
        %v986 = vxor.u32 %v932, 2147483648
        %v987 = vxor.u32 %v933, 2147483648
        %v988 = vxor.u32 %v934, 2147483648
        %v989 = vxor.u32 %v935, 2147483648
        %v990 = vxor.u32 %v936, 2147483648
        %v991 = vxor.u32 %v937, 2147483648
        %v992 = vxor.u32 %v938, 2147483648
        %v993 = vxor.u32 %v939, 2147483648
        %v994 = vxor.u32 %v940, 2147483648
        %v995 = vxor.u32 %v941, 2147483648
        %v996 = vxor.u32 %v942, 2147483648
        %v997 = vxor.u32 %v943, 2147483648
        %v998 = vxor.u32 %v944, 2147483648
        %v999 = vxor.u32 %v945, 2147483648
        %v1000 = vxor.u32 %v946, 2147483648
        %v1001 = vxor.u32 %v947, 2147483648
        %v1002 = vxor.u32 %v948, 2147483648
        %v1003 = vxor.u32 %v949, 2147483648
        %v1004 = vxor.u32 %v950, 2147483648
        %v1005 = vxor.u32 %v951, 2147483648
        %v1006 = vxor.u32 %v952, 2147483648
        %v1007 = vxor.u32 %v953, 2147483648
        %v1008 = vxor.u32 %v954, 2147483648
        %v1009 = vxor.u32 %v955, 2147483648
        %v1010 = vxor.u32 %v956, 2147483648
        %v1011 = vxor.u32 %v957, 2147483648
        %v1012 = vxor.u32 %v958, 2147483648
        %v1013 = vxor.u32 %v959, 2147483648
        %v1014 = vxor.u32 %v960, 2147483648
        %v1015 = vxor.u32 %v961, 2147483648
        %v1016 = vxor.u32 %v962, 2147483648
        %v1017 = vxor.u32 %v963, 2147483648
        %v1018 = vxor.u32 %v964, 2147483648
        %v1019 = vxor.u32 %v965, 2147483648
        %v1020 = vxor.u32 %v966, 2147483648
        %v1021 = vxor.u32 %v967, 2147483648
        %v1022 = vxor.u32 %v968, 2147483648
        %v1023 = vxor.u32 %v969, 2147483648
        %v1024 = vxor.u32 %v970, 2147483648
        %v1025 = vxor.u32 %v971, 2147483648
        %v1026 = vxor.u32 %v972, 2147483648
        %v1027 = vxor.u32 %v973, 2147483648
        %v1028 = vxor.u32 %v974, 2147483648
        %v1029 = vxor.u32 %v975, 2147483648
        %v1030 = vxor.u32 %v976, 2147483648
        %v1031 = vxor.u32 %v977, 2147483648
        %v1032 = vxor.u32 %v978, 2147483648
        %v1033 = vxor.u32 %v979, 2147483648
        %v1034 = vmul.f32 %v980, 1.442695
        %v1035 = vpow.pop %v1034
        %v1036 = vmul.f32 %v981, 1.442695
        %v1037 = vpow.pop %v1036
        %v1038 = vmul.f32 %v982, 1.442695
        %v1039 = vpow.pop %v1038
        %v1040 = vmul.f32 %v983, 1.442695
        %v1041 = vpow.pop %v1040
        %v1042 = vmul.f32 %v984, 1.442695
        %v1043 = vpow.pop %v1042
        %v1044 = vmul.f32 %v985, 1.442695
        %v1045 = vpow.pop %v1044
        %v1046 = vmul.f32 %v986, 1.442695
        %v1047 = vpow.pop %v1046
        %v1048 = vmul.f32 %v987, 1.442695
        %v1049 = vpow.pop %v1048
        %v1050 = vmul.f32 %v988, 1.442695
        %v1051 = vpow.pop %v1050
        %v1052 = vmul.f32 %v989, 1.442695
        %v1053 = vpow.pop %v1052
        %v1054 = vmul.f32 %v990, 1.442695
        %v1055 = vpow.pop %v1054
        %v1056 = vmul.f32 %v991, 1.442695
        %v1057 = vpow.pop %v1056
        %v1058 = vmul.f32 %v992, 1.442695
        %v1059 = vpow.pop %v1058
        %v1060 = vmul.f32 %v993, 1.442695
        %v1061 = vpow.pop %v1060
        %v1062 = vmul.f32 %v994, 1.442695
        %v1063 = vpow.pop %v1062
        %v1064 = vmul.f32 %v995, 1.442695
        %v1065 = vpow.pop %v1064
        %v1066 = vmul.f32 %v996, 1.442695
        %v1067 = vpow.pop %v1066
        %v1068 = vmul.f32 %v997, 1.442695
        %v1069 = vpow.pop %v1068
        %v1070 = vmul.f32 %v998, 1.442695
        %v1071 = vpow.pop %v1070
        %v1072 = vmul.f32 %v999, 1.442695
        %v1073 = vpow.pop %v1072
        %v1074 = vmul.f32 %v1000, 1.442695
        %v1075 = vpow.pop %v1074
        %v1076 = vmul.f32 %v1001, 1.442695
        %v1077 = vpow.pop %v1076
        %v1078 = vmul.f32 %v1002, 1.442695
        %v1079 = vpow.pop %v1078
        %v1080 = vmul.f32 %v1003, 1.442695
        %v1081 = vpow.pop %v1080
        %v1082 = vmul.f32 %v1004, 1.442695
        %v1083 = vpow.pop %v1082
        %v1084 = vmul.f32 %v1005, 1.442695
        %v1085 = vpow.pop %v1084
        %v1086 = vmul.f32 %v1006, 1.442695
        %v1087 = vpow.pop %v1086
        %v1088 = vmul.f32 %v1007, 1.442695
        %v1089 = vpow.pop %v1088
        %v1090 = vmul.f32 %v1008, 1.442695
        %v1091 = vpow.pop %v1090
        %v1092 = vmul.f32 %v1009, 1.442695
        %v1093 = vpow.pop %v1092
        %v1094 = vmul.f32 %v1010, 1.442695
        %v1095 = vpow.pop %v1094
        %v1096 = vmul.f32 %v1011, 1.442695
        %v1097 = vpow.pop %v1096
        %v1098 = vmul.f32 %v1012, 1.442695
        %v1099 = vpow.pop %v1098
        %v1100 = vmul.f32 %v1013, 1.442695
        %v1101 = vpow.pop %v1100
        %v1102 = vmul.f32 %v1014, 1.442695
        %v1103 = vpow.pop %v1102
        %v1104 = vmul.f32 %v1015, 1.442695
        %v1105 = vpow.pop %v1104
        %v1106 = vmul.f32 %v1016, 1.442695
        %v1107 = vpow.pop %v1106
        %v1108 = vmul.f32 %v1017, 1.442695
        %v1109 = vpow.pop %v1108
        %v1110 = vmul.f32 %v1018, 1.442695
        %v1111 = vpow.pop %v1110
        %v1112 = vmul.f32 %v1019, 1.442695
        %v1113 = vpow.pop %v1112
        %v1114 = vmul.f32 %v1020, 1.442695
        %v1115 = vpow.pop %v1114
        %v1116 = vmul.f32 %v1021, 1.442695
        %v1117 = vpow.pop %v1116
        %v1118 = vmul.f32 %v1022, 1.442695
        %v1119 = vpow.pop %v1118
        %v1120 = vmul.f32 %v1023, 1.442695
        %v1121 = vpow.pop %v1120
        %v1122 = vmul.f32 %v1024, 1.442695
        %v1123 = vpow.pop %v1122
        %v1124 = vmul.f32 %v1025, 1.442695
        %v1125 = vpow.pop %v1124
        %v1126 = vmul.f32 %v1026, 1.442695
        %v1127 = vpow.pop %v1126
        %v1128 = vmul.f32 %v1027, 1.442695
        %v1129 = vpow.pop %v1128
        %v1130 = vmul.f32 %v1028, 1.442695
        %v1131 = vpow.pop %v1130
        %v1132 = vmul.f32 %v1029, 1.442695
        %v1133 = vpow.pop %v1132
        %v1134 = vmul.f32 %v1030, 1.442695
        %v1135 = vpow.pop %v1134
        %v1136 = vmul.f32 %v1031, 1.442695
        %v1137 = vpow.pop %v1136
        %v1138 = vmul.f32 %v1032, 1.442695
        %v1139 = vpow.pop %v1138
        %v1140 = vmul.f32 %v1033, 1.442695
        %v1141 = vpow.pop %v1140
        %v1142 = vadd.f32 %v1035, 1.0
        %v1143 = vadd.f32 %v1037, 1.0
        %v1144 = vadd.f32 %v1039, 1.0
        %v1145 = vadd.f32 %v1041, 1.0
        %v1146 = vadd.f32 %v1043, 1.0
        %v1147 = vadd.f32 %v1045, 1.0
        %v1148 = vadd.f32 %v1047, 1.0
        %v1149 = vadd.f32 %v1049, 1.0
        %v1150 = vadd.f32 %v1051, 1.0
        %v1151 = vadd.f32 %v1053, 1.0
        %v1152 = vadd.f32 %v1055, 1.0
        %v1153 = vadd.f32 %v1057, 1.0
        %v1154 = vadd.f32 %v1059, 1.0
        %v1155 = vadd.f32 %v1061, 1.0
        %v1156 = vadd.f32 %v1063, 1.0
        %v1157 = vadd.f32 %v1065, 1.0
        %v1158 = vadd.f32 %v1067, 1.0
        %v1159 = vadd.f32 %v1069, 1.0
        %v1160 = vadd.f32 %v1071, 1.0
        %v1161 = vadd.f32 %v1073, 1.0
        %v1162 = vadd.f32 %v1075, 1.0
        %v1163 = vadd.f32 %v1077, 1.0
        %v1164 = vadd.f32 %v1079, 1.0
        %v1165 = vadd.f32 %v1081, 1.0
        %v1166 = vadd.f32 %v1083, 1.0
        %v1167 = vadd.f32 %v1085, 1.0
        %v1168 = vadd.f32 %v1087, 1.0
        %v1169 = vadd.f32 %v1089, 1.0
        %v1170 = vadd.f32 %v1091, 1.0
        %v1171 = vadd.f32 %v1093, 1.0
        %v1172 = vadd.f32 %v1095, 1.0
        %v1173 = vadd.f32 %v1097, 1.0
        %v1174 = vadd.f32 %v1099, 1.0
        %v1175 = vadd.f32 %v1101, 1.0
        %v1176 = vadd.f32 %v1103, 1.0
        %v1177 = vadd.f32 %v1105, 1.0
        %v1178 = vadd.f32 %v1107, 1.0
        %v1179 = vadd.f32 %v1109, 1.0
        %v1180 = vadd.f32 %v1111, 1.0
        %v1181 = vadd.f32 %v1113, 1.0
        %v1182 = vadd.f32 %v1115, 1.0
        %v1183 = vadd.f32 %v1117, 1.0
        %v1184 = vadd.f32 %v1119, 1.0
        %v1185 = vadd.f32 %v1121, 1.0
        %v1186 = vadd.f32 %v1123, 1.0
        %v1187 = vadd.f32 %v1125, 1.0
        %v1188 = vadd.f32 %v1127, 1.0
        %v1189 = vadd.f32 %v1129, 1.0
        %v1190 = vadd.f32 %v1131, 1.0
        %v1191 = vadd.f32 %v1133, 1.0
        %v1192 = vadd.f32 %v1135, 1.0
        %v1193 = vadd.f32 %v1137, 1.0
        %v1194 = vadd.f32 %v1139, 1.0
        %v1195 = vadd.f32 %v1141, 1.0
        %v1196 = vrcp.pop %v1142
        %v1197 = vmul.f32 1.0, %v1196
        %v1198 = vrcp.pop %v1143
        %v1199 = vmul.f32 1.0, %v1198
        %v1200 = vrcp.pop %v1144
        %v1201 = vmul.f32 1.0, %v1200
        %v1202 = vrcp.pop %v1145
        %v1203 = vmul.f32 1.0, %v1202
        %v1204 = vrcp.pop %v1146
        %v1205 = vmul.f32 1.0, %v1204
        %v1206 = vrcp.pop %v1147
        %v1207 = vmul.f32 1.0, %v1206
        %v1208 = vrcp.pop %v1148
        %v1209 = vmul.f32 1.0, %v1208
        %v1210 = vrcp.pop %v1149
        %v1211 = vmul.f32 1.0, %v1210
        %v1212 = vrcp.pop %v1150
        %v1213 = vmul.f32 1.0, %v1212
        %v1214 = vrcp.pop %v1151
        %v1215 = vmul.f32 1.0, %v1214
        %v1216 = vrcp.pop %v1152
        %v1217 = vmul.f32 1.0, %v1216
        %v1218 = vrcp.pop %v1153
        %v1219 = vmul.f32 1.0, %v1218
        %v1220 = vrcp.pop %v1154
        %v1221 = vmul.f32 1.0, %v1220
        %v1222 = vrcp.pop %v1155
        %v1223 = vmul.f32 1.0, %v1222
        %v1224 = vrcp.pop %v1156
        %v1225 = vmul.f32 1.0, %v1224
        %v1226 = vrcp.pop %v1157
        %v1227 = vmul.f32 1.0, %v1226
        %v1228 = vrcp.pop %v1158
        %v1229 = vmul.f32 1.0, %v1228
        %v1230 = vrcp.pop %v1159
        %v1231 = vmul.f32 1.0, %v1230
        %v1232 = vrcp.pop %v1160
        %v1233 = vmul.f32 1.0, %v1232
        %v1234 = vrcp.pop %v1161
        %v1235 = vmul.f32 1.0, %v1234
        %v1236 = vrcp.pop %v1162
        %v1237 = vmul.f32 1.0, %v1236
        %v1238 = vrcp.pop %v1163
        %v1239 = vmul.f32 1.0, %v1238
        %v1240 = vrcp.pop %v1164
        %v1241 = vmul.f32 1.0, %v1240
        %v1242 = vrcp.pop %v1165
        %v1243 = vmul.f32 1.0, %v1242
        %v1244 = vrcp.pop %v1166
        %v1245 = vmul.f32 1.0, %v1244
        %v1246 = vrcp.pop %v1167
        %v1247 = vmul.f32 1.0, %v1246
        %v1248 = vrcp.pop %v1168
        %v1249 = vmul.f32 1.0, %v1248
        %v1250 = vrcp.pop %v1169
        %v1251 = vmul.f32 1.0, %v1250
        %v1252 = vrcp.pop %v1170
        %v1253 = vmul.f32 1.0, %v1252
        %v1254 = vrcp.pop %v1171
        %v1255 = vmul.f32 1.0, %v1254
        %v1256 = vrcp.pop %v1172
        %v1257 = vmul.f32 1.0, %v1256
        %v1258 = vrcp.pop %v1173
        %v1259 = vmul.f32 1.0, %v1258
        %v1260 = vrcp.pop %v1174
        %v1261 = vmul.f32 1.0, %v1260
        %v1262 = vrcp.pop %v1175
        %v1263 = vmul.f32 1.0, %v1262
        %v1264 = vrcp.pop %v1176
        %v1265 = vmul.f32 1.0, %v1264
        %v1266 = vrcp.pop %v1177
        %v1267 = vmul.f32 1.0, %v1266
        %v1268 = vrcp.pop %v1178
        %v1269 = vmul.f32 1.0, %v1268
        %v1270 = vrcp.pop %v1179
        %v1271 = vmul.f32 1.0, %v1270
        %v1272 = vrcp.pop %v1180
        %v1273 = vmul.f32 1.0, %v1272
        %v1274 = vrcp.pop %v1181
        %v1275 = vmul.f32 1.0, %v1274
        %v1276 = vrcp.pop %v1182
        %v1277 = vmul.f32 1.0, %v1276
        %v1278 = vrcp.pop %v1183
        %v1279 = vmul.f32 1.0, %v1278
        %v1280 = vrcp.pop %v1184
        %v1281 = vmul.f32 1.0, %v1280
        %v1282 = vrcp.pop %v1185
        %v1283 = vmul.f32 1.0, %v1282
        %v1284 = vrcp.pop %v1186
        %v1285 = vmul.f32 1.0, %v1284
        %v1286 = vrcp.pop %v1187
        %v1287 = vmul.f32 1.0, %v1286
        %v1288 = vrcp.pop %v1188
        %v1289 = vmul.f32 1.0, %v1288
        %v1290 = vrcp.pop %v1189
        %v1291 = vmul.f32 1.0, %v1290
        %v1292 = vrcp.pop %v1190
        %v1293 = vmul.f32 1.0, %v1292
        %v1294 = vrcp.pop %v1191
        %v1295 = vmul.f32 1.0, %v1294
        %v1296 = vrcp.pop %v1192
        %v1297 = vmul.f32 1.0, %v1296
        %v1298 = vrcp.pop %v1193
        %v1299 = vmul.f32 1.0, %v1298
        %v1300 = vrcp.pop %v1194
        %v1301 = vmul.f32 1.0, %v1300
        %v1302 = vrcp.pop %v1195
        %v1303 = vmul.f32 1.0, %v1302
        %v1304 = vmul.f32 %v926, %v1197
        %v1305 = vmul.f32 %v927, %v1199
        %v1306 = vmul.f32 %v928, %v1201
        %v1307 = vmul.f32 %v929, %v1203
        %v1308 = vmul.f32 %v930, %v1205
        %v1309 = vmul.f32 %v931, %v1207
        %v1310 = vmul.f32 %v932, %v1209
        %v1311 = vmul.f32 %v933, %v1211
        %v1312 = vmul.f32 %v934, %v1213
        %v1313 = vmul.f32 %v935, %v1215
        %v1314 = vmul.f32 %v936, %v1217
        %v1315 = vmul.f32 %v937, %v1219
        %v1316 = vmul.f32 %v938, %v1221
        %v1317 = vmul.f32 %v939, %v1223
        %v1318 = vmul.f32 %v940, %v1225
        %v1319 = vmul.f32 %v941, %v1227
        %v1320 = vmul.f32 %v942, %v1229
        %v1321 = vmul.f32 %v943, %v1231
        %v1322 = vmul.f32 %v944, %v1233
        %v1323 = vmul.f32 %v945, %v1235
        %v1324 = vmul.f32 %v946, %v1237
        %v1325 = vmul.f32 %v947, %v1239
        %v1326 = vmul.f32 %v948, %v1241
        %v1327 = vmul.f32 %v949, %v1243
        %v1328 = vmul.f32 %v950, %v1245
        %v1329 = vmul.f32 %v951, %v1247
        %v1330 = vmul.f32 %v952, %v1249
        %v1331 = vmul.f32 %v953, %v1251
        %v1332 = vmul.f32 %v954, %v1253
        %v1333 = vmul.f32 %v955, %v1255
        %v1334 = vmul.f32 %v956, %v1257
        %v1335 = vmul.f32 %v957, %v1259
        %v1336 = vmul.f32 %v958, %v1261
        %v1337 = vmul.f32 %v959, %v1263
        %v1338 = vmul.f32 %v960, %v1265
        %v1339 = vmul.f32 %v961, %v1267
        %v1340 = vmul.f32 %v962, %v1269
        %v1341 = vmul.f32 %v963, %v1271
        %v1342 = vmul.f32 %v964, %v1273
        %v1343 = vmul.f32 %v965, %v1275
        %v1344 = vmul.f32 %v966, %v1277
        %v1345 = vmul.f32 %v967, %v1279
        %v1346 = vmul.f32 %v968, %v1281
        %v1347 = vmul.f32 %v969, %v1283
        %v1348 = vmul.f32 %v970, %v1285
        %v1349 = vmul.f32 %v971, %v1287
        %v1350 = vmul.f32 %v972, %v1289
        %v1351 = vmul.f32 %v973, %v1291
        %v1352 = vmul.f32 %v974, %v1293
        %v1353 = vmul.f32 %v975, %v1295
        %v1354 = vmul.f32 %v976, %v1297
        %v1355 = vmul.f32 %v977, %v1299
        %v1356 = vmul.f32 %v978, %v1301
        %v1357 = vmul.f32 %v979, %v1303
        %v1358 = vld [vmem:[%s1] sm:$0xff]
        %v1359 = vld [vmem:[%s1 + $0x8] sm:$0xff]
        %v1360 = vld [vmem:[%s1 + $0x10] sm:$0x3]
        %v1361 = vld [vmem:[%s1 + $0x18] sm:$0xff]
        %v1362 = vld [vmem:[%s1 + $0x20] sm:$0xff]
        %v1363 = vld [vmem:[%s1 + $0x28] sm:$0x3]
        %v1364 = vld [vmem:[%s1 + $0x30] sm:$0xff]
        %v1365 = vld [vmem:[%s1 + $0x38] sm:$0xff]
        %v1366 = vld [vmem:[%s1 + $0x40] sm:$0x3]
        %v1367 = vld [vmem:[%s1 + $0x48] sm:$0xff]
        %v1368 = vld [vmem:[%s1 + $0x50] sm:$0xff]
        %v1369 = vld [vmem:[%s1 + $0x58] sm:$0x3]
        %v1370 = vld [vmem:[%s1 + $0x60] sm:$0xff]
        %v1371 = vld [vmem:[%s1 + $0x68] sm:$0xff]
        %v1372 = vld [vmem:[%s1 + $0x70] sm:$0x3]
        %v1373 = vld [vmem:[%s1 + $0x78] sm:$0xff]
        %v1374 = vld [vmem:[%s1 + $0x80] sm:$0xff]
        %v1375 = vld [vmem:[%s1 + $0x88] sm:$0x3]
        %v1376 = vld [vmem:[%s1 + $0x90] sm:$0xff]
        %v1377 = vld [vmem:[%s1 + $0x98] sm:$0xff]
        %v1378 = vld [vmem:[%s1 + $0xa0] sm:$0x3]
        %v1379 = vld [vmem:[%s1 + $0xa8] sm:$0xff]
        %v1380 = vld [vmem:[%s1 + $0xb0] sm:$0xff]
        %v1381 = vld [vmem:[%s1 + $0xb8] sm:$0x3]
        %v1382 = vld [vmem:[%s1 + $0xc0] sm:$0xff]
        %v1383 = vld [vmem:[%s1 + $0xc8] sm:$0xff]
        %v1384 = vld [vmem:[%s1 + $0xd0] sm:$0x3]
        %v1385 = vld [vmem:[%s1 + $0xd8] sm:$0xff]
        %v1386 = vld [vmem:[%s1 + $0xe0] sm:$0xff]
        %v1387 = vld [vmem:[%s1 + $0xe8] sm:$0x3]
        %v1388 = vld [vmem:[%s1 + $0xf0] sm:$0xff]
        %v1389 = vld [vmem:[%s1 + $0xf8] sm:$0xff]
        %v1390 = vld [vmem:[%s1 + $0x100] sm:$0x3]
        %v1391 = vld [vmem:[%s1 + $0x108] sm:$0xff]
        %v1392 = vld [vmem:[%s1 + $0x110] sm:$0xff]
        %v1393 = vld [vmem:[%s1 + $0x118] sm:$0x3]
        %v1394 = vld [vmem:[%s1 + $0x120] sm:$0xff]
        %v1395 = vld [vmem:[%s1 + $0x128] sm:$0xff]
        %v1396 = vld [vmem:[%s1 + $0x130] sm:$0x3]
        %v1397 = vld [vmem:[%s1 + $0x138] sm:$0xff]
        %v1398 = vld [vmem:[%s1 + $0x140] sm:$0xff]
        %v1399 = vld [vmem:[%s1 + $0x148] sm:$0x3]
        %v1400 = vld [vmem:[%s1 + $0x150] sm:$0xff]
        %v1401 = vld [vmem:[%s1 + $0x158] sm:$0xff]
        %v1402 = vld [vmem:[%s1 + $0x160] sm:$0x3]
        %v1403 = vld [vmem:[%s1 + $0x168] sm:$0xff]
        %v1404 = vld [vmem:[%s1 + $0x170] sm:$0xff]
        %v1405 = vld [vmem:[%s1 + $0x178] sm:$0x3]
        %v1406 = vld [vmem:[%s1 + $0x180] sm:$0xff]
        %v1407 = vld [vmem:[%s1 + $0x188] sm:$0xff]
        %v1408 = vld [vmem:[%s1 + $0x190] sm:$0x3]
        %v1409 = vld [vmem:[%s1 + $0x198] sm:$0xff]
        %v1410 = vld [vmem:[%s1 + $0x1a0] sm:$0xff]
        %v1411 = vld [vmem:[%s1 + $0x1a8] sm:$0x3]
        %1413 = vset.pattern.permute.xlu0 0
        %1414 = vperm.xlu0 %1413, %v1358
        %v1415 = vpop.permute.xlu0 %1414
        %1418 = vset.pattern.permute.xlu0 0
        %1419 = vperm.xlu0 %1418, %v1359
        %v1420 = vpop.permute.xlu0 %1419
        %1423 = vset.pattern.permute.xlu0 0
        %1424 = vperm.xlu0 %1423, %v1360
        %v1425 = vpop.permute.xlu0 %1424
        %1428 = vset.pattern.permute.xlu0 0
        %1429 = vperm.xlu0 %1428, %v1361
        %v1430 = vpop.permute.xlu0 %1429
        %1433 = vset.pattern.permute.xlu0 0
        %1434 = vperm.xlu0 %1433, %v1362
        %v1435 = vpop.permute.xlu0 %1434
        %1438 = vset.pattern.permute.xlu0 0
        %1439 = vperm.xlu0 %1438, %v1363
        %v1440 = vpop.permute.xlu0 %1439
        %1443 = vset.pattern.permute.xlu0 0
        %1444 = vperm.xlu0 %1443, %v1364
        %v1445 = vpop.permute.xlu0 %1444
        %1448 = vset.pattern.permute.xlu0 0
        %1449 = vperm.xlu0 %1448, %v1365
        %v1450 = vpop.permute.xlu0 %1449
        %1453 = vset.pattern.permute.xlu0 0
        %1454 = vperm.xlu0 %1453, %v1366
        %v1455 = vpop.permute.xlu0 %1454
        %1458 = vset.pattern.permute.xlu0 0
        %1459 = vperm.xlu0 %1458, %v1367
        %v1460 = vpop.permute.xlu0 %1459
        %1463 = vset.pattern.permute.xlu0 0
        %1464 = vperm.xlu0 %1463, %v1368
        %v1465 = vpop.permute.xlu0 %1464
        %1468 = vset.pattern.permute.xlu0 0
        %1469 = vperm.xlu0 %1468, %v1369
        %v1470 = vpop.permute.xlu0 %1469
        %1473 = vset.pattern.permute.xlu0 0
        %1474 = vperm.xlu0 %1473, %v1370
        %v1475 = vpop.permute.xlu0 %1474
        %1478 = vset.pattern.permute.xlu0 0
        %1479 = vperm.xlu0 %1478, %v1371
        %v1480 = vpop.permute.xlu0 %1479
        %1483 = vset.pattern.permute.xlu0 0
        %1484 = vperm.xlu0 %1483, %v1372
        %v1485 = vpop.permute.xlu0 %1484
        %1488 = vset.pattern.permute.xlu0 0
        %1489 = vperm.xlu0 %1488, %v1373
        %v1490 = vpop.permute.xlu0 %1489
        %1493 = vset.pattern.permute.xlu0 0
        %1494 = vperm.xlu0 %1493, %v1374
        %v1495 = vpop.permute.xlu0 %1494
        %1498 = vset.pattern.permute.xlu0 0
        %1499 = vperm.xlu0 %1498, %v1375
        %v1500 = vpop.permute.xlu0 %1499
        %1503 = vset.pattern.permute.xlu0 0
        %1504 = vperm.xlu0 %1503, %v1376
        %v1505 = vpop.permute.xlu0 %1504
        %1508 = vset.pattern.permute.xlu0 0
        %1509 = vperm.xlu0 %1508, %v1377
        %v1510 = vpop.permute.xlu0 %1509
        %1513 = vset.pattern.permute.xlu0 0
        %1514 = vperm.xlu0 %1513, %v1378
        %v1515 = vpop.permute.xlu0 %1514
        %1518 = vset.pattern.permute.xlu0 0
        %1519 = vperm.xlu0 %1518, %v1379
        %v1520 = vpop.permute.xlu0 %1519
        %1523 = vset.pattern.permute.xlu0 0
        %1524 = vperm.xlu0 %1523, %v1380
        %v1525 = vpop.permute.xlu0 %1524
        %1528 = vset.pattern.permute.xlu0 0
        %1529 = vperm.xlu0 %1528, %v1381
        %v1530 = vpop.permute.xlu0 %1529
        %1533 = vset.pattern.permute.xlu0 0
        %1534 = vperm.xlu0 %1533, %v1382
        %v1535 = vpop.permute.xlu0 %1534
        %1538 = vset.pattern.permute.xlu0 0
        %1539 = vperm.xlu0 %1538, %v1383
        %v1540 = vpop.permute.xlu0 %1539
        %1543 = vset.pattern.permute.xlu0 0
        %1544 = vperm.xlu0 %1543, %v1384
        %v1545 = vpop.permute.xlu0 %1544
        %1548 = vset.pattern.permute.xlu0 0
        %1549 = vperm.xlu0 %1548, %v1385
        %v1550 = vpop.permute.xlu0 %1549
        %1553 = vset.pattern.permute.xlu0 0
        %1554 = vperm.xlu0 %1553, %v1386
        %v1555 = vpop.permute.xlu0 %1554
        %1558 = vset.pattern.permute.xlu0 0
        %1559 = vperm.xlu0 %1558, %v1387
        %v1560 = vpop.permute.xlu0 %1559
        %1563 = vset.pattern.permute.xlu0 0
        %1564 = vperm.xlu0 %1563, %v1388
        %v1565 = vpop.permute.xlu0 %1564
        %1568 = vset.pattern.permute.xlu0 0
        %1569 = vperm.xlu0 %1568, %v1389
        %v1570 = vpop.permute.xlu0 %1569
        %1573 = vset.pattern.permute.xlu0 0
        %1574 = vperm.xlu0 %1573, %v1390
        %v1575 = vpop.permute.xlu0 %1574
        %1578 = vset.pattern.permute.xlu0 0
        %1579 = vperm.xlu0 %1578, %v1391
        %v1580 = vpop.permute.xlu0 %1579
        %1583 = vset.pattern.permute.xlu0 0
        %1584 = vperm.xlu0 %1583, %v1392
        %v1585 = vpop.permute.xlu0 %1584
        %1588 = vset.pattern.permute.xlu0 0
        %1589 = vperm.xlu0 %1588, %v1393
        %v1590 = vpop.permute.xlu0 %1589
        %1593 = vset.pattern.permute.xlu0 0
        %1594 = vperm.xlu0 %1593, %v1394
        %v1595 = vpop.permute.xlu0 %1594
        %1598 = vset.pattern.permute.xlu0 0
        %1599 = vperm.xlu0 %1598, %v1395
        %v1600 = vpop.permute.xlu0 %1599
        %1603 = vset.pattern.permute.xlu0 0
        %1604 = vperm.xlu0 %1603, %v1396
        %v1605 = vpop.permute.xlu0 %1604
        %1608 = vset.pattern.permute.xlu0 0
        %1609 = vperm.xlu0 %1608, %v1397
        %v1610 = vpop.permute.xlu0 %1609
        %1613 = vset.pattern.permute.xlu0 0
        %1614 = vperm.xlu0 %1613, %v1398
        %v1615 = vpop.permute.xlu0 %1614
        %1618 = vset.pattern.permute.xlu0 0
        %1619 = vperm.xlu0 %1618, %v1399
        %v1620 = vpop.permute.xlu0 %1619
        %1623 = vset.pattern.permute.xlu0 0
        %1624 = vperm.xlu0 %1623, %v1400
        %v1625 = vpop.permute.xlu0 %1624
        %1628 = vset.pattern.permute.xlu0 0
        %1629 = vperm.xlu0 %1628, %v1401
        %v1630 = vpop.permute.xlu0 %1629
        %1633 = vset.pattern.permute.xlu0 0
        %1634 = vperm.xlu0 %1633, %v1402
        %v1635 = vpop.permute.xlu0 %1634
        %1638 = vset.pattern.permute.xlu0 0
        %1639 = vperm.xlu0 %1638, %v1403
        %v1640 = vpop.permute.xlu0 %1639
        %1643 = vset.pattern.permute.xlu0 0
        %1644 = vperm.xlu0 %1643, %v1404
        %v1645 = vpop.permute.xlu0 %1644
        %1648 = vset.pattern.permute.xlu0 0
        %1649 = vperm.xlu0 %1648, %v1405
        %v1650 = vpop.permute.xlu0 %1649
        %1653 = vset.pattern.permute.xlu0 0
        %1654 = vperm.xlu0 %1653, %v1406
        %v1655 = vpop.permute.xlu0 %1654
        %1658 = vset.pattern.permute.xlu0 0
        %1659 = vperm.xlu0 %1658, %v1407
        %v1660 = vpop.permute.xlu0 %1659
        %1663 = vset.pattern.permute.xlu0 0
        %1664 = vperm.xlu0 %1663, %v1408
        %v1665 = vpop.permute.xlu0 %1664
        %1668 = vset.pattern.permute.xlu0 0
        %1669 = vperm.xlu0 %1668, %v1409
        %v1670 = vpop.permute.xlu0 %1669
        %1673 = vset.pattern.permute.xlu0 0
        %1674 = vperm.xlu0 %1673, %v1410
        %v1675 = vpop.permute.xlu0 %1674
        %1678 = vset.pattern.permute.xlu0 0
        %1679 = vperm.xlu0 %1678, %v1411
        %v1680 = vpop.permute.xlu0 %1679
        %v1682 = vmul.f32 %v1304, %v1415
        %v1683 = vmul.f32 %v1305, %v1420
        %v1684 = vmul.f32 %v1306, %v1425
        %v1685 = vmul.f32 %v1307, %v1430
        %v1686 = vmul.f32 %v1308, %v1435
        %v1687 = vmul.f32 %v1309, %v1440
        %v1688 = vmul.f32 %v1310, %v1445
        %v1689 = vmul.f32 %v1311, %v1450
        %v1690 = vmul.f32 %v1312, %v1455
        %v1691 = vmul.f32 %v1313, %v1460
        %v1692 = vmul.f32 %v1314, %v1465
        %v1693 = vmul.f32 %v1315, %v1470
        %v1694 = vmul.f32 %v1316, %v1475
        %v1695 = vmul.f32 %v1317, %v1480
        %v1696 = vmul.f32 %v1318, %v1485
        %v1697 = vmul.f32 %v1319, %v1490
        %v1698 = vmul.f32 %v1320, %v1495
        %v1699 = vmul.f32 %v1321, %v1500
        %v1700 = vmul.f32 %v1322, %v1505
        %v1701 = vmul.f32 %v1323, %v1510
        %v1702 = vmul.f32 %v1324, %v1515
        %v1703 = vmul.f32 %v1325, %v1520
        %v1704 = vmul.f32 %v1326, %v1525
        %v1705 = vmul.f32 %v1327, %v1530
        %v1706 = vmul.f32 %v1328, %v1535
        %v1707 = vmul.f32 %v1329, %v1540
        %v1708 = vmul.f32 %v1330, %v1545
        %v1709 = vmul.f32 %v1331, %v1550
        %v1710 = vmul.f32 %v1332, %v1555
        %v1711 = vmul.f32 %v1333, %v1560
        %v1712 = vmul.f32 %v1334, %v1565
        %v1713 = vmul.f32 %v1335, %v1570
        %v1714 = vmul.f32 %v1336, %v1575
        %v1715 = vmul.f32 %v1337, %v1580
        %v1716 = vmul.f32 %v1338, %v1585
        %v1717 = vmul.f32 %v1339, %v1590
        %v1718 = vmul.f32 %v1340, %v1595
        %v1719 = vmul.f32 %v1341, %v1600
        %v1720 = vmul.f32 %v1342, %v1605
        %v1721 = vmul.f32 %v1343, %v1610
        %v1722 = vmul.f32 %v1344, %v1615
        %v1723 = vmul.f32 %v1345, %v1620
        %v1724 = vmul.f32 %v1346, %v1625
        %v1725 = vmul.f32 %v1347, %v1630
        %v1726 = vmul.f32 %v1348, %v1635
        %v1727 = vmul.f32 %v1349, %v1640
        %v1728 = vmul.f32 %v1350, %v1645
        %v1729 = vmul.f32 %v1351, %v1650
        %v1730 = vmul.f32 %v1352, %v1655
        %v1731 = vmul.f32 %v1353, %v1660
        %v1732 = vmul.f32 %v1354, %v1665
        %v1733 = vmul.f32 %v1355, %v1670
        %v1734 = vmul.f32 %v1356, %v1675
        %v1735 = vmul.f32 %v1357, %v1680
        %1736 = vst.msk [vmem:[#allocation2] sm:$0xff] %vm412, %v1682
        %1737 = vst.msk [vmem:[#allocation2 + $0x8] sm:$0xff] %vm412, %v1683
        %1738 = vst.msk [vmem:[#allocation2 + $0x10] sm:$0x3] %vm483, %v1684
        %1739 = vst.msk [vmem:[#allocation2 + $0x18] sm:$0xff] %vm412, %v1685
        %1740 = vst.msk [vmem:[#allocation2 + $0x20] sm:$0xff] %vm412, %v1686
        %1741 = vst.msk [vmem:[#allocation2 + $0x28] sm:$0x3] %vm483, %v1687
        %1742 = vst.msk [vmem:[#allocation2 + $0x30] sm:$0xff] %vm412, %v1688
        %1743 = vst.msk [vmem:[#allocation2 + $0x38] sm:$0xff] %vm412, %v1689
        %1744 = vst.msk [vmem:[#allocation2 + $0x40] sm:$0x3] %vm483, %v1690
        %1745 = vst.msk [vmem:[#allocation2 + $0x48] sm:$0xff] %vm412, %v1691
        %1746 = vst.msk [vmem:[#allocation2 + $0x50] sm:$0xff] %vm412, %v1692
        %1747 = vst.msk [vmem:[#allocation2 + $0x58] sm:$0x3] %vm483, %v1693
        %1748 = vst.msk [vmem:[#allocation2 + $0x60] sm:$0xff] %vm412, %v1694
        %1749 = vst.msk [vmem:[#allocation2 + $0x68] sm:$0xff] %vm412, %v1695
        %1750 = vst.msk [vmem:[#allocation2 + $0x70] sm:$0x3] %vm483, %v1696
        %1751 = vst.msk [vmem:[#allocation2 + $0x78] sm:$0xff] %vm412, %v1697
        %1752 = vst.msk [vmem:[#allocation2 + $0x80] sm:$0xff] %vm412, %v1698
        %1753 = vst.msk [vmem:[#allocation2 + $0x88] sm:$0x3] %vm483, %v1699
        %1754 = vst.msk [vmem:[#allocation2 + $0x90] sm:$0xff] %vm412, %v1700
        %1755 = vst.msk [vmem:[#allocation2 + $0x98] sm:$0xff] %vm412, %v1701
        %1756 = vst.msk [vmem:[#allocation2 + $0xa0] sm:$0x3] %vm483, %v1702
        %1757 = vst.msk [vmem:[#allocation2 + $0xa8] sm:$0xff] %vm412, %v1703
        %1758 = vst.msk [vmem:[#allocation2 + $0xb0] sm:$0xff] %vm412, %v1704
        %1759 = vst.msk [vmem:[#allocation2 + $0xb8] sm:$0x3] %vm483, %v1705
        %1760 = vst.msk [vmem:[#allocation2 + $0xc0] sm:$0xff] %vm412, %v1706
        %1761 = vst.msk [vmem:[#allocation2 + $0xc8] sm:$0xff] %vm412, %v1707
        %1762 = vst.msk [vmem:[#allocation2 + $0xd0] sm:$0x3] %vm483, %v1708
        %1763 = vst.msk [vmem:[#allocation2 + $0xd8] sm:$0xff] %vm412, %v1709
        %1764 = vst.msk [vmem:[#allocation2 + $0xe0] sm:$0xff] %vm412, %v1710
        %1765 = vst.msk [vmem:[#allocation2 + $0xe8] sm:$0x3] %vm483, %v1711
        %1766 = vst.msk [vmem:[#allocation2 + $0xf0] sm:$0xff] %vm412, %v1712
        %1767 = vst.msk [vmem:[#allocation2 + $0xf8] sm:$0xff] %vm412, %v1713
        %1768 = vst.msk [vmem:[#allocation2 + $0x100] sm:$0x3] %vm483, %v1714
        %1769 = vst.msk [vmem:[#allocation2 + $0x108] sm:$0xff] %vm412, %v1715
        %1770 = vst.msk [vmem:[#allocation2 + $0x110] sm:$0xff] %vm412, %v1716
        %1771 = vst.msk [vmem:[#allocation2 + $0x118] sm:$0x3] %vm483, %v1717
        %1772 = vst.msk [vmem:[#allocation2 + $0x120] sm:$0xff] %vm412, %v1718
        %1773 = vst.msk [vmem:[#allocation2 + $0x128] sm:$0xff] %vm412, %v1719
        %1774 = vst.msk [vmem:[#allocation2 + $0x130] sm:$0x3] %vm483, %v1720
        %1775 = vst.msk [vmem:[#allocation2 + $0x138] sm:$0xff] %vm412, %v1721
        %1776 = vst.msk [vmem:[#allocation2 + $0x140] sm:$0xff] %vm412, %v1722
        %1777 = vst.msk [vmem:[#allocation2 + $0x148] sm:$0x3] %vm483, %v1723
        %1778 = vst.msk [vmem:[#allocation2 + $0x150] sm:$0xff] %vm412, %v1724
        %1779 = vst.msk [vmem:[#allocation2 + $0x158] sm:$0xff] %vm412, %v1725
        %1780 = vst.msk [vmem:[#allocation2 + $0x160] sm:$0x3] %vm483, %v1726
        %1781 = vst.msk [vmem:[#allocation2 + $0x168] sm:$0xff] %vm412, %v1727
        %1782 = vst.msk [vmem:[#allocation2 + $0x170] sm:$0xff] %vm412, %v1728
        %1783 = vst.msk [vmem:[#allocation2 + $0x178] sm:$0x3] %vm483, %v1729
        %1784 = vst.msk [vmem:[#allocation2 + $0x180] sm:$0xff] %vm412, %v1730
        %1785 = vst.msk [vmem:[#allocation2 + $0x188] sm:$0xff] %vm412, %v1731
        %1786 = vst.msk [vmem:[#allocation2 + $0x190] sm:$0x3] %vm483, %v1732
        %1787 = vst.msk [vmem:[#allocation2 + $0x198] sm:$0xff] %vm412, %v1733
        %1788 = vst.msk [vmem:[#allocation2 + $0x1a0] sm:$0xff] %vm412, %v1734
        %1789 = vst.msk [vmem:[#allocation2 + $0x1a8] sm:$0x3] %vm483, %v1735
        %v1790 = vld [vmem:[#allocation2] sm:$0xff]
        %v1791 = vld [vmem:[#allocation2 + $0x8] sm:$0xff]
        %v1792 = vld [vmem:[#allocation2 + $0x18] sm:$0xff]
        %v1793 = vld [vmem:[#allocation2 + $0x20] sm:$0xff]
        %v1794 = vld [vmem:[#allocation2 + $0x30] sm:$0xff]
        %v1795 = vld [vmem:[#allocation2 + $0x38] sm:$0xff]
        %v1796 = vld [vmem:[#allocation2 + $0x48] sm:$0xff]
        %v1797 = vld [vmem:[#allocation2 + $0x50] sm:$0xff]
        %v1798 = vld [vmem:[#allocation2 + $0x60] sm:$0xff]
        %v1799 = vld [vmem:[#allocation2 + $0x68] sm:$0xff]
        %v1800 = vld [vmem:[#allocation2 + $0x78] sm:$0xff]
        %v1801 = vld [vmem:[#allocation2 + $0x80] sm:$0xff]
        %v1802 = vld [vmem:[#allocation2 + $0x90] sm:$0xff]
        %v1803 = vld [vmem:[#allocation2 + $0x98] sm:$0xff]
        %v1804 = vld [vmem:[#allocation2 + $0xa8] sm:$0xff]
        %v1805 = vld [vmem:[#allocation2 + $0xb0] sm:$0xff]
        %v1806 = vld [vmem:[#allocation2 + $0xc0] sm:$0xff]
        %v1807 = vld [vmem:[#allocation2 + $0xc8] sm:$0xff]
        %v1808 = vld [vmem:[#allocation2 + $0xd8] sm:$0xff]
        %v1809 = vld [vmem:[#allocation2 + $0xe0] sm:$0xff]
        %v1810 = vld [vmem:[#allocation2 + $0xf0] sm:$0xff]
        %v1811 = vld [vmem:[#allocation2 + $0xf8] sm:$0xff]
        %v1812 = vld [vmem:[#allocation2 + $0x108] sm:$0xff]
        %v1813 = vld [vmem:[#allocation2 + $0x110] sm:$0xff]
        %v1814 = vld [vmem:[#allocation2 + $0x120] sm:$0xff]
        %v1815 = vld [vmem:[#allocation2 + $0x128] sm:$0xff]
        %v1816 = vld [vmem:[#allocation2 + $0x138] sm:$0xff]
        %v1817 = vld [vmem:[#allocation2 + $0x140] sm:$0xff]
        %v1818 = vld [vmem:[#allocation2 + $0x150] sm:$0xff]
        %v1819 = vld [vmem:[#allocation2 + $0x158] sm:$0xff]
        %v1820 = vld [vmem:[#allocation2 + $0x168] sm:$0xff]
        %v1821 = vld [vmem:[#allocation2 + $0x170] sm:$0xff]
        %v1822 = vld [vmem:[%s5] sm:$0xff]
        %v1823 = vld [vmem:[%s5 + $0x8] sm:$0xff]
        %v1824 = vld [vmem:[#allocation2 + $0x1] sm:$0xff]
        %v1825 = vld [vmem:[#allocation2 + $0x9] sm:$0xff]
        %v1826 = vld [vmem:[#allocation2 + $0x19] sm:$0xff]
        %v1827 = vld [vmem:[#allocation2 + $0x21] sm:$0xff]
        %v1828 = vld [vmem:[#allocation2 + $0x31] sm:$0xff]
        %v1829 = vld [vmem:[#allocation2 + $0x39] sm:$0xff]
        %v1830 = vld [vmem:[#allocation2 + $0x49] sm:$0xff]
        %v1831 = vld [vmem:[#allocation2 + $0x51] sm:$0xff]
        %v1832 = vld [vmem:[#allocation2 + $0x61] sm:$0xff]
        %v1833 = vld [vmem:[#allocation2 + $0x69] sm:$0xff]
        %v1834 = vld [vmem:[#allocation2 + $0x79] sm:$0xff]
        %v1835 = vld [vmem:[#allocation2 + $0x81] sm:$0xff]
        %v1836 = vld [vmem:[#allocation2 + $0x91] sm:$0xff]
        %v1837 = vld [vmem:[#allocation2 + $0x99] sm:$0xff]
        %v1838 = vld [vmem:[#allocation2 + $0xa9] sm:$0xff]
        %v1839 = vld [vmem:[#allocation2 + $0xb1] sm:$0xff]
        %v1840 = vld [vmem:[#allocation2 + $0xc1] sm:$0xff]
        %v1841 = vld [vmem:[#allocation2 + $0xc9] sm:$0xff]
        %v1842 = vld [vmem:[#allocation2 + $0xd9] sm:$0xff]
        %v1843 = vld [vmem:[#allocation2 + $0xe1] sm:$0xff]
        %v1844 = vld [vmem:[#allocation2 + $0xf1] sm:$0xff]
        %v1845 = vld [vmem:[#allocation2 + $0xf9] sm:$0xff]
        %v1846 = vld [vmem:[#allocation2 + $0x109] sm:$0xff]
        %v1847 = vld [vmem:[#allocation2 + $0x111] sm:$0xff]
        %v1848 = vld [vmem:[#allocation2 + $0x121] sm:$0xff]
        %v1849 = vld [vmem:[#allocation2 + $0x129] sm:$0xff]
        %v1850 = vld [vmem:[#allocation2 + $0x139] sm:$0xff]
        %v1851 = vld [vmem:[#allocation2 + $0x141] sm:$0xff]
        %v1852 = vld [vmem:[#allocation2 + $0x151] sm:$0xff]
        %v1853 = vld [vmem:[#allocation2 + $0x159] sm:$0xff]
        %v1854 = vld [vmem:[#allocation2 + $0x169] sm:$0xff]
        %v1855 = vld [vmem:[#allocation2 + $0x171] sm:$0xff]
        %s1856 = scalar_lea.vmem %s5, 16
        %v1857 = vld [vmem:[%s1856] sm:$0xff]
        %v1858 = vld [vmem:[%s1856 + $0x8] sm:$0xff]
        %v1860 = vsel %vm412, %v1824, 0
        %v1863 = vsel %vm412, %v1825, 0
        %v1866 = vsel %vm412, %v1826, 0
        %v1869 = vsel %vm412, %v1827, 0
        %v1872 = vsel %vm412, %v1828, 0
        %v1875 = vsel %vm412, %v1829, 0
        %v1878 = vsel %vm412, %v1830, 0
        %v1881 = vsel %vm412, %v1831, 0
        %v1884 = vsel %vm412, %v1832, 0
        %v1887 = vsel %vm412, %v1833, 0
        %v1890 = vsel %vm412, %v1834, 0
        %v1893 = vsel %vm412, %v1835, 0
        %v1896 = vsel %vm412, %v1836, 0
        %v1899 = vsel %vm412, %v1837, 0
        %v1902 = vsel %vm412, %v1838, 0
        %v1905 = vsel %vm412, %v1839, 0
        %v1908 = vsel %vm412, %v1840, 0
        %v1911 = vsel %vm412, %v1841, 0
        %v1914 = vsel %vm412, %v1842, 0
        %v1917 = vsel %vm412, %v1843, 0
        %v1920 = vsel %vm412, %v1844, 0
        %v1923 = vsel %vm412, %v1845, 0
        %v1926 = vsel %vm412, %v1846, 0
        %v1929 = vsel %vm412, %v1847, 0
        %v1932 = vsel %vm412, %v1848, 0
        %v1935 = vsel %vm412, %v1849, 0
        %v1938 = vsel %vm412, %v1850, 0
        %v1941 = vsel %vm412, %v1851, 0
        %v1944 = vsel %vm412, %v1852, 0
        %v1947 = vsel %vm412, %v1853, 0
        %v1950 = vsel %vm412, %v1854, 0
        %v1953 = vsel %vm412, %v1855, 0
        %1955 = vmatprep.subr.mxu0 0.0
        %1956 = vmatpush1.msra.mxu0 0.0
        %1957 = vmatprep.subr.mxu0 0.0
        %1958 = vmatpush1.msra.mxu0 0.0
        %1959 = vmatprep.subr.mxu0 0.0
        %1960 = vmatpush1.msra.mxu0 0.0
        %1961 = vmatprep.subr.mxu0 0.0
        %1962 = vmatpush1.msra.mxu0 0.0
        %1963 = vmatprep.subr.mxu0 0.0
        %1964 = vmatpush1.msra.mxu0 0.0
        %1965 = vmatprep.subr.mxu0 0.0
        %1966 = vmatpush1.msra.mxu0 0.0
        %1967 = vmatprep.subr.mxu0 0.0
        %1968 = vmatpush1.msra.mxu0 0.0
        %1969 = vmatprep.subr.mxu0 0.0
        %1970 = vmatpush1.msra.mxu0 0.0
        %1971 = vmatprep.subr.mxu0 0.0
        %1972 = vmatpush1.msra.mxu0 0.0
        %1973 = vmatprep.subr.mxu0 0.0
        %1974 = vmatpush1.msra.mxu0 0.0
        %1975 = vmatprep.subr.mxu0 0.0
        %1976 = vmatpush1.msra.mxu0 0.0
        %1977 = vmatprep.subr.mxu0 0.0
        %1978 = vmatpush1.msra.mxu0 0.0
        %1979 = vmatprep.subr.mxu0 0.0
        %1980 = vmatpush1.msra.mxu0 0.0
        %1981 = vmatprep.subr.mxu0 0.0
        %1982 = vmatpush1.msra.mxu0 0.0
        %1983 = vmatprep.subr.mxu0 0.0
        %1984 = vmatpush1.msra.mxu0 %v1858
        %1985 = vmatprep.subr.mxu0 0.0
        %1986 = vmatpush1.msra.mxu0 %v1857
        %1987 = vmatprep.subr.mxu0 0.0
        %1988 = vmatpush2.msra.mxu0 0.0
        %1989 = vmatprep.subr.mxu0 0.0
        %1990 = vmatpush2.msra.mxu0 0.0
        %1991 = vmatprep.subr.mxu0 0.0
        %1992 = vmatpush2.msra.mxu0 0.0
        %1993 = vmatprep.subr.mxu0 0.0
        %1994 = vmatpush2.msra.mxu0 0.0
        %1995 = vmatprep.subr.mxu0 0.0
        %1996 = vmatpush2.msra.mxu0 0.0
        %1997 = vmatprep.subr.mxu0 0.0
        %1998 = vmatpush2.msra.mxu0 0.0
        %1999 = vmatprep.subr.mxu0 0.0
        %2000 = vmatpush2.msra.mxu0 0.0
        %2001 = vmatprep.subr.mxu0 0.0
        %2002 = vmatpush2.msra.mxu0 0.0
        %2003 = vmatprep.subr.mxu0 0.0
        %2004 = vmatpush2.msra.mxu0 0.0
        %2005 = vmatprep.subr.mxu0 0.0
        %2006 = vmatpush2.msra.mxu0 0.0
        %2007 = vmatprep.subr.mxu0 0.0
        %2008 = vmatpush2.msra.mxu0 0.0
        %2009 = vmatprep.subr.mxu0 0.0
        %2010 = vmatpush2.msra.mxu0 0.0
        %2011 = vmatprep.subr.mxu0 0.0
        %2012 = vmatpush2.msra.mxu0 0.0
        %2013 = vmatprep.subr.mxu0 0.0
        %2014 = vmatpush2.msra.mxu0 0.0
        %2015 = vmatprep.subr.mxu0 0.0
        %2016 = vmatpush2.msra.mxu0 0.0
        %2017 = vmatprep.subr.mxu0 0.0
        %2018 = vmatpush2.msra.mxu0 0.0
        %2019 = vmatprep.mubr.f32.mxu0 0.0
        %2020 = vmatmul.mubr.f32.gmra.mxu0 %v1860
        %v2021 = vpop.f32.mrf.mxu0
        %v2022 = vadd.f32 0.0, %v2021
        %v2023 = vpop.f32.mrf.mxu0
        %2024 = vmatprep.mubr.f32.mxu0 0.0
        %2025 = vmatmul.mubr.f32.gmra.mxu0 %v1863
        %v2026 = vpop.f32.mrf.mxu0
        %v2027 = vadd.f32 0.0, %v2026
        %v2028 = vpop.f32.mrf.mxu0
        %2029 = vmatprep.mubr.f32.mxu0 0.0
        %2030 = vmatmul.mubr.f32.gmra.mxu0 %v1866
        %v2031 = vpop.f32.mrf.mxu0
        %v2032 = vadd.f32 0.0, %v2031
        %v2033 = vpop.f32.mrf.mxu0
        %2034 = vmatprep.mubr.f32.mxu0 0.0
        %2035 = vmatmul.mubr.f32.gmra.mxu0 %v1869
        %v2036 = vpop.f32.mrf.mxu0
        %v2037 = vadd.f32 0.0, %v2036
        %v2038 = vpop.f32.mrf.mxu0
        %2039 = vmatprep.mubr.f32.mxu0 0.0
        %2040 = vmatmul.mubr.f32.gmra.mxu0 %v1872
        %v2041 = vpop.f32.mrf.mxu0
        %v2042 = vadd.f32 0.0, %v2041
        %v2043 = vpop.f32.mrf.mxu0
        %2044 = vmatprep.mubr.f32.mxu0 0.0
        %2045 = vmatmul.mubr.f32.gmra.mxu0 %v1875
        %v2046 = vpop.f32.mrf.mxu0
        %v2047 = vadd.f32 0.0, %v2046
        %v2048 = vpop.f32.mrf.mxu0
        %2049 = vmatprep.mubr.f32.mxu0 0.0
        %2050 = vmatmul.mubr.f32.gmra.mxu0 %v1878
        %v2051 = vpop.f32.mrf.mxu0
        %v2052 = vadd.f32 0.0, %v2051
        %v2053 = vpop.f32.mrf.mxu0
        %2054 = vmatprep.mubr.f32.mxu0 0.0
        %2055 = vmatmul.mubr.f32.gmra.mxu0 %v1881
        %v2056 = vpop.f32.mrf.mxu0
        %v2057 = vadd.f32 0.0, %v2056
        %v2058 = vpop.f32.mrf.mxu0
        %2059 = vmatprep.mubr.f32.mxu0 0.0
        %2060 = vmatmul.mubr.f32.gmra.mxu0 %v1884
        %v2061 = vpop.f32.mrf.mxu0
        %v2062 = vadd.f32 0.0, %v2061
        %v2063 = vpop.f32.mrf.mxu0
        %2064 = vmatprep.mubr.f32.mxu0 0.0
        %2065 = vmatmul.mubr.f32.gmra.mxu0 %v1887
        %v2066 = vpop.f32.mrf.mxu0
        %v2067 = vadd.f32 0.0, %v2066
        %v2068 = vpop.f32.mrf.mxu0
        %2069 = vmatprep.mubr.f32.mxu0 0.0
        %2070 = vmatmul.mubr.f32.gmra.mxu0 %v1890
        %v2071 = vpop.f32.mrf.mxu0
        %v2072 = vadd.f32 0.0, %v2071
        %v2073 = vpop.f32.mrf.mxu0
        %2074 = vmatprep.mubr.f32.mxu0 0.0
        %2075 = vmatmul.mubr.f32.gmra.mxu0 %v1893
        %v2076 = vpop.f32.mrf.mxu0
        %v2077 = vadd.f32 0.0, %v2076
        %v2078 = vpop.f32.mrf.mxu0
        %2079 = vmatprep.mubr.f32.mxu0 0.0
        %2080 = vmatmul.mubr.f32.gmra.mxu0 %v1896
        %v2081 = vpop.f32.mrf.mxu0
        %v2082 = vadd.f32 0.0, %v2081
        %v2083 = vpop.f32.mrf.mxu0
        %2084 = vmatprep.mubr.f32.mxu0 0.0
        %2085 = vmatmul.mubr.f32.gmra.mxu0 %v1899
        %v2086 = vpop.f32.mrf.mxu0
        %v2087 = vadd.f32 0.0, %v2086
        %v2088 = vpop.f32.mrf.mxu0
        %2089 = vmatprep.mubr.f32.mxu0 0.0
        %2090 = vmatmul.mubr.f32.gmra.mxu0 %v1902
        %v2091 = vpop.f32.mrf.mxu0
        %v2092 = vadd.f32 0.0, %v2091
        %v2093 = vpop.f32.mrf.mxu0
        %2094 = vmatprep.mubr.f32.mxu0 0.0
        %2095 = vmatmul.mubr.f32.gmra.mxu0 %v1905
        %v2096 = vpop.f32.mrf.mxu0
        %v2097 = vadd.f32 0.0, %v2096
        %v2098 = vpop.f32.mrf.mxu0
        %2099 = vmatprep.mubr.f32.mxu0 0.0
        %2100 = vmatmul.mubr.f32.gmra.mxu0 %v1908
        %v2101 = vpop.f32.mrf.mxu0
        %v2102 = vadd.f32 0.0, %v2101
        %v2103 = vpop.f32.mrf.mxu0
        %2104 = vmatprep.mubr.f32.mxu0 0.0
        %2105 = vmatmul.mubr.f32.gmra.mxu0 %v1911
        %v2106 = vpop.f32.mrf.mxu0
        %v2107 = vadd.f32 0.0, %v2106
        %v2108 = vpop.f32.mrf.mxu0
        %2109 = vmatprep.mubr.f32.mxu0 0.0
        %2110 = vmatmul.mubr.f32.gmra.mxu0 %v1914
        %v2111 = vpop.f32.mrf.mxu0
        %v2112 = vadd.f32 0.0, %v2111
        %v2113 = vpop.f32.mrf.mxu0
        %2114 = vmatprep.mubr.f32.mxu0 0.0
        %2115 = vmatmul.mubr.f32.gmra.mxu0 %v1917
        %v2116 = vpop.f32.mrf.mxu0
        %v2117 = vadd.f32 0.0, %v2116
        %v2118 = vpop.f32.mrf.mxu0
        %2119 = vmatprep.mubr.f32.mxu0 0.0
        %2120 = vmatmul.mubr.f32.gmra.mxu0 %v1920
        %v2121 = vpop.f32.mrf.mxu0
        %v2122 = vadd.f32 0.0, %v2121
        %v2123 = vpop.f32.mrf.mxu0
        %2124 = vmatprep.mubr.f32.mxu0 0.0
        %2125 = vmatmul.mubr.f32.gmra.mxu0 %v1923
        %v2126 = vpop.f32.mrf.mxu0
        %v2127 = vadd.f32 0.0, %v2126
        %v2128 = vpop.f32.mrf.mxu0
        %2129 = vmatprep.mubr.f32.mxu0 0.0
        %2130 = vmatmul.mubr.f32.gmra.mxu0 %v1926
        %v2131 = vpop.f32.mrf.mxu0
        %v2132 = vadd.f32 0.0, %v2131
        %v2133 = vpop.f32.mrf.mxu0
        %2134 = vmatprep.mubr.f32.mxu0 0.0
        %2135 = vmatmul.mubr.f32.gmra.mxu0 %v1929
        %v2136 = vpop.f32.mrf.mxu0
        %v2137 = vadd.f32 0.0, %v2136
        %v2138 = vpop.f32.mrf.mxu0
        %2139 = vmatprep.mubr.f32.mxu0 0.0
        %2140 = vmatmul.mubr.f32.gmra.mxu0 %v1932
        %v2141 = vpop.f32.mrf.mxu0
        %v2142 = vadd.f32 0.0, %v2141
        %v2143 = vpop.f32.mrf.mxu0
        %2144 = vmatprep.mubr.f32.mxu0 0.0
        %2145 = vmatmul.mubr.f32.gmra.mxu0 %v1935
        %v2146 = vpop.f32.mrf.mxu0
        %v2147 = vadd.f32 0.0, %v2146
        %v2148 = vpop.f32.mrf.mxu0
        %2149 = vmatprep.mubr.f32.mxu0 0.0
        %2150 = vmatmul.mubr.f32.gmra.mxu0 %v1938
        %v2151 = vpop.f32.mrf.mxu0
        %v2152 = vadd.f32 0.0, %v2151
        %v2153 = vpop.f32.mrf.mxu0
        %2154 = vmatprep.mubr.f32.mxu0 0.0
        %2155 = vmatmul.mubr.f32.gmra.mxu0 %v1941
        %v2156 = vpop.f32.mrf.mxu0
        %v2157 = vadd.f32 0.0, %v2156
        %v2158 = vpop.f32.mrf.mxu0
        %2159 = vmatprep.mubr.f32.mxu0 0.0
        %2160 = vmatmul.mubr.f32.gmra.mxu0 %v1944
        %v2161 = vpop.f32.mrf.mxu0
        %v2162 = vadd.f32 0.0, %v2161
        %v2163 = vpop.f32.mrf.mxu0
        %2164 = vmatprep.mubr.f32.mxu0 0.0
        %2165 = vmatmul.mubr.f32.gmra.mxu0 %v1947
        %v2166 = vpop.f32.mrf.mxu0
        %v2167 = vadd.f32 0.0, %v2166
        %v2168 = vpop.f32.mrf.mxu0
        %2169 = vmatprep.mubr.f32.mxu0 0.0
        %2170 = vmatmul.mubr.f32.gmra.mxu0 %v1950
        %v2171 = vpop.f32.mrf.mxu0
        %v2172 = vadd.f32 0.0, %v2171
        %v2173 = vpop.f32.mrf.mxu0
        %2174 = vmatprep.mubr.f32.mxu0 0.0
        %2175 = vmatmul.mubr.f32.gmra.mxu0 %v1953
        %v2176 = vpop.f32.mrf.mxu0
        %v2177 = vadd.f32 0.0, %v2176
        %v2178 = vpop.f32.mrf.mxu0
        %2179 = vdwg.mxu0
        %v2181 = vsel %vm412, %v1790, 0
        %v2184 = vsel %vm412, %v1791, 0
        %v2187 = vsel %vm412, %v1792, 0
        %v2190 = vsel %vm412, %v1793, 0
        %v2193 = vsel %vm412, %v1794, 0
        %v2196 = vsel %vm412, %v1795, 0
        %v2199 = vsel %vm412, %v1796, 0
        %v2202 = vsel %vm412, %v1797, 0
        %v2205 = vsel %vm412, %v1798, 0
        %v2208 = vsel %vm412, %v1799, 0
        %v2211 = vsel %vm412, %v1800, 0
        %v2214 = vsel %vm412, %v1801, 0
        %v2217 = vsel %vm412, %v1802, 0
        %v2220 = vsel %vm412, %v1803, 0
        %v2223 = vsel %vm412, %v1804, 0
        %v2226 = vsel %vm412, %v1805, 0
        %v2229 = vsel %vm412, %v1806, 0
        %v2232 = vsel %vm412, %v1807, 0
        %v2235 = vsel %vm412, %v1808, 0
        %v2238 = vsel %vm412, %v1809, 0
        %v2241 = vsel %vm412, %v1810, 0
        %v2244 = vsel %vm412, %v1811, 0
        %v2247 = vsel %vm412, %v1812, 0
        %v2250 = vsel %vm412, %v1813, 0
        %v2253 = vsel %vm412, %v1814, 0
        %v2256 = vsel %vm412, %v1815, 0
        %v2259 = vsel %vm412, %v1816, 0
        %v2262 = vsel %vm412, %v1817, 0
        %v2265 = vsel %vm412, %v1818, 0
        %v2268 = vsel %vm412, %v1819, 0
        %v2271 = vsel %vm412, %v1820, 0
        %v2274 = vsel %vm412, %v1821, 0
        %2276 = vmatprep.subr.mxu0 0.0
        %2277 = vmatpush1.msra.mxu0 0.0
        %2278 = vmatprep.subr.mxu0 0.0
        %2279 = vmatpush1.msra.mxu0 0.0
        %2280 = vmatprep.subr.mxu0 0.0
        %2281 = vmatpush1.msra.mxu0 0.0
        %2282 = vmatprep.subr.mxu0 0.0
        %2283 = vmatpush1.msra.mxu0 0.0
        %2284 = vmatprep.subr.mxu0 0.0
        %2285 = vmatpush1.msra.mxu0 0.0
        %2286 = vmatprep.subr.mxu0 0.0
        %2287 = vmatpush1.msra.mxu0 0.0
        %2288 = vmatprep.subr.mxu0 0.0
        %2289 = vmatpush1.msra.mxu0 0.0
        %2290 = vmatprep.subr.mxu0 0.0
        %2291 = vmatpush1.msra.mxu0 0.0
        %2292 = vmatprep.subr.mxu0 0.0
        %2293 = vmatpush1.msra.mxu0 0.0
        %2294 = vmatprep.subr.mxu0 0.0
        %2295 = vmatpush1.msra.mxu0 0.0
        %2296 = vmatprep.subr.mxu0 0.0
        %2297 = vmatpush1.msra.mxu0 0.0
        %2298 = vmatprep.subr.mxu0 0.0
        %2299 = vmatpush1.msra.mxu0 0.0
        %2300 = vmatprep.subr.mxu0 0.0
        %2301 = vmatpush1.msra.mxu0 0.0
        %2302 = vmatprep.subr.mxu0 0.0
        %2303 = vmatpush1.msra.mxu0 0.0
        %2304 = vmatprep.subr.mxu0 0.0
        %2305 = vmatpush1.msra.mxu0 %v1823
        %2306 = vmatprep.subr.mxu0 0.0
        %2307 = vmatpush1.msra.mxu0 %v1822
        %2308 = vmatprep.subr.mxu0 0.0
        %2309 = vmatpush2.msra.mxu0 0.0
        %2310 = vmatprep.subr.mxu0 0.0
        %2311 = vmatpush2.msra.mxu0 0.0
        %2312 = vmatprep.subr.mxu0 0.0
        %2313 = vmatpush2.msra.mxu0 0.0
        %2314 = vmatprep.subr.mxu0 0.0
        %2315 = vmatpush2.msra.mxu0 0.0
        %2316 = vmatprep.subr.mxu0 0.0
        %2317 = vmatpush2.msra.mxu0 0.0
        %2318 = vmatprep.subr.mxu0 0.0
        %2319 = vmatpush2.msra.mxu0 0.0
        %2320 = vmatprep.subr.mxu0 0.0
        %2321 = vmatpush2.msra.mxu0 0.0
        %2322 = vmatprep.subr.mxu0 0.0
        %2323 = vmatpush2.msra.mxu0 0.0
        %2324 = vmatprep.subr.mxu0 0.0
        %2325 = vmatpush2.msra.mxu0 0.0
        %2326 = vmatprep.subr.mxu0 0.0
        %2327 = vmatpush2.msra.mxu0 0.0
        %2328 = vmatprep.subr.mxu0 0.0
        %2329 = vmatpush2.msra.mxu0 0.0
        %2330 = vmatprep.subr.mxu0 0.0
        %2331 = vmatpush2.msra.mxu0 0.0
        %2332 = vmatprep.subr.mxu0 0.0
        %2333 = vmatpush2.msra.mxu0 0.0
        %2334 = vmatprep.subr.mxu0 0.0
        %2335 = vmatpush2.msra.mxu0 0.0
        %2336 = vmatprep.subr.mxu0 0.0
        %2337 = vmatpush2.msra.mxu0 0.0
        %2338 = vmatprep.subr.mxu0 0.0
        %2339 = vmatpush2.msra.mxu0 0.0
        %2340 = vmatprep.mubr.f32.mxu0 0.0
        %2341 = vmatmul.mubr.f32.gmra.mxu0 %v2181
        %v2342 = vpop.f32.mrf.mxu0
        %v2343 = vadd.f32 %v2022, %v2342
        %v2344 = vpop.f32.mrf.mxu0
        %2345 = vmatprep.mubr.f32.mxu0 0.0
        %2346 = vmatmul.mubr.f32.gmra.mxu0 %v2184
        %v2347 = vpop.f32.mrf.mxu0
        %v2348 = vadd.f32 %v2027, %v2347
        %v2349 = vpop.f32.mrf.mxu0
        %2350 = vmatprep.mubr.f32.mxu0 0.0
        %2351 = vmatmul.mubr.f32.gmra.mxu0 %v2187
        %v2352 = vpop.f32.mrf.mxu0
        %v2353 = vadd.f32 %v2032, %v2352
        %v2354 = vpop.f32.mrf.mxu0
        %2355 = vmatprep.mubr.f32.mxu0 0.0
        %2356 = vmatmul.mubr.f32.gmra.mxu0 %v2190
        %v2357 = vpop.f32.mrf.mxu0
        %v2358 = vadd.f32 %v2037, %v2357
        %v2359 = vpop.f32.mrf.mxu0
        %2360 = vmatprep.mubr.f32.mxu0 0.0
        %2361 = vmatmul.mubr.f32.gmra.mxu0 %v2193
        %v2362 = vpop.f32.mrf.mxu0
        %v2363 = vadd.f32 %v2042, %v2362
        %v2364 = vpop.f32.mrf.mxu0
        %2365 = vmatprep.mubr.f32.mxu0 0.0
        %2366 = vmatmul.mubr.f32.gmra.mxu0 %v2196
        %v2367 = vpop.f32.mrf.mxu0
        %v2368 = vadd.f32 %v2047, %v2367
        %v2369 = vpop.f32.mrf.mxu0
        %2370 = vmatprep.mubr.f32.mxu0 0.0
        %2371 = vmatmul.mubr.f32.gmra.mxu0 %v2199
        %v2372 = vpop.f32.mrf.mxu0
        %v2373 = vadd.f32 %v2052, %v2372
        %v2374 = vpop.f32.mrf.mxu0
        %2375 = vmatprep.mubr.f32.mxu0 0.0
        %2376 = vmatmul.mubr.f32.gmra.mxu0 %v2202
        %v2377 = vpop.f32.mrf.mxu0
        %v2378 = vadd.f32 %v2057, %v2377
        %v2379 = vpop.f32.mrf.mxu0
        %2380 = vmatprep.mubr.f32.mxu0 0.0
        %2381 = vmatmul.mubr.f32.gmra.mxu0 %v2205
        %v2382 = vpop.f32.mrf.mxu0
        %v2383 = vadd.f32 %v2062, %v2382
        %v2384 = vpop.f32.mrf.mxu0
        %2385 = vmatprep.mubr.f32.mxu0 0.0
        %2386 = vmatmul.mubr.f32.gmra.mxu0 %v2208
        %v2387 = vpop.f32.mrf.mxu0
        %v2388 = vadd.f32 %v2067, %v2387
        %v2389 = vpop.f32.mrf.mxu0
        %2390 = vmatprep.mubr.f32.mxu0 0.0
        %2391 = vmatmul.mubr.f32.gmra.mxu0 %v2211
        %v2392 = vpop.f32.mrf.mxu0
        %v2393 = vadd.f32 %v2072, %v2392
        %v2394 = vpop.f32.mrf.mxu0
        %2395 = vmatprep.mubr.f32.mxu0 0.0
        %2396 = vmatmul.mubr.f32.gmra.mxu0 %v2214
        %v2397 = vpop.f32.mrf.mxu0
        %v2398 = vadd.f32 %v2077, %v2397
        %v2399 = vpop.f32.mrf.mxu0
        %2400 = vmatprep.mubr.f32.mxu0 0.0
        %2401 = vmatmul.mubr.f32.gmra.mxu0 %v2217
        %v2402 = vpop.f32.mrf.mxu0
        %v2403 = vadd.f32 %v2082, %v2402
        %v2404 = vpop.f32.mrf.mxu0
        %2405 = vmatprep.mubr.f32.mxu0 0.0
        %2406 = vmatmul.mubr.f32.gmra.mxu0 %v2220
        %v2407 = vpop.f32.mrf.mxu0
        %v2408 = vadd.f32 %v2087, %v2407
        %v2409 = vpop.f32.mrf.mxu0
        %2410 = vmatprep.mubr.f32.mxu0 0.0
        %2411 = vmatmul.mubr.f32.gmra.mxu0 %v2223
        %v2412 = vpop.f32.mrf.mxu0
        %v2413 = vadd.f32 %v2092, %v2412
        %v2414 = vpop.f32.mrf.mxu0
        %2415 = vmatprep.mubr.f32.mxu0 0.0
        %2416 = vmatmul.mubr.f32.gmra.mxu0 %v2226
        %v2417 = vpop.f32.mrf.mxu0
        %v2418 = vadd.f32 %v2097, %v2417
        %v2419 = vpop.f32.mrf.mxu0
        %2420 = vmatprep.mubr.f32.mxu0 0.0
        %2421 = vmatmul.mubr.f32.gmra.mxu0 %v2229
        %v2422 = vpop.f32.mrf.mxu0
        %v2423 = vadd.f32 %v2102, %v2422
        %v2424 = vpop.f32.mrf.mxu0
        %2425 = vmatprep.mubr.f32.mxu0 0.0
        %2426 = vmatmul.mubr.f32.gmra.mxu0 %v2232
        %v2427 = vpop.f32.mrf.mxu0
        %v2428 = vadd.f32 %v2107, %v2427
        %v2429 = vpop.f32.mrf.mxu0
        %2430 = vmatprep.mubr.f32.mxu0 0.0
        %2431 = vmatmul.mubr.f32.gmra.mxu0 %v2235
        %v2432 = vpop.f32.mrf.mxu0
        %v2433 = vadd.f32 %v2112, %v2432
        %v2434 = vpop.f32.mrf.mxu0
        %2435 = vmatprep.mubr.f32.mxu0 0.0
        %2436 = vmatmul.mubr.f32.gmra.mxu0 %v2238
        %v2437 = vpop.f32.mrf.mxu0
        %v2438 = vadd.f32 %v2117, %v2437
        %v2439 = vpop.f32.mrf.mxu0
        %2440 = vmatprep.mubr.f32.mxu0 0.0
        %2441 = vmatmul.mubr.f32.gmra.mxu0 %v2241
        %v2442 = vpop.f32.mrf.mxu0
        %v2443 = vadd.f32 %v2122, %v2442
        %v2444 = vpop.f32.mrf.mxu0
        %2445 = vmatprep.mubr.f32.mxu0 0.0
        %2446 = vmatmul.mubr.f32.gmra.mxu0 %v2244
        %v2447 = vpop.f32.mrf.mxu0
        %v2448 = vadd.f32 %v2127, %v2447
        %v2449 = vpop.f32.mrf.mxu0
        %2450 = vmatprep.mubr.f32.mxu0 0.0
        %2451 = vmatmul.mubr.f32.gmra.mxu0 %v2247
        %v2452 = vpop.f32.mrf.mxu0
        %v2453 = vadd.f32 %v2132, %v2452
        %v2454 = vpop.f32.mrf.mxu0
        %2455 = vmatprep.mubr.f32.mxu0 0.0
        %2456 = vmatmul.mubr.f32.gmra.mxu0 %v2250
        %v2457 = vpop.f32.mrf.mxu0
        %v2458 = vadd.f32 %v2137, %v2457
        %v2459 = vpop.f32.mrf.mxu0
        %2460 = vmatprep.mubr.f32.mxu0 0.0
        %2461 = vmatmul.mubr.f32.gmra.mxu0 %v2253
        %v2462 = vpop.f32.mrf.mxu0
        %v2463 = vadd.f32 %v2142, %v2462
        %v2464 = vpop.f32.mrf.mxu0
        %2465 = vmatprep.mubr.f32.mxu0 0.0
        %2466 = vmatmul.mubr.f32.gmra.mxu0 %v2256
        %v2467 = vpop.f32.mrf.mxu0
        %v2468 = vadd.f32 %v2147, %v2467
        %v2469 = vpop.f32.mrf.mxu0
        %2470 = vmatprep.mubr.f32.mxu0 0.0
        %2471 = vmatmul.mubr.f32.gmra.mxu0 %v2259
        %v2472 = vpop.f32.mrf.mxu0
        %v2473 = vadd.f32 %v2152, %v2472
        %v2474 = vpop.f32.mrf.mxu0
        %2475 = vmatprep.mubr.f32.mxu0 0.0
        %2476 = vmatmul.mubr.f32.gmra.mxu0 %v2262
        %v2477 = vpop.f32.mrf.mxu0
        %v2478 = vadd.f32 %v2157, %v2477
        %v2479 = vpop.f32.mrf.mxu0
        %2480 = vmatprep.mubr.f32.mxu0 0.0
        %2481 = vmatmul.mubr.f32.gmra.mxu0 %v2265
        %v2482 = vpop.f32.mrf.mxu0
        %v2483 = vadd.f32 %v2162, %v2482
        %v2484 = vpop.f32.mrf.mxu0
        %2485 = vmatprep.mubr.f32.mxu0 0.0
        %2486 = vmatmul.mubr.f32.gmra.mxu0 %v2268
        %v2487 = vpop.f32.mrf.mxu0
        %v2488 = vadd.f32 %v2167, %v2487
        %v2489 = vpop.f32.mrf.mxu0
        %2490 = vmatprep.mubr.f32.mxu0 0.0
        %2491 = vmatmul.mubr.f32.gmra.mxu0 %v2271
        %v2492 = vpop.f32.mrf.mxu0
        %v2493 = vadd.f32 %v2172, %v2492
        %v2494 = vpop.f32.mrf.mxu0
        %2495 = vmatprep.mubr.f32.mxu0 0.0
        %2496 = vmatmul.mubr.f32.gmra.mxu0 %v2274
        %v2497 = vpop.f32.mrf.mxu0
        %v2498 = vadd.f32 %v2177, %v2497
        %v2499 = vpop.f32.mrf.mxu0
        %2500 = vdwg.mxu0
        %v2501 = vld [vmem:[#allocation2 + $0x2] sm:$0xff]
        %v2502 = vld [vmem:[#allocation2 + $0xa] sm:$0xff]
        %v2503 = vld [vmem:[#allocation2 + $0x1a] sm:$0xff]
        %v2504 = vld [vmem:[#allocation2 + $0x22] sm:$0xff]
        %v2505 = vld [vmem:[#allocation2 + $0x32] sm:$0xff]
        %v2506 = vld [vmem:[#allocation2 + $0x3a] sm:$0xff]
        %v2507 = vld [vmem:[#allocation2 + $0x4a] sm:$0xff]
        %v2508 = vld [vmem:[#allocation2 + $0x52] sm:$0xff]
        %v2509 = vld [vmem:[#allocation2 + $0x62] sm:$0xff]
        %v2510 = vld [vmem:[#allocation2 + $0x6a] sm:$0xff]
        %v2511 = vld [vmem:[#allocation2 + $0x7a] sm:$0xff]
        %v2512 = vld [vmem:[#allocation2 + $0x82] sm:$0xff]
        %v2513 = vld [vmem:[#allocation2 + $0x92] sm:$0xff]
        %v2514 = vld [vmem:[#allocation2 + $0x9a] sm:$0xff]
        %v2515 = vld [vmem:[#allocation2 + $0xaa] sm:$0xff]
        %v2516 = vld [vmem:[#allocation2 + $0xb2] sm:$0xff]
        %v2517 = vld [vmem:[#allocation2 + $0xc2] sm:$0xff]
        %v2518 = vld [vmem:[#allocation2 + $0xca] sm:$0xff]
        %v2519 = vld [vmem:[#allocation2 + $0xda] sm:$0xff]
        %v2520 = vld [vmem:[#allocation2 + $0xe2] sm:$0xff]
        %v2521 = vld [vmem:[#allocation2 + $0xf2] sm:$0xff]
        %v2522 = vld [vmem:[#allocation2 + $0xfa] sm:$0xff]
        %v2523 = vld [vmem:[#allocation2 + $0x10a] sm:$0xff]
        %v2524 = vld [vmem:[#allocation2 + $0x112] sm:$0xff]
        %v2525 = vld [vmem:[#allocation2 + $0x122] sm:$0xff]
        %v2526 = vld [vmem:[#allocation2 + $0x12a] sm:$0xff]
        %v2527 = vld [vmem:[#allocation2 + $0x13a] sm:$0xff]
        %v2528 = vld [vmem:[#allocation2 + $0x142] sm:$0xff]
        %v2529 = vld [vmem:[#allocation2 + $0x152] sm:$0xff]
        %v2530 = vld [vmem:[#allocation2 + $0x15a] sm:$0xff]
        %v2531 = vld [vmem:[#allocation2 + $0x16a] sm:$0xff]
        %v2532 = vld [vmem:[#allocation2 + $0x172] sm:$0xff]
        %s2533 = scalar_lea.vmem %s5, 32
        %v2534 = vld [vmem:[%s2533] sm:$0xff]
        %v2535 = vld [vmem:[%s2533 + $0x8] sm:$0xff]
        %v2537 = vsel %vm412, %v2501, 0
        %v2540 = vsel %vm412, %v2502, 0
        %v2543 = vsel %vm412, %v2503, 0
        %v2546 = vsel %vm412, %v2504, 0
        %v2549 = vsel %vm412, %v2505, 0
        %v2552 = vsel %vm412, %v2506, 0
        %v2555 = vsel %vm412, %v2507, 0
        %v2558 = vsel %vm412, %v2508, 0
        %v2561 = vsel %vm412, %v2509, 0
        %v2564 = vsel %vm412, %v2510, 0
        %v2567 = vsel %vm412, %v2511, 0
        %v2570 = vsel %vm412, %v2512, 0
        %v2573 = vsel %vm412, %v2513, 0
        %v2576 = vsel %vm412, %v2514, 0
        %v2579 = vsel %vm412, %v2515, 0
        %v2582 = vsel %vm412, %v2516, 0
        %v2585 = vsel %vm412, %v2517, 0
        %v2588 = vsel %vm412, %v2518, 0
        %v2591 = vsel %vm412, %v2519, 0
        %v2594 = vsel %vm412, %v2520, 0
        %v2597 = vsel %vm412, %v2521, 0
        %v2600 = vsel %vm412, %v2522, 0
        %v2603 = vsel %vm412, %v2523, 0
        %v2606 = vsel %vm412, %v2524, 0
        %v2609 = vsel %vm412, %v2525, 0
        %v2612 = vsel %vm412, %v2526, 0
        %v2615 = vsel %vm412, %v2527, 0
        %v2618 = vsel %vm412, %v2528, 0
        %v2621 = vsel %vm412, %v2529, 0
        %v2624 = vsel %vm412, %v2530, 0
        %v2627 = vsel %vm412, %v2531, 0
        %v2630 = vsel %vm412, %v2532, 0
        %2632 = vmatprep.subr.mxu0 0.0
        %2633 = vmatpush1.msra.mxu0 0.0
        %2634 = vmatprep.subr.mxu0 0.0
        %2635 = vmatpush1.msra.mxu0 0.0
        %2636 = vmatprep.subr.mxu0 0.0
        %2637 = vmatpush1.msra.mxu0 0.0
        %2638 = vmatprep.subr.mxu0 0.0
        %2639 = vmatpush1.msra.mxu0 0.0
        %2640 = vmatprep.subr.mxu0 0.0
        %2641 = vmatpush1.msra.mxu0 0.0
        %2642 = vmatprep.subr.mxu0 0.0
        %2643 = vmatpush1.msra.mxu0 0.0
        %2644 = vmatprep.subr.mxu0 0.0
        %2645 = vmatpush1.msra.mxu0 0.0
        %2646 = vmatprep.subr.mxu0 0.0
        %2647 = vmatpush1.msra.mxu0 0.0
        %2648 = vmatprep.subr.mxu0 0.0
        %2649 = vmatpush1.msra.mxu0 0.0
        %2650 = vmatprep.subr.mxu0 0.0
        %2651 = vmatpush1.msra.mxu0 0.0
        %2652 = vmatprep.subr.mxu0 0.0
        %2653 = vmatpush1.msra.mxu0 0.0
        %2654 = vmatprep.subr.mxu0 0.0
        %2655 = vmatpush1.msra.mxu0 0.0
        %2656 = vmatprep.subr.mxu0 0.0
        %2657 = vmatpush1.msra.mxu0 0.0
        %2658 = vmatprep.subr.mxu0 0.0
        %2659 = vmatpush1.msra.mxu0 0.0
        %2660 = vmatprep.subr.mxu0 0.0
        %2661 = vmatpush1.msra.mxu0 %v2535
        %2662 = vmatprep.subr.mxu0 0.0
        %2663 = vmatpush1.msra.mxu0 %v2534
        %2664 = vmatprep.subr.mxu0 0.0
        %2665 = vmatpush2.msra.mxu0 0.0
        %2666 = vmatprep.subr.mxu0 0.0
        %2667 = vmatpush2.msra.mxu0 0.0
        %2668 = vmatprep.subr.mxu0 0.0
        %2669 = vmatpush2.msra.mxu0 0.0
        %2670 = vmatprep.subr.mxu0 0.0
        %2671 = vmatpush2.msra.mxu0 0.0
        %2672 = vmatprep.subr.mxu0 0.0
        %2673 = vmatpush2.msra.mxu0 0.0
        %2674 = vmatprep.subr.mxu0 0.0
        %2675 = vmatpush2.msra.mxu0 0.0
        %2676 = vmatprep.subr.mxu0 0.0
        %2677 = vmatpush2.msra.mxu0 0.0
        %2678 = vmatprep.subr.mxu0 0.0
        %2679 = vmatpush2.msra.mxu0 0.0
        %2680 = vmatprep.subr.mxu0 0.0
        %2681 = vmatpush2.msra.mxu0 0.0
        %2682 = vmatprep.subr.mxu0 0.0
        %2683 = vmatpush2.msra.mxu0 0.0
        %2684 = vmatprep.subr.mxu0 0.0
        %2685 = vmatpush2.msra.mxu0 0.0
        %2686 = vmatprep.subr.mxu0 0.0
        %2687 = vmatpush2.msra.mxu0 0.0
        %2688 = vmatprep.subr.mxu0 0.0
        %2689 = vmatpush2.msra.mxu0 0.0
        %2690 = vmatprep.subr.mxu0 0.0
        %2691 = vmatpush2.msra.mxu0 0.0
        %2692 = vmatprep.subr.mxu0 0.0
        %2693 = vmatpush2.msra.mxu0 0.0
        %2694 = vmatprep.subr.mxu0 0.0
        %2695 = vmatpush2.msra.mxu0 0.0
        %2696 = vmatprep.mubr.f32.mxu0 0.0
        %2697 = vmatmul.mubr.f32.gmra.mxu0 %v2537
        %v2698 = vpop.f32.mrf.mxu0
        %v2699 = vadd.f32 0.0, %v2698
        %v2700 = vpop.f32.mrf.mxu0
        %2701 = vmatprep.mubr.f32.mxu0 0.0
        %2702 = vmatmul.mubr.f32.gmra.mxu0 %v2540
        %v2703 = vpop.f32.mrf.mxu0
        %v2704 = vadd.f32 0.0, %v2703
        %v2705 = vpop.f32.mrf.mxu0
        %2706 = vmatprep.mubr.f32.mxu0 0.0
        %2707 = vmatmul.mubr.f32.gmra.mxu0 %v2543
        %v2708 = vpop.f32.mrf.mxu0
        %v2709 = vadd.f32 0.0, %v2708
        %v2710 = vpop.f32.mrf.mxu0
        %2711 = vmatprep.mubr.f32.mxu0 0.0
        %2712 = vmatmul.mubr.f32.gmra.mxu0 %v2546
        %v2713 = vpop.f32.mrf.mxu0
        %v2714 = vadd.f32 0.0, %v2713
        %v2715 = vpop.f32.mrf.mxu0
        %2716 = vmatprep.mubr.f32.mxu0 0.0
        %2717 = vmatmul.mubr.f32.gmra.mxu0 %v2549
        %v2718 = vpop.f32.mrf.mxu0
        %v2719 = vadd.f32 0.0, %v2718
        %v2720 = vpop.f32.mrf.mxu0
        %2721 = vmatprep.mubr.f32.mxu0 0.0
        %2722 = vmatmul.mubr.f32.gmra.mxu0 %v2552
        %v2723 = vpop.f32.mrf.mxu0
        %v2724 = vadd.f32 0.0, %v2723
        %v2725 = vpop.f32.mrf.mxu0
        %2726 = vmatprep.mubr.f32.mxu0 0.0
        %2727 = vmatmul.mubr.f32.gmra.mxu0 %v2555
        %v2728 = vpop.f32.mrf.mxu0
        %v2729 = vadd.f32 0.0, %v2728
        %v2730 = vpop.f32.mrf.mxu0
        %2731 = vmatprep.mubr.f32.mxu0 0.0
        %2732 = vmatmul.mubr.f32.gmra.mxu0 %v2558
        %v2733 = vpop.f32.mrf.mxu0
        %v2734 = vadd.f32 0.0, %v2733
        %v2735 = vpop.f32.mrf.mxu0
        %2736 = vmatprep.mubr.f32.mxu0 0.0
        %2737 = vmatmul.mubr.f32.gmra.mxu0 %v2561
        %v2738 = vpop.f32.mrf.mxu0
        %v2739 = vadd.f32 0.0, %v2738
        %v2740 = vpop.f32.mrf.mxu0
        %2741 = vmatprep.mubr.f32.mxu0 0.0
        %2742 = vmatmul.mubr.f32.gmra.mxu0 %v2564
        %v2743 = vpop.f32.mrf.mxu0
        %v2744 = vadd.f32 0.0, %v2743
        %v2745 = vpop.f32.mrf.mxu0
        %2746 = vmatprep.mubr.f32.mxu0 0.0
        %2747 = vmatmul.mubr.f32.gmra.mxu0 %v2567
        %v2748 = vpop.f32.mrf.mxu0
        %v2749 = vadd.f32 0.0, %v2748
        %v2750 = vpop.f32.mrf.mxu0
        %2751 = vmatprep.mubr.f32.mxu0 0.0
        %2752 = vmatmul.mubr.f32.gmra.mxu0 %v2570
        %v2753 = vpop.f32.mrf.mxu0
        %v2754 = vadd.f32 0.0, %v2753
        %v2755 = vpop.f32.mrf.mxu0
        %2756 = vmatprep.mubr.f32.mxu0 0.0
        %2757 = vmatmul.mubr.f32.gmra.mxu0 %v2573
        %v2758 = vpop.f32.mrf.mxu0
        %v2759 = vadd.f32 0.0, %v2758
        %v2760 = vpop.f32.mrf.mxu0
        %2761 = vmatprep.mubr.f32.mxu0 0.0
        %2762 = vmatmul.mubr.f32.gmra.mxu0 %v2576
        %v2763 = vpop.f32.mrf.mxu0
        %v2764 = vadd.f32 0.0, %v2763
        %v2765 = vpop.f32.mrf.mxu0
        %2766 = vmatprep.mubr.f32.mxu0 0.0
        %2767 = vmatmul.mubr.f32.gmra.mxu0 %v2579
        %v2768 = vpop.f32.mrf.mxu0
        %v2769 = vadd.f32 0.0, %v2768
        %v2770 = vpop.f32.mrf.mxu0
        %2771 = vmatprep.mubr.f32.mxu0 0.0
        %2772 = vmatmul.mubr.f32.gmra.mxu0 %v2582
        %v2773 = vpop.f32.mrf.mxu0
        %v2774 = vadd.f32 0.0, %v2773
        %v2775 = vpop.f32.mrf.mxu0
        %2776 = vmatprep.mubr.f32.mxu0 0.0
        %2777 = vmatmul.mubr.f32.gmra.mxu0 %v2585
        %v2778 = vpop.f32.mrf.mxu0
        %v2779 = vadd.f32 0.0, %v2778
        %v2780 = vpop.f32.mrf.mxu0
        %2781 = vmatprep.mubr.f32.mxu0 0.0
        %2782 = vmatmul.mubr.f32.gmra.mxu0 %v2588
        %v2783 = vpop.f32.mrf.mxu0
        %v2784 = vadd.f32 0.0, %v2783
        %v2785 = vpop.f32.mrf.mxu0
        %2786 = vmatprep.mubr.f32.mxu0 0.0
        %2787 = vmatmul.mubr.f32.gmra.mxu0 %v2591
        %v2788 = vpop.f32.mrf.mxu0
        %v2789 = vadd.f32 0.0, %v2788
        %v2790 = vpop.f32.mrf.mxu0
        %2791 = vmatprep.mubr.f32.mxu0 0.0
        %2792 = vmatmul.mubr.f32.gmra.mxu0 %v2594
        %v2793 = vpop.f32.mrf.mxu0
        %v2794 = vadd.f32 0.0, %v2793
        %v2795 = vpop.f32.mrf.mxu0
        %2796 = vmatprep.mubr.f32.mxu0 0.0
        %2797 = vmatmul.mubr.f32.gmra.mxu0 %v2597
        %v2798 = vpop.f32.mrf.mxu0
        %v2799 = vadd.f32 0.0, %v2798
        %v2800 = vpop.f32.mrf.mxu0
        %2801 = vmatprep.mubr.f32.mxu0 0.0
        %2802 = vmatmul.mubr.f32.gmra.mxu0 %v2600
        %v2803 = vpop.f32.mrf.mxu0
        %v2804 = vadd.f32 0.0, %v2803
        %v2805 = vpop.f32.mrf.mxu0
        %2806 = vmatprep.mubr.f32.mxu0 0.0
        %2807 = vmatmul.mubr.f32.gmra.mxu0 %v2603
        %v2808 = vpop.f32.mrf.mxu0
        %v2809 = vadd.f32 0.0, %v2808
        %v2810 = vpop.f32.mrf.mxu0
        %2811 = vmatprep.mubr.f32.mxu0 0.0
        %2812 = vmatmul.mubr.f32.gmra.mxu0 %v2606
        %v2813 = vpop.f32.mrf.mxu0
        %v2814 = vadd.f32 0.0, %v2813
        %v2815 = vpop.f32.mrf.mxu0
        %2816 = vmatprep.mubr.f32.mxu0 0.0
        %2817 = vmatmul.mubr.f32.gmra.mxu0 %v2609
        %v2818 = vpop.f32.mrf.mxu0
        %v2819 = vadd.f32 0.0, %v2818
        %v2820 = vpop.f32.mrf.mxu0
        %2821 = vmatprep.mubr.f32.mxu0 0.0
        %2822 = vmatmul.mubr.f32.gmra.mxu0 %v2612
        %v2823 = vpop.f32.mrf.mxu0
        %v2824 = vadd.f32 0.0, %v2823
        %v2825 = vpop.f32.mrf.mxu0
        %2826 = vmatprep.mubr.f32.mxu0 0.0
        %2827 = vmatmul.mubr.f32.gmra.mxu0 %v2615
        %v2828 = vpop.f32.mrf.mxu0
        %v2829 = vadd.f32 0.0, %v2828
        %v2830 = vpop.f32.mrf.mxu0
        %2831 = vmatprep.mubr.f32.mxu0 0.0
        %2832 = vmatmul.mubr.f32.gmra.mxu0 %v2618
        %v2833 = vpop.f32.mrf.mxu0
        %v2834 = vadd.f32 0.0, %v2833
        %v2835 = vpop.f32.mrf.mxu0
        %2836 = vmatprep.mubr.f32.mxu0 0.0
        %2837 = vmatmul.mubr.f32.gmra.mxu0 %v2621
        %v2838 = vpop.f32.mrf.mxu0
        %v2839 = vadd.f32 0.0, %v2838
        %v2840 = vpop.f32.mrf.mxu0
        %2841 = vmatprep.mubr.f32.mxu0 0.0
        %2842 = vmatmul.mubr.f32.gmra.mxu0 %v2624
        %v2843 = vpop.f32.mrf.mxu0
        %v2844 = vadd.f32 0.0, %v2843
        %v2845 = vpop.f32.mrf.mxu0
        %2846 = vmatprep.mubr.f32.mxu0 0.0
        %2847 = vmatmul.mubr.f32.gmra.mxu0 %v2627
        %v2848 = vpop.f32.mrf.mxu0
        %v2849 = vadd.f32 0.0, %v2848
        %v2850 = vpop.f32.mrf.mxu0
        %2851 = vmatprep.mubr.f32.mxu0 0.0
        %2852 = vmatmul.mubr.f32.gmra.mxu0 %v2630
        %v2853 = vpop.f32.mrf.mxu0
        %v2854 = vadd.f32 0.0, %v2853
        %v2855 = vpop.f32.mrf.mxu0
        %2856 = vdwg.mxu0
        %v2857 = vadd.f32 %v2343, %v2699
        %v2858 = vadd.f32 %v2348, %v2704
        %v2859 = vadd.f32 %v2353, %v2709
        %v2860 = vadd.f32 %v2358, %v2714
        %v2861 = vadd.f32 %v2363, %v2719
        %v2862 = vadd.f32 %v2368, %v2724
        %v2863 = vadd.f32 %v2373, %v2729
        %v2864 = vadd.f32 %v2378, %v2734
        %v2865 = vadd.f32 %v2383, %v2739
        %v2866 = vadd.f32 %v2388, %v2744
        %v2867 = vadd.f32 %v2393, %v2749
        %v2868 = vadd.f32 %v2398, %v2754
        %v2869 = vadd.f32 %v2403, %v2759
        %v2870 = vadd.f32 %v2408, %v2764
        %v2871 = vadd.f32 %v2413, %v2769
        %v2872 = vadd.f32 %v2418, %v2774
        %v2873 = vadd.f32 %v2423, %v2779
        %v2874 = vadd.f32 %v2428, %v2784
        %v2875 = vadd.f32 %v2433, %v2789
        %v2876 = vadd.f32 %v2438, %v2794
        %v2877 = vadd.f32 %v2443, %v2799
        %v2878 = vadd.f32 %v2448, %v2804
        %v2879 = vadd.f32 %v2453, %v2809
        %v2880 = vadd.f32 %v2458, %v2814
        %v2881 = vadd.f32 %v2463, %v2819
        %v2882 = vadd.f32 %v2468, %v2824
        %v2883 = vadd.f32 %v2473, %v2829
        %v2884 = vadd.f32 %v2478, %v2834
        %v2885 = vadd.f32 %v2483, %v2839
        %v2886 = vadd.f32 %v2488, %v2844
        %v2887 = vadd.f32 %v2493, %v2849
        %v2888 = vadd.f32 %v2498, %v2854
        %s2889 = scalar_lea.vmem [#allocation2], 24
        %v2890 = vld [vmem:[%s2889] sm:$0xff]
        %v2891 = vld [vmem:[%s2889 + $0x8] sm:$0xff]
        %v2892 = vld [vmem:[%s2889 + $0x18] sm:$0xff]
        %v2893 = vld [vmem:[%s2889 + $0x20] sm:$0xff]
        %v2894 = vld [vmem:[%s2889 + $0x30] sm:$0xff]
        %v2895 = vld [vmem:[%s2889 + $0x38] sm:$0xff]
        %v2896 = vld [vmem:[%s2889 + $0x48] sm:$0xff]
        %v2897 = vld [vmem:[%s2889 + $0x50] sm:$0xff]
        %v2898 = vld [vmem:[%s2889 + $0x60] sm:$0xff]
        %v2899 = vld [vmem:[%s2889 + $0x68] sm:$0xff]
        %v2900 = vld [vmem:[%s2889 + $0x78] sm:$0xff]
        %v2901 = vld [vmem:[%s2889 + $0x80] sm:$0xff]
        %v2902 = vld [vmem:[%s2889 + $0x90] sm:$0xff]
        %v2903 = vld [vmem:[%s2889 + $0x98] sm:$0xff]
        %v2904 = vld [vmem:[%s2889 + $0xa8] sm:$0xff]
        %v2905 = vld [vmem:[%s2889 + $0xb0] sm:$0xff]
        %v2906 = vld [vmem:[%s2889 + $0xc0] sm:$0xff]
        %v2907 = vld [vmem:[%s2889 + $0xc8] sm:$0xff]
        %v2908 = vld [vmem:[%s2889 + $0xd8] sm:$0xff]
        %v2909 = vld [vmem:[%s2889 + $0xe0] sm:$0xff]
        %v2910 = vld [vmem:[%s2889 + $0xf0] sm:$0xff]
        %v2911 = vld [vmem:[%s2889 + $0xf8] sm:$0xff]
        %v2912 = vld [vmem:[%s2889 + $0x108] sm:$0xff]
        %v2913 = vld [vmem:[%s2889 + $0x110] sm:$0xff]
        %v2914 = vld [vmem:[%s2889 + $0x120] sm:$0xff]
        %v2915 = vld [vmem:[%s2889 + $0x128] sm:$0xff]
        %v2916 = vld [vmem:[%s2889 + $0x138] sm:$0xff]
        %v2917 = vld [vmem:[%s2889 + $0x140] sm:$0xff]
        %v2918 = vld [vmem:[%s2889 + $0x150] sm:$0xff]
        %v2919 = vld [vmem:[%s2889 + $0x158] sm:$0xff]
        %v2920 = vld [vmem:[%s2889 + $0x168] sm:$0xff]
        %v2921 = vld [vmem:[%s2889 + $0x170] sm:$0xff]
        %s2922 = scalar_lea.vmem %s5, 48
        %v2923 = vld [vmem:[%s2922] sm:$0xff]
        %v2924 = vld [vmem:[%s2922 + $0x8] sm:$0xff]
        %v2926 = vsel %vm412, %v2890, 0
        %v2929 = vsel %vm412, %v2891, 0
        %v2932 = vsel %vm412, %v2892, 0
        %v2935 = vsel %vm412, %v2893, 0
        %v2938 = vsel %vm412, %v2894, 0
        %v2941 = vsel %vm412, %v2895, 0
        %v2944 = vsel %vm412, %v2896, 0
        %v2947 = vsel %vm412, %v2897, 0
        %v2950 = vsel %vm412, %v2898, 0
        %v2953 = vsel %vm412, %v2899, 0
        %v2956 = vsel %vm412, %v2900, 0
        %v2959 = vsel %vm412, %v2901, 0
        %v2962 = vsel %vm412, %v2902, 0
        %v2965 = vsel %vm412, %v2903, 0
        %v2968 = vsel %vm412, %v2904, 0
        %v2971 = vsel %vm412, %v2905, 0
        %v2974 = vsel %vm412, %v2906, 0
        %v2977 = vsel %vm412, %v2907, 0
        %v2980 = vsel %vm412, %v2908, 0
        %v2983 = vsel %vm412, %v2909, 0
        %v2986 = vsel %vm412, %v2910, 0
        %v2989 = vsel %vm412, %v2911, 0
        %v2992 = vsel %vm412, %v2912, 0
        %v2995 = vsel %vm412, %v2913, 0
        %v2998 = vsel %vm412, %v2914, 0
        %v3001 = vsel %vm412, %v2915, 0
        %v3004 = vsel %vm412, %v2916, 0
        %v3007 = vsel %vm412, %v2917, 0
        %v3010 = vsel %vm412, %v2918, 0
        %v3013 = vsel %vm412, %v2919, 0
        %v3016 = vsel %vm412, %v2920, 0
        %v3019 = vsel %vm412, %v2921, 0
        %3021 = vmatprep.subr.mxu0 0.0
        %3022 = vmatpush1.msra.mxu0 0.0
        %3023 = vmatprep.subr.mxu0 0.0
        %3024 = vmatpush1.msra.mxu0 0.0
        %3025 = vmatprep.subr.mxu0 0.0
        %3026 = vmatpush1.msra.mxu0 0.0
        %3027 = vmatprep.subr.mxu0 0.0
        %3028 = vmatpush1.msra.mxu0 0.0
        %3029 = vmatprep.subr.mxu0 0.0
        %3030 = vmatpush1.msra.mxu0 0.0
        %3031 = vmatprep.subr.mxu0 0.0
        %3032 = vmatpush1.msra.mxu0 0.0
        %3033 = vmatprep.subr.mxu0 0.0
        %3034 = vmatpush1.msra.mxu0 0.0
        %3035 = vmatprep.subr.mxu0 0.0
        %3036 = vmatpush1.msra.mxu0 0.0
        %3037 = vmatprep.subr.mxu0 0.0
        %3038 = vmatpush1.msra.mxu0 0.0
        %3039 = vmatprep.subr.mxu0 0.0
        %3040 = vmatpush1.msra.mxu0 0.0
        %3041 = vmatprep.subr.mxu0 0.0
        %3042 = vmatpush1.msra.mxu0 0.0
        %3043 = vmatprep.subr.mxu0 0.0
        %3044 = vmatpush1.msra.mxu0 0.0
        %3045 = vmatprep.subr.mxu0 0.0
        %3046 = vmatpush1.msra.mxu0 0.0
        %3047 = vmatprep.subr.mxu0 0.0
        %3048 = vmatpush1.msra.mxu0 0.0
        %3049 = vmatprep.subr.mxu0 0.0
        %3050 = vmatpush1.msra.mxu0 %v2924
        %3051 = vmatprep.subr.mxu0 0.0
        %3052 = vmatpush1.msra.mxu0 %v2923
        %3053 = vmatprep.subr.mxu0 0.0
        %3054 = vmatpush2.msra.mxu0 0.0
        %3055 = vmatprep.subr.mxu0 0.0
        %3056 = vmatpush2.msra.mxu0 0.0
        %3057 = vmatprep.subr.mxu0 0.0
        %3058 = vmatpush2.msra.mxu0 0.0
        %3059 = vmatprep.subr.mxu0 0.0
        %3060 = vmatpush2.msra.mxu0 0.0
        %3061 = vmatprep.subr.mxu0 0.0
        %3062 = vmatpush2.msra.mxu0 0.0
        %3063 = vmatprep.subr.mxu0 0.0
        %3064 = vmatpush2.msra.mxu0 0.0
        %3065 = vmatprep.subr.mxu0 0.0
        %3066 = vmatpush2.msra.mxu0 0.0
        %3067 = vmatprep.subr.mxu0 0.0
        %3068 = vmatpush2.msra.mxu0 0.0
        %3069 = vmatprep.subr.mxu0 0.0
        %3070 = vmatpush2.msra.mxu0 0.0
        %3071 = vmatprep.subr.mxu0 0.0
        %3072 = vmatpush2.msra.mxu0 0.0
        %3073 = vmatprep.subr.mxu0 0.0
        %3074 = vmatpush2.msra.mxu0 0.0
        %3075 = vmatprep.subr.mxu0 0.0
        %3076 = vmatpush2.msra.mxu0 0.0
        %3077 = vmatprep.subr.mxu0 0.0
        %3078 = vmatpush2.msra.mxu0 0.0
        %3079 = vmatprep.subr.mxu0 0.0
        %3080 = vmatpush2.msra.mxu0 0.0
        %3081 = vmatprep.subr.mxu0 0.0
        %3082 = vmatpush2.msra.mxu0 0.0
        %3083 = vmatprep.subr.mxu0 0.0
        %3084 = vmatpush2.msra.mxu0 0.0
        %3085 = vmatprep.mubr.f32.mxu0 0.0
        %3086 = vmatmul.mubr.f32.gmra.mxu0 %v2926
        %v3087 = vpop.f32.mrf.mxu0
        %v3088 = vadd.f32 0.0, %v3087
        %v3089 = vpop.f32.mrf.mxu0
        %3090 = vmatprep.mubr.f32.mxu0 0.0
        %3091 = vmatmul.mubr.f32.gmra.mxu0 %v2929
        %v3092 = vpop.f32.mrf.mxu0
        %v3093 = vadd.f32 0.0, %v3092
        %v3094 = vpop.f32.mrf.mxu0
        %3095 = vmatprep.mubr.f32.mxu0 0.0
        %3096 = vmatmul.mubr.f32.gmra.mxu0 %v2932
        %v3097 = vpop.f32.mrf.mxu0
        %v3098 = vadd.f32 0.0, %v3097
        %v3099 = vpop.f32.mrf.mxu0
        %3100 = vmatprep.mubr.f32.mxu0 0.0
        %3101 = vmatmul.mubr.f32.gmra.mxu0 %v2935
        %v3102 = vpop.f32.mrf.mxu0
        %v3103 = vadd.f32 0.0, %v3102
        %v3104 = vpop.f32.mrf.mxu0
        %3105 = vmatprep.mubr.f32.mxu0 0.0
        %3106 = vmatmul.mubr.f32.gmra.mxu0 %v2938
        %v3107 = vpop.f32.mrf.mxu0
        %v3108 = vadd.f32 0.0, %v3107
        %v3109 = vpop.f32.mrf.mxu0
        %3110 = vmatprep.mubr.f32.mxu0 0.0
        %3111 = vmatmul.mubr.f32.gmra.mxu0 %v2941
        %v3112 = vpop.f32.mrf.mxu0
        %v3113 = vadd.f32 0.0, %v3112
        %v3114 = vpop.f32.mrf.mxu0
        %3115 = vmatprep.mubr.f32.mxu0 0.0
        %3116 = vmatmul.mubr.f32.gmra.mxu0 %v2944
        %v3117 = vpop.f32.mrf.mxu0
        %v3118 = vadd.f32 0.0, %v3117
        %v3119 = vpop.f32.mrf.mxu0
        %3120 = vmatprep.mubr.f32.mxu0 0.0
        %3121 = vmatmul.mubr.f32.gmra.mxu0 %v2947
        %v3122 = vpop.f32.mrf.mxu0
        %v3123 = vadd.f32 0.0, %v3122
        %v3124 = vpop.f32.mrf.mxu0
        %3125 = vmatprep.mubr.f32.mxu0 0.0
        %3126 = vmatmul.mubr.f32.gmra.mxu0 %v2950
        %v3127 = vpop.f32.mrf.mxu0
        %v3128 = vadd.f32 0.0, %v3127
        %v3129 = vpop.f32.mrf.mxu0
        %3130 = vmatprep.mubr.f32.mxu0 0.0
        %3131 = vmatmul.mubr.f32.gmra.mxu0 %v2953
        %v3132 = vpop.f32.mrf.mxu0
        %v3133 = vadd.f32 0.0, %v3132
        %v3134 = vpop.f32.mrf.mxu0
        %3135 = vmatprep.mubr.f32.mxu0 0.0
        %3136 = vmatmul.mubr.f32.gmra.mxu0 %v2956
        %v3137 = vpop.f32.mrf.mxu0
        %v3138 = vadd.f32 0.0, %v3137
        %v3139 = vpop.f32.mrf.mxu0
        %3140 = vmatprep.mubr.f32.mxu0 0.0
        %3141 = vmatmul.mubr.f32.gmra.mxu0 %v2959
        %v3142 = vpop.f32.mrf.mxu0
        %v3143 = vadd.f32 0.0, %v3142
        %v3144 = vpop.f32.mrf.mxu0
        %3145 = vmatprep.mubr.f32.mxu0 0.0
        %3146 = vmatmul.mubr.f32.gmra.mxu0 %v2962
        %v3147 = vpop.f32.mrf.mxu0
        %v3148 = vadd.f32 0.0, %v3147
        %v3149 = vpop.f32.mrf.mxu0
        %3150 = vmatprep.mubr.f32.mxu0 0.0
        %3151 = vmatmul.mubr.f32.gmra.mxu0 %v2965
        %v3152 = vpop.f32.mrf.mxu0
        %v3153 = vadd.f32 0.0, %v3152
        %v3154 = vpop.f32.mrf.mxu0
        %3155 = vmatprep.mubr.f32.mxu0 0.0
        %3156 = vmatmul.mubr.f32.gmra.mxu0 %v2968
        %v3157 = vpop.f32.mrf.mxu0
        %v3158 = vadd.f32 0.0, %v3157
        %v3159 = vpop.f32.mrf.mxu0
        %3160 = vmatprep.mubr.f32.mxu0 0.0
        %3161 = vmatmul.mubr.f32.gmra.mxu0 %v2971
        %v3162 = vpop.f32.mrf.mxu0
        %v3163 = vadd.f32 0.0, %v3162
        %v3164 = vpop.f32.mrf.mxu0
        %3165 = vmatprep.mubr.f32.mxu0 0.0
        %3166 = vmatmul.mubr.f32.gmra.mxu0 %v2974
        %v3167 = vpop.f32.mrf.mxu0
        %v3168 = vadd.f32 0.0, %v3167
        %v3169 = vpop.f32.mrf.mxu0
        %3170 = vmatprep.mubr.f32.mxu0 0.0
        %3171 = vmatmul.mubr.f32.gmra.mxu0 %v2977
        %v3172 = vpop.f32.mrf.mxu0
        %v3173 = vadd.f32 0.0, %v3172
        %v3174 = vpop.f32.mrf.mxu0
        %3175 = vmatprep.mubr.f32.mxu0 0.0
        %3176 = vmatmul.mubr.f32.gmra.mxu0 %v2980
        %v3177 = vpop.f32.mrf.mxu0
        %v3178 = vadd.f32 0.0, %v3177
        %v3179 = vpop.f32.mrf.mxu0
        %3180 = vmatprep.mubr.f32.mxu0 0.0
        %3181 = vmatmul.mubr.f32.gmra.mxu0 %v2983
        %v3182 = vpop.f32.mrf.mxu0
        %v3183 = vadd.f32 0.0, %v3182
        %v3184 = vpop.f32.mrf.mxu0
        %3185 = vmatprep.mubr.f32.mxu0 0.0
        %3186 = vmatmul.mubr.f32.gmra.mxu0 %v2986
        %v3187 = vpop.f32.mrf.mxu0
        %v3188 = vadd.f32 0.0, %v3187
        %v3189 = vpop.f32.mrf.mxu0
        %3190 = vmatprep.mubr.f32.mxu0 0.0
        %3191 = vmatmul.mubr.f32.gmra.mxu0 %v2989
        %v3192 = vpop.f32.mrf.mxu0
        %v3193 = vadd.f32 0.0, %v3192
        %v3194 = vpop.f32.mrf.mxu0
        %3195 = vmatprep.mubr.f32.mxu0 0.0
        %3196 = vmatmul.mubr.f32.gmra.mxu0 %v2992
        %v3197 = vpop.f32.mrf.mxu0
        %v3198 = vadd.f32 0.0, %v3197
        %v3199 = vpop.f32.mrf.mxu0
        %3200 = vmatprep.mubr.f32.mxu0 0.0
        %3201 = vmatmul.mubr.f32.gmra.mxu0 %v2995
        %v3202 = vpop.f32.mrf.mxu0
        %v3203 = vadd.f32 0.0, %v3202
        %v3204 = vpop.f32.mrf.mxu0
        %3205 = vmatprep.mubr.f32.mxu0 0.0
        %3206 = vmatmul.mubr.f32.gmra.mxu0 %v2998
        %v3207 = vpop.f32.mrf.mxu0
        %v3208 = vadd.f32 0.0, %v3207
        %v3209 = vpop.f32.mrf.mxu0
        %3210 = vmatprep.mubr.f32.mxu0 0.0
        %3211 = vmatmul.mubr.f32.gmra.mxu0 %v3001
        %v3212 = vpop.f32.mrf.mxu0
        %v3213 = vadd.f32 0.0, %v3212
        %v3214 = vpop.f32.mrf.mxu0
        %3215 = vmatprep.mubr.f32.mxu0 0.0
        %3216 = vmatmul.mubr.f32.gmra.mxu0 %v3004
        %v3217 = vpop.f32.mrf.mxu0
        %v3218 = vadd.f32 0.0, %v3217
        %v3219 = vpop.f32.mrf.mxu0
        %3220 = vmatprep.mubr.f32.mxu0 0.0
        %3221 = vmatmul.mubr.f32.gmra.mxu0 %v3007
        %v3222 = vpop.f32.mrf.mxu0
        %v3223 = vadd.f32 0.0, %v3222
        %v3224 = vpop.f32.mrf.mxu0
        %3225 = vmatprep.mubr.f32.mxu0 0.0
        %3226 = vmatmul.mubr.f32.gmra.mxu0 %v3010
        %v3227 = vpop.f32.mrf.mxu0
        %v3228 = vadd.f32 0.0, %v3227
        %v3229 = vpop.f32.mrf.mxu0
        %3230 = vmatprep.mubr.f32.mxu0 0.0
        %3231 = vmatmul.mubr.f32.gmra.mxu0 %v3013
        %v3232 = vpop.f32.mrf.mxu0
        %v3233 = vadd.f32 0.0, %v3232
        %v3234 = vpop.f32.mrf.mxu0
        %3235 = vmatprep.mubr.f32.mxu0 0.0
        %3236 = vmatmul.mubr.f32.gmra.mxu0 %v3016
        %v3237 = vpop.f32.mrf.mxu0
        %v3238 = vadd.f32 0.0, %v3237
        %v3239 = vpop.f32.mrf.mxu0
        %3240 = vmatprep.mubr.f32.mxu0 0.0
        %3241 = vmatmul.mubr.f32.gmra.mxu0 %v3019
        %v3242 = vpop.f32.mrf.mxu0
        %v3243 = vadd.f32 0.0, %v3242
        %v3244 = vpop.f32.mrf.mxu0
        %3245 = vdwg.mxu0
        %v3246 = vadd.f32 %v2857, %v3088
        %v3247 = vadd.f32 %v2858, %v3093
        %v3248 = vadd.f32 %v2859, %v3098
        %v3249 = vadd.f32 %v2860, %v3103
        %v3250 = vadd.f32 %v2861, %v3108
        %v3251 = vadd.f32 %v2862, %v3113
        %v3252 = vadd.f32 %v2863, %v3118
        %v3253 = vadd.f32 %v2864, %v3123
        %v3254 = vadd.f32 %v2865, %v3128
        %v3255 = vadd.f32 %v2866, %v3133
        %v3256 = vadd.f32 %v2867, %v3138
        %v3257 = vadd.f32 %v2868, %v3143
        %v3258 = vadd.f32 %v2869, %v3148
        %v3259 = vadd.f32 %v2870, %v3153
        %v3260 = vadd.f32 %v2871, %v3158
        %v3261 = vadd.f32 %v2872, %v3163
        %v3262 = vadd.f32 %v2873, %v3168
        %v3263 = vadd.f32 %v2874, %v3173
        %v3264 = vadd.f32 %v2875, %v3178
        %v3265 = vadd.f32 %v2876, %v3183
        %v3266 = vadd.f32 %v2877, %v3188
        %v3267 = vadd.f32 %v2878, %v3193
        %v3268 = vadd.f32 %v2879, %v3198
        %v3269 = vadd.f32 %v2880, %v3203
        %v3270 = vadd.f32 %v2881, %v3208
        %v3271 = vadd.f32 %v2882, %v3213
        %v3272 = vadd.f32 %v2883, %v3218
        %v3273 = vadd.f32 %v2884, %v3223
        %v3274 = vadd.f32 %v2885, %v3228
        %v3275 = vadd.f32 %v2886, %v3233
        %v3276 = vadd.f32 %v2887, %v3238
        %v3277 = vadd.f32 %v2888, %v3243
        %v3278 = vld [vmem:[%s2889 + $0x1] sm:$0xff]
        %v3279 = vld [vmem:[%s2889 + $0x9] sm:$0xff]
        %v3280 = vld [vmem:[%s2889 + $0x19] sm:$0xff]
        %v3281 = vld [vmem:[%s2889 + $0x21] sm:$0xff]
        %v3282 = vld [vmem:[%s2889 + $0x31] sm:$0xff]
        %v3283 = vld [vmem:[%s2889 + $0x39] sm:$0xff]
        %v3284 = vld [vmem:[%s2889 + $0x49] sm:$0xff]
        %v3285 = vld [vmem:[%s2889 + $0x51] sm:$0xff]
        %v3286 = vld [vmem:[%s2889 + $0x61] sm:$0xff]
        %v3287 = vld [vmem:[%s2889 + $0x69] sm:$0xff]
        %v3288 = vld [vmem:[%s2889 + $0x79] sm:$0xff]
        %v3289 = vld [vmem:[%s2889 + $0x81] sm:$0xff]
        %v3290 = vld [vmem:[%s2889 + $0x91] sm:$0xff]
        %v3291 = vld [vmem:[%s2889 + $0x99] sm:$0xff]
        %v3292 = vld [vmem:[%s2889 + $0xa9] sm:$0xff]
        %v3293 = vld [vmem:[%s2889 + $0xb1] sm:$0xff]
        %v3294 = vld [vmem:[%s2889 + $0xc1] sm:$0xff]
        %v3295 = vld [vmem:[%s2889 + $0xc9] sm:$0xff]
        %v3296 = vld [vmem:[%s2889 + $0xd9] sm:$0xff]
        %v3297 = vld [vmem:[%s2889 + $0xe1] sm:$0xff]
        %v3298 = vld [vmem:[%s2889 + $0xf1] sm:$0xff]
        %v3299 = vld [vmem:[%s2889 + $0xf9] sm:$0xff]
        %v3300 = vld [vmem:[%s2889 + $0x109] sm:$0xff]
        %v3301 = vld [vmem:[%s2889 + $0x111] sm:$0xff]
        %v3302 = vld [vmem:[%s2889 + $0x121] sm:$0xff]
        %v3303 = vld [vmem:[%s2889 + $0x129] sm:$0xff]
        %v3304 = vld [vmem:[%s2889 + $0x139] sm:$0xff]
        %v3305 = vld [vmem:[%s2889 + $0x141] sm:$0xff]
        %v3306 = vld [vmem:[%s2889 + $0x151] sm:$0xff]
        %v3307 = vld [vmem:[%s2889 + $0x159] sm:$0xff]
        %v3308 = vld [vmem:[%s2889 + $0x169] sm:$0xff]
        %v3309 = vld [vmem:[%s2889 + $0x171] sm:$0xff]
        %s3310 = scalar_lea.vmem %s5, 64
        %v3311 = vld [vmem:[%s3310] sm:$0xff]
        %v3312 = vld [vmem:[%s3310 + $0x8] sm:$0xff]
        %v3314 = vsel %vm412, %v3278, 0
        %v3317 = vsel %vm412, %v3279, 0
        %v3320 = vsel %vm412, %v3280, 0
        %v3323 = vsel %vm412, %v3281, 0
        %v3326 = vsel %vm412, %v3282, 0
        %v3329 = vsel %vm412, %v3283, 0
        %v3332 = vsel %vm412, %v3284, 0
        %v3335 = vsel %vm412, %v3285, 0
        %v3338 = vsel %vm412, %v3286, 0
        %v3341 = vsel %vm412, %v3287, 0
        %v3344 = vsel %vm412, %v3288, 0
        %v3347 = vsel %vm412, %v3289, 0
        %v3350 = vsel %vm412, %v3290, 0
        %v3353 = vsel %vm412, %v3291, 0
        %v3356 = vsel %vm412, %v3292, 0
        %v3359 = vsel %vm412, %v3293, 0
        %v3362 = vsel %vm412, %v3294, 0
        %v3365 = vsel %vm412, %v3295, 0
        %v3368 = vsel %vm412, %v3296, 0
        %v3371 = vsel %vm412, %v3297, 0
        %v3374 = vsel %vm412, %v3298, 0
        %v3377 = vsel %vm412, %v3299, 0
        %v3380 = vsel %vm412, %v3300, 0
        %v3383 = vsel %vm412, %v3301, 0
        %v3386 = vsel %vm412, %v3302, 0
        %v3389 = vsel %vm412, %v3303, 0
        %v3392 = vsel %vm412, %v3304, 0
        %v3395 = vsel %vm412, %v3305, 0
        %v3398 = vsel %vm412, %v3306, 0
        %v3401 = vsel %vm412, %v3307, 0
        %v3404 = vsel %vm412, %v3308, 0
        %v3407 = vsel %vm412, %v3309, 0
        %3409 = vmatprep.subr.mxu0 0.0
        %3410 = vmatpush1.msra.mxu0 0.0
        %3411 = vmatprep.subr.mxu0 0.0
        %3412 = vmatpush1.msra.mxu0 0.0
        %3413 = vmatprep.subr.mxu0 0.0
        %3414 = vmatpush1.msra.mxu0 0.0
        %3415 = vmatprep.subr.mxu0 0.0
        %3416 = vmatpush1.msra.mxu0 0.0
        %3417 = vmatprep.subr.mxu0 0.0
        %3418 = vmatpush1.msra.mxu0 0.0
        %3419 = vmatprep.subr.mxu0 0.0
        %3420 = vmatpush1.msra.mxu0 0.0
        %3421 = vmatprep.subr.mxu0 0.0
        %3422 = vmatpush1.msra.mxu0 0.0
        %3423 = vmatprep.subr.mxu0 0.0
        %3424 = vmatpush1.msra.mxu0 0.0
        %3425 = vmatprep.subr.mxu0 0.0
        %3426 = vmatpush1.msra.mxu0 0.0
        %3427 = vmatprep.subr.mxu0 0.0
        %3428 = vmatpush1.msra.mxu0 0.0
        %3429 = vmatprep.subr.mxu0 0.0
        %3430 = vmatpush1.msra.mxu0 0.0
        %3431 = vmatprep.subr.mxu0 0.0
        %3432 = vmatpush1.msra.mxu0 0.0
        %3433 = vmatprep.subr.mxu0 0.0
        %3434 = vmatpush1.msra.mxu0 0.0
        %3435 = vmatprep.subr.mxu0 0.0
        %3436 = vmatpush1.msra.mxu0 0.0
        %3437 = vmatprep.subr.mxu0 0.0
        %3438 = vmatpush1.msra.mxu0 %v3312
        %3439 = vmatprep.subr.mxu0 0.0
        %3440 = vmatpush1.msra.mxu0 %v3311
        %3441 = vmatprep.subr.mxu0 0.0
        %3442 = vmatpush2.msra.mxu0 0.0
        %3443 = vmatprep.subr.mxu0 0.0
        %3444 = vmatpush2.msra.mxu0 0.0
        %3445 = vmatprep.subr.mxu0 0.0
        %3446 = vmatpush2.msra.mxu0 0.0
        %3447 = vmatprep.subr.mxu0 0.0
        %3448 = vmatpush2.msra.mxu0 0.0
        %3449 = vmatprep.subr.mxu0 0.0
        %3450 = vmatpush2.msra.mxu0 0.0
        %3451 = vmatprep.subr.mxu0 0.0
        %3452 = vmatpush2.msra.mxu0 0.0
        %3453 = vmatprep.subr.mxu0 0.0
        %3454 = vmatpush2.msra.mxu0 0.0
        %3455 = vmatprep.subr.mxu0 0.0
        %3456 = vmatpush2.msra.mxu0 0.0
        %3457 = vmatprep.subr.mxu0 0.0
        %3458 = vmatpush2.msra.mxu0 0.0
        %3459 = vmatprep.subr.mxu0 0.0
        %3460 = vmatpush2.msra.mxu0 0.0
        %3461 = vmatprep.subr.mxu0 0.0
        %3462 = vmatpush2.msra.mxu0 0.0
        %3463 = vmatprep.subr.mxu0 0.0
        %3464 = vmatpush2.msra.mxu0 0.0
        %3465 = vmatprep.subr.mxu0 0.0
        %3466 = vmatpush2.msra.mxu0 0.0
        %3467 = vmatprep.subr.mxu0 0.0
        %3468 = vmatpush2.msra.mxu0 0.0
        %3469 = vmatprep.subr.mxu0 0.0
        %3470 = vmatpush2.msra.mxu0 0.0
        %3471 = vmatprep.subr.mxu0 0.0
        %3472 = vmatpush2.msra.mxu0 0.0
        %3473 = vmatprep.mubr.f32.mxu0 0.0
        %3474 = vmatmul.mubr.f32.gmra.mxu0 %v3314
        %v3475 = vpop.f32.mrf.mxu0
        %v3476 = vadd.f32 0.0, %v3475
        %v3477 = vpop.f32.mrf.mxu0
        %3478 = vmatprep.mubr.f32.mxu0 0.0
        %3479 = vmatmul.mubr.f32.gmra.mxu0 %v3317
        %v3480 = vpop.f32.mrf.mxu0
        %v3481 = vadd.f32 0.0, %v3480
        %v3482 = vpop.f32.mrf.mxu0
        %3483 = vmatprep.mubr.f32.mxu0 0.0
        %3484 = vmatmul.mubr.f32.gmra.mxu0 %v3320
        %v3485 = vpop.f32.mrf.mxu0
        %v3486 = vadd.f32 0.0, %v3485
        %v3487 = vpop.f32.mrf.mxu0
        %3488 = vmatprep.mubr.f32.mxu0 0.0
        %3489 = vmatmul.mubr.f32.gmra.mxu0 %v3323
        %v3490 = vpop.f32.mrf.mxu0
        %v3491 = vadd.f32 0.0, %v3490
        %v3492 = vpop.f32.mrf.mxu0
        %3493 = vmatprep.mubr.f32.mxu0 0.0
        %3494 = vmatmul.mubr.f32.gmra.mxu0 %v3326
        %v3495 = vpop.f32.mrf.mxu0
        %v3496 = vadd.f32 0.0, %v3495
        %v3497 = vpop.f32.mrf.mxu0
        %3498 = vmatprep.mubr.f32.mxu0 0.0
        %3499 = vmatmul.mubr.f32.gmra.mxu0 %v3329
        %v3500 = vpop.f32.mrf.mxu0
        %v3501 = vadd.f32 0.0, %v3500
        %v3502 = vpop.f32.mrf.mxu0
        %3503 = vmatprep.mubr.f32.mxu0 0.0
        %3504 = vmatmul.mubr.f32.gmra.mxu0 %v3332
        %v3505 = vpop.f32.mrf.mxu0
        %v3506 = vadd.f32 0.0, %v3505
        %v3507 = vpop.f32.mrf.mxu0
        %3508 = vmatprep.mubr.f32.mxu0 0.0
        %3509 = vmatmul.mubr.f32.gmra.mxu0 %v3335
        %v3510 = vpop.f32.mrf.mxu0
        %v3511 = vadd.f32 0.0, %v3510
        %v3512 = vpop.f32.mrf.mxu0
        %3513 = vmatprep.mubr.f32.mxu0 0.0
        %3514 = vmatmul.mubr.f32.gmra.mxu0 %v3338
        %v3515 = vpop.f32.mrf.mxu0
        %v3516 = vadd.f32 0.0, %v3515
        %v3517 = vpop.f32.mrf.mxu0
        %3518 = vmatprep.mubr.f32.mxu0 0.0
        %3519 = vmatmul.mubr.f32.gmra.mxu0 %v3341
        %v3520 = vpop.f32.mrf.mxu0
        %v3521 = vadd.f32 0.0, %v3520
        %v3522 = vpop.f32.mrf.mxu0
        %3523 = vmatprep.mubr.f32.mxu0 0.0
        %3524 = vmatmul.mubr.f32.gmra.mxu0 %v3344
        %v3525 = vpop.f32.mrf.mxu0
        %v3526 = vadd.f32 0.0, %v3525
        %v3527 = vpop.f32.mrf.mxu0
        %3528 = vmatprep.mubr.f32.mxu0 0.0
        %3529 = vmatmul.mubr.f32.gmra.mxu0 %v3347
        %v3530 = vpop.f32.mrf.mxu0
        %v3531 = vadd.f32 0.0, %v3530
        %v3532 = vpop.f32.mrf.mxu0
        %3533 = vmatprep.mubr.f32.mxu0 0.0
        %3534 = vmatmul.mubr.f32.gmra.mxu0 %v3350
        %v3535 = vpop.f32.mrf.mxu0
        %v3536 = vadd.f32 0.0, %v3535
        %v3537 = vpop.f32.mrf.mxu0
        %3538 = vmatprep.mubr.f32.mxu0 0.0
        %3539 = vmatmul.mubr.f32.gmra.mxu0 %v3353
        %v3540 = vpop.f32.mrf.mxu0
        %v3541 = vadd.f32 0.0, %v3540
        %v3542 = vpop.f32.mrf.mxu0
        %3543 = vmatprep.mubr.f32.mxu0 0.0
        %3544 = vmatmul.mubr.f32.gmra.mxu0 %v3356
        %v3545 = vpop.f32.mrf.mxu0
        %v3546 = vadd.f32 0.0, %v3545
        %v3547 = vpop.f32.mrf.mxu0
        %3548 = vmatprep.mubr.f32.mxu0 0.0
        %3549 = vmatmul.mubr.f32.gmra.mxu0 %v3359
        %v3550 = vpop.f32.mrf.mxu0
        %v3551 = vadd.f32 0.0, %v3550
        %v3552 = vpop.f32.mrf.mxu0
        %3553 = vmatprep.mubr.f32.mxu0 0.0
        %3554 = vmatmul.mubr.f32.gmra.mxu0 %v3362
        %v3555 = vpop.f32.mrf.mxu0
        %v3556 = vadd.f32 0.0, %v3555
        %v3557 = vpop.f32.mrf.mxu0
        %3558 = vmatprep.mubr.f32.mxu0 0.0
        %3559 = vmatmul.mubr.f32.gmra.mxu0 %v3365
        %v3560 = vpop.f32.mrf.mxu0
        %v3561 = vadd.f32 0.0, %v3560
        %v3562 = vpop.f32.mrf.mxu0
        %3563 = vmatprep.mubr.f32.mxu0 0.0
        %3564 = vmatmul.mubr.f32.gmra.mxu0 %v3368
        %v3565 = vpop.f32.mrf.mxu0
        %v3566 = vadd.f32 0.0, %v3565
        %v3567 = vpop.f32.mrf.mxu0
        %3568 = vmatprep.mubr.f32.mxu0 0.0
        %3569 = vmatmul.mubr.f32.gmra.mxu0 %v3371
        %v3570 = vpop.f32.mrf.mxu0
        %v3571 = vadd.f32 0.0, %v3570
        %v3572 = vpop.f32.mrf.mxu0
        %3573 = vmatprep.mubr.f32.mxu0 0.0
        %3574 = vmatmul.mubr.f32.gmra.mxu0 %v3374
        %v3575 = vpop.f32.mrf.mxu0
        %v3576 = vadd.f32 0.0, %v3575
        %v3577 = vpop.f32.mrf.mxu0
        %3578 = vmatprep.mubr.f32.mxu0 0.0
        %3579 = vmatmul.mubr.f32.gmra.mxu0 %v3377
        %v3580 = vpop.f32.mrf.mxu0
        %v3581 = vadd.f32 0.0, %v3580
        %v3582 = vpop.f32.mrf.mxu0
        %3583 = vmatprep.mubr.f32.mxu0 0.0
        %3584 = vmatmul.mubr.f32.gmra.mxu0 %v3380
        %v3585 = vpop.f32.mrf.mxu0
        %v3586 = vadd.f32 0.0, %v3585
        %v3587 = vpop.f32.mrf.mxu0
        %3588 = vmatprep.mubr.f32.mxu0 0.0
        %3589 = vmatmul.mubr.f32.gmra.mxu0 %v3383
        %v3590 = vpop.f32.mrf.mxu0
        %v3591 = vadd.f32 0.0, %v3590
        %v3592 = vpop.f32.mrf.mxu0
        %3593 = vmatprep.mubr.f32.mxu0 0.0
        %3594 = vmatmul.mubr.f32.gmra.mxu0 %v3386
        %v3595 = vpop.f32.mrf.mxu0
        %v3596 = vadd.f32 0.0, %v3595
        %v3597 = vpop.f32.mrf.mxu0
        %3598 = vmatprep.mubr.f32.mxu0 0.0
        %3599 = vmatmul.mubr.f32.gmra.mxu0 %v3389
        %v3600 = vpop.f32.mrf.mxu0
        %v3601 = vadd.f32 0.0, %v3600
        %v3602 = vpop.f32.mrf.mxu0
        %3603 = vmatprep.mubr.f32.mxu0 0.0
        %3604 = vmatmul.mubr.f32.gmra.mxu0 %v3392
        %v3605 = vpop.f32.mrf.mxu0
        %v3606 = vadd.f32 0.0, %v3605
        %v3607 = vpop.f32.mrf.mxu0
        %3608 = vmatprep.mubr.f32.mxu0 0.0
        %3609 = vmatmul.mubr.f32.gmra.mxu0 %v3395
        %v3610 = vpop.f32.mrf.mxu0
        %v3611 = vadd.f32 0.0, %v3610
        %v3612 = vpop.f32.mrf.mxu0
        %3613 = vmatprep.mubr.f32.mxu0 0.0
        %3614 = vmatmul.mubr.f32.gmra.mxu0 %v3398
        %v3615 = vpop.f32.mrf.mxu0
        %v3616 = vadd.f32 0.0, %v3615
        %v3617 = vpop.f32.mrf.mxu0
        %3618 = vmatprep.mubr.f32.mxu0 0.0
        %3619 = vmatmul.mubr.f32.gmra.mxu0 %v3401
        %v3620 = vpop.f32.mrf.mxu0
        %v3621 = vadd.f32 0.0, %v3620
        %v3622 = vpop.f32.mrf.mxu0
        %3623 = vmatprep.mubr.f32.mxu0 0.0
        %3624 = vmatmul.mubr.f32.gmra.mxu0 %v3404
        %v3625 = vpop.f32.mrf.mxu0
        %v3626 = vadd.f32 0.0, %v3625
        %v3627 = vpop.f32.mrf.mxu0
        %3628 = vmatprep.mubr.f32.mxu0 0.0
        %3629 = vmatmul.mubr.f32.gmra.mxu0 %v3407
        %v3630 = vpop.f32.mrf.mxu0
        %v3631 = vadd.f32 0.0, %v3630
        %v3632 = vpop.f32.mrf.mxu0
        %3633 = vdwg.mxu0
        %v3634 = vadd.f32 %v3246, %v3476
        %v3635 = vadd.f32 %v3247, %v3481
        %v3636 = vadd.f32 %v3248, %v3486
        %v3637 = vadd.f32 %v3249, %v3491
        %v3638 = vadd.f32 %v3250, %v3496
        %v3639 = vadd.f32 %v3251, %v3501
        %v3640 = vadd.f32 %v3252, %v3506
        %v3641 = vadd.f32 %v3253, %v3511
        %v3642 = vadd.f32 %v3254, %v3516
        %v3643 = vadd.f32 %v3255, %v3521
        %v3644 = vadd.f32 %v3256, %v3526
        %v3645 = vadd.f32 %v3257, %v3531
        %v3646 = vadd.f32 %v3258, %v3536
        %v3647 = vadd.f32 %v3259, %v3541
        %v3648 = vadd.f32 %v3260, %v3546
        %v3649 = vadd.f32 %v3261, %v3551
        %v3650 = vadd.f32 %v3262, %v3556
        %v3651 = vadd.f32 %v3263, %v3561
        %v3652 = vadd.f32 %v3264, %v3566
        %v3653 = vadd.f32 %v3265, %v3571
        %v3654 = vadd.f32 %v3266, %v3576
        %v3655 = vadd.f32 %v3267, %v3581
        %v3656 = vadd.f32 %v3268, %v3586
        %v3657 = vadd.f32 %v3269, %v3591
        %v3658 = vadd.f32 %v3270, %v3596
        %v3659 = vadd.f32 %v3271, %v3601
        %v3660 = vadd.f32 %v3272, %v3606
        %v3661 = vadd.f32 %v3273, %v3611
        %v3662 = vadd.f32 %v3274, %v3616
        %v3663 = vadd.f32 %v3275, %v3621
        %v3664 = vadd.f32 %v3276, %v3626
        %v3665 = vadd.f32 %v3277, %v3631
        %v3666 = vld [vmem:[%s2889 + $0x2] sm:$0xff]
        %v3667 = vld [vmem:[%s2889 + $0xa] sm:$0xff]
        %v3668 = vld [vmem:[%s2889 + $0x1a] sm:$0xff]
        %v3669 = vld [vmem:[%s2889 + $0x22] sm:$0xff]
        %v3670 = vld [vmem:[%s2889 + $0x32] sm:$0xff]
        %v3671 = vld [vmem:[%s2889 + $0x3a] sm:$0xff]
        %v3672 = vld [vmem:[%s2889 + $0x4a] sm:$0xff]
        %v3673 = vld [vmem:[%s2889 + $0x52] sm:$0xff]
        %v3674 = vld [vmem:[%s2889 + $0x62] sm:$0xff]
        %v3675 = vld [vmem:[%s2889 + $0x6a] sm:$0xff]
        %v3676 = vld [vmem:[%s2889 + $0x7a] sm:$0xff]
        %v3677 = vld [vmem:[%s2889 + $0x82] sm:$0xff]
        %v3678 = vld [vmem:[%s2889 + $0x92] sm:$0xff]
        %v3679 = vld [vmem:[%s2889 + $0x9a] sm:$0xff]
        %v3680 = vld [vmem:[%s2889 + $0xaa] sm:$0xff]
        %v3681 = vld [vmem:[%s2889 + $0xb2] sm:$0xff]
        %v3682 = vld [vmem:[%s2889 + $0xc2] sm:$0xff]
        %v3683 = vld [vmem:[%s2889 + $0xca] sm:$0xff]
        %v3684 = vld [vmem:[%s2889 + $0xda] sm:$0xff]
        %v3685 = vld [vmem:[%s2889 + $0xe2] sm:$0xff]
        %v3686 = vld [vmem:[%s2889 + $0xf2] sm:$0xff]
        %v3687 = vld [vmem:[%s2889 + $0xfa] sm:$0xff]
        %v3688 = vld [vmem:[%s2889 + $0x10a] sm:$0xff]
        %v3689 = vld [vmem:[%s2889 + $0x112] sm:$0xff]
        %v3690 = vld [vmem:[%s2889 + $0x122] sm:$0xff]
        %v3691 = vld [vmem:[%s2889 + $0x12a] sm:$0xff]
        %v3692 = vld [vmem:[%s2889 + $0x13a] sm:$0xff]
        %v3693 = vld [vmem:[%s2889 + $0x142] sm:$0xff]
        %v3694 = vld [vmem:[%s2889 + $0x152] sm:$0xff]
        %v3695 = vld [vmem:[%s2889 + $0x15a] sm:$0xff]
        %v3696 = vld [vmem:[%s2889 + $0x16a] sm:$0xff]
        %v3697 = vld [vmem:[%s2889 + $0x172] sm:$0xff]
        %s3698 = scalar_lea.vmem %s5, 80
        %v3699 = vld [vmem:[%s3698] sm:$0xff]
        %v3700 = vld [vmem:[%s3698 + $0x8] sm:$0xff]
        %v3702 = vsel %vm412, %v3666, 0
        %v3705 = vsel %vm412, %v3667, 0
        %v3708 = vsel %vm412, %v3668, 0
        %v3711 = vsel %vm412, %v3669, 0
        %v3714 = vsel %vm412, %v3670, 0
        %v3717 = vsel %vm412, %v3671, 0
        %v3720 = vsel %vm412, %v3672, 0
        %v3723 = vsel %vm412, %v3673, 0
        %v3726 = vsel %vm412, %v3674, 0
        %v3729 = vsel %vm412, %v3675, 0
        %v3732 = vsel %vm412, %v3676, 0
        %v3735 = vsel %vm412, %v3677, 0
        %v3738 = vsel %vm412, %v3678, 0
        %v3741 = vsel %vm412, %v3679, 0
        %v3744 = vsel %vm412, %v3680, 0
        %v3747 = vsel %vm412, %v3681, 0
        %v3750 = vsel %vm412, %v3682, 0
        %v3753 = vsel %vm412, %v3683, 0
        %v3756 = vsel %vm412, %v3684, 0
        %v3759 = vsel %vm412, %v3685, 0
        %v3762 = vsel %vm412, %v3686, 0
        %v3765 = vsel %vm412, %v3687, 0
        %v3768 = vsel %vm412, %v3688, 0
        %v3771 = vsel %vm412, %v3689, 0
        %v3774 = vsel %vm412, %v3690, 0
        %v3777 = vsel %vm412, %v3691, 0
        %v3780 = vsel %vm412, %v3692, 0
        %v3783 = vsel %vm412, %v3693, 0
        %v3786 = vsel %vm412, %v3694, 0
        %v3789 = vsel %vm412, %v3695, 0
        %v3792 = vsel %vm412, %v3696, 0
        %v3795 = vsel %vm412, %v3697, 0
        %3797 = vmatprep.subr.mxu0 0.0
        %3798 = vmatpush1.msra.mxu0 0.0
        %3799 = vmatprep.subr.mxu0 0.0
        %3800 = vmatpush1.msra.mxu0 0.0
        %3801 = vmatprep.subr.mxu0 0.0
        %3802 = vmatpush1.msra.mxu0 0.0
        %3803 = vmatprep.subr.mxu0 0.0
        %3804 = vmatpush1.msra.mxu0 0.0
        %3805 = vmatprep.subr.mxu0 0.0
        %3806 = vmatpush1.msra.mxu0 0.0
        %3807 = vmatprep.subr.mxu0 0.0
        %3808 = vmatpush1.msra.mxu0 0.0
        %3809 = vmatprep.subr.mxu0 0.0
        %3810 = vmatpush1.msra.mxu0 0.0
        %3811 = vmatprep.subr.mxu0 0.0
        %3812 = vmatpush1.msra.mxu0 0.0
        %3813 = vmatprep.subr.mxu0 0.0
        %3814 = vmatpush1.msra.mxu0 0.0
        %3815 = vmatprep.subr.mxu0 0.0
        %3816 = vmatpush1.msra.mxu0 0.0
        %3817 = vmatprep.subr.mxu0 0.0
        %3818 = vmatpush1.msra.mxu0 0.0
        %3819 = vmatprep.subr.mxu0 0.0
        %3820 = vmatpush1.msra.mxu0 0.0
        %3821 = vmatprep.subr.mxu0 0.0
        %3822 = vmatpush1.msra.mxu0 0.0
        %3823 = vmatprep.subr.mxu0 0.0
        %3824 = vmatpush1.msra.mxu0 0.0
        %3825 = vmatprep.subr.mxu0 0.0
        %3826 = vmatpush1.msra.mxu0 %v3700
        %3827 = vmatprep.subr.mxu0 0.0
        %3828 = vmatpush1.msra.mxu0 %v3699
        %3829 = vmatprep.subr.mxu0 0.0
        %3830 = vmatpush2.msra.mxu0 0.0
        %3831 = vmatprep.subr.mxu0 0.0
        %3832 = vmatpush2.msra.mxu0 0.0
        %3833 = vmatprep.subr.mxu0 0.0
        %3834 = vmatpush2.msra.mxu0 0.0
        %3835 = vmatprep.subr.mxu0 0.0
        %3836 = vmatpush2.msra.mxu0 0.0
        %3837 = vmatprep.subr.mxu0 0.0
        %3838 = vmatpush2.msra.mxu0 0.0
        %3839 = vmatprep.subr.mxu0 0.0
        %3840 = vmatpush2.msra.mxu0 0.0
        %3841 = vmatprep.subr.mxu0 0.0
        %3842 = vmatpush2.msra.mxu0 0.0
        %3843 = vmatprep.subr.mxu0 0.0
        %3844 = vmatpush2.msra.mxu0 0.0
        %3845 = vmatprep.subr.mxu0 0.0
        %3846 = vmatpush2.msra.mxu0 0.0
        %3847 = vmatprep.subr.mxu0 0.0
        %3848 = vmatpush2.msra.mxu0 0.0
        %3849 = vmatprep.subr.mxu0 0.0
        %3850 = vmatpush2.msra.mxu0 0.0
        %3851 = vmatprep.subr.mxu0 0.0
        %3852 = vmatpush2.msra.mxu0 0.0
        %3853 = vmatprep.subr.mxu0 0.0
        %3854 = vmatpush2.msra.mxu0 0.0
        %3855 = vmatprep.subr.mxu0 0.0
        %3856 = vmatpush2.msra.mxu0 0.0
        %3857 = vmatprep.subr.mxu0 0.0
        %3858 = vmatpush2.msra.mxu0 0.0
        %3859 = vmatprep.subr.mxu0 0.0
        %3860 = vmatpush2.msra.mxu0 0.0
        %3861 = vmatprep.mubr.f32.mxu0 0.0
        %3862 = vmatmul.mubr.f32.gmra.mxu0 %v3702
        %v3863 = vpop.f32.mrf.mxu0
        %v3864 = vadd.f32 0.0, %v3863
        %v3865 = vpop.f32.mrf.mxu0
        %3866 = vmatprep.mubr.f32.mxu0 0.0
        %3867 = vmatmul.mubr.f32.gmra.mxu0 %v3705
        %v3868 = vpop.f32.mrf.mxu0
        %v3869 = vadd.f32 0.0, %v3868
        %v3870 = vpop.f32.mrf.mxu0
        %3871 = vmatprep.mubr.f32.mxu0 0.0
        %3872 = vmatmul.mubr.f32.gmra.mxu0 %v3708
        %v3873 = vpop.f32.mrf.mxu0
        %v3874 = vadd.f32 0.0, %v3873
        %v3875 = vpop.f32.mrf.mxu0
        %3876 = vmatprep.mubr.f32.mxu0 0.0
        %3877 = vmatmul.mubr.f32.gmra.mxu0 %v3711
        %v3878 = vpop.f32.mrf.mxu0
        %v3879 = vadd.f32 0.0, %v3878
        %v3880 = vpop.f32.mrf.mxu0
        %3881 = vmatprep.mubr.f32.mxu0 0.0
        %3882 = vmatmul.mubr.f32.gmra.mxu0 %v3714
        %v3883 = vpop.f32.mrf.mxu0
        %v3884 = vadd.f32 0.0, %v3883
        %v3885 = vpop.f32.mrf.mxu0
        %3886 = vmatprep.mubr.f32.mxu0 0.0
        %3887 = vmatmul.mubr.f32.gmra.mxu0 %v3717
        %v3888 = vpop.f32.mrf.mxu0
        %v3889 = vadd.f32 0.0, %v3888
        %v3890 = vpop.f32.mrf.mxu0
        %3891 = vmatprep.mubr.f32.mxu0 0.0
        %3892 = vmatmul.mubr.f32.gmra.mxu0 %v3720
        %v3893 = vpop.f32.mrf.mxu0
        %v3894 = vadd.f32 0.0, %v3893
        %v3895 = vpop.f32.mrf.mxu0
        %3896 = vmatprep.mubr.f32.mxu0 0.0
        %3897 = vmatmul.mubr.f32.gmra.mxu0 %v3723
        %v3898 = vpop.f32.mrf.mxu0
        %v3899 = vadd.f32 0.0, %v3898
        %v3900 = vpop.f32.mrf.mxu0
        %3901 = vmatprep.mubr.f32.mxu0 0.0
        %3902 = vmatmul.mubr.f32.gmra.mxu0 %v3726
        %v3903 = vpop.f32.mrf.mxu0
        %v3904 = vadd.f32 0.0, %v3903
        %v3905 = vpop.f32.mrf.mxu0
        %3906 = vmatprep.mubr.f32.mxu0 0.0
        %3907 = vmatmul.mubr.f32.gmra.mxu0 %v3729
        %v3908 = vpop.f32.mrf.mxu0
        %v3909 = vadd.f32 0.0, %v3908
        %v3910 = vpop.f32.mrf.mxu0
        %3911 = vmatprep.mubr.f32.mxu0 0.0
        %3912 = vmatmul.mubr.f32.gmra.mxu0 %v3732
        %v3913 = vpop.f32.mrf.mxu0
        %v3914 = vadd.f32 0.0, %v3913
        %v3915 = vpop.f32.mrf.mxu0
        %3916 = vmatprep.mubr.f32.mxu0 0.0
        %3917 = vmatmul.mubr.f32.gmra.mxu0 %v3735
        %v3918 = vpop.f32.mrf.mxu0
        %v3919 = vadd.f32 0.0, %v3918
        %v3920 = vpop.f32.mrf.mxu0
        %3921 = vmatprep.mubr.f32.mxu0 0.0
        %3922 = vmatmul.mubr.f32.gmra.mxu0 %v3738
        %v3923 = vpop.f32.mrf.mxu0
        %v3924 = vadd.f32 0.0, %v3923
        %v3925 = vpop.f32.mrf.mxu0
        %3926 = vmatprep.mubr.f32.mxu0 0.0
        %3927 = vmatmul.mubr.f32.gmra.mxu0 %v3741
        %v3928 = vpop.f32.mrf.mxu0
        %v3929 = vadd.f32 0.0, %v3928
        %v3930 = vpop.f32.mrf.mxu0
        %3931 = vmatprep.mubr.f32.mxu0 0.0
        %3932 = vmatmul.mubr.f32.gmra.mxu0 %v3744
        %v3933 = vpop.f32.mrf.mxu0
        %v3934 = vadd.f32 0.0, %v3933
        %v3935 = vpop.f32.mrf.mxu0
        %3936 = vmatprep.mubr.f32.mxu0 0.0
        %3937 = vmatmul.mubr.f32.gmra.mxu0 %v3747
        %v3938 = vpop.f32.mrf.mxu0
        %v3939 = vadd.f32 0.0, %v3938
        %v3940 = vpop.f32.mrf.mxu0
        %3941 = vmatprep.mubr.f32.mxu0 0.0
        %3942 = vmatmul.mubr.f32.gmra.mxu0 %v3750
        %v3943 = vpop.f32.mrf.mxu0
        %v3944 = vadd.f32 0.0, %v3943
        %v3945 = vpop.f32.mrf.mxu0
        %3946 = vmatprep.mubr.f32.mxu0 0.0
        %3947 = vmatmul.mubr.f32.gmra.mxu0 %v3753
        %v3948 = vpop.f32.mrf.mxu0
        %v3949 = vadd.f32 0.0, %v3948
        %v3950 = vpop.f32.mrf.mxu0
        %3951 = vmatprep.mubr.f32.mxu0 0.0
        %3952 = vmatmul.mubr.f32.gmra.mxu0 %v3756
        %v3953 = vpop.f32.mrf.mxu0
        %v3954 = vadd.f32 0.0, %v3953
        %v3955 = vpop.f32.mrf.mxu0
        %3956 = vmatprep.mubr.f32.mxu0 0.0
        %3957 = vmatmul.mubr.f32.gmra.mxu0 %v3759
        %v3958 = vpop.f32.mrf.mxu0
        %v3959 = vadd.f32 0.0, %v3958
        %v3960 = vpop.f32.mrf.mxu0
        %3961 = vmatprep.mubr.f32.mxu0 0.0
        %3962 = vmatmul.mubr.f32.gmra.mxu0 %v3762
        %v3963 = vpop.f32.mrf.mxu0
        %v3964 = vadd.f32 0.0, %v3963
        %v3965 = vpop.f32.mrf.mxu0
        %3966 = vmatprep.mubr.f32.mxu0 0.0
        %3967 = vmatmul.mubr.f32.gmra.mxu0 %v3765
        %v3968 = vpop.f32.mrf.mxu0
        %v3969 = vadd.f32 0.0, %v3968
        %v3970 = vpop.f32.mrf.mxu0
        %3971 = vmatprep.mubr.f32.mxu0 0.0
        %3972 = vmatmul.mubr.f32.gmra.mxu0 %v3768
        %v3973 = vpop.f32.mrf.mxu0
        %v3974 = vadd.f32 0.0, %v3973
        %v3975 = vpop.f32.mrf.mxu0
        %3976 = vmatprep.mubr.f32.mxu0 0.0
        %3977 = vmatmul.mubr.f32.gmra.mxu0 %v3771
        %v3978 = vpop.f32.mrf.mxu0
        %v3979 = vadd.f32 0.0, %v3978
        %v3980 = vpop.f32.mrf.mxu0
        %3981 = vmatprep.mubr.f32.mxu0 0.0
        %3982 = vmatmul.mubr.f32.gmra.mxu0 %v3774
        %v3983 = vpop.f32.mrf.mxu0
        %v3984 = vadd.f32 0.0, %v3983
        %v3985 = vpop.f32.mrf.mxu0
        %3986 = vmatprep.mubr.f32.mxu0 0.0
        %3987 = vmatmul.mubr.f32.gmra.mxu0 %v3777
        %v3988 = vpop.f32.mrf.mxu0
        %v3989 = vadd.f32 0.0, %v3988
        %v3990 = vpop.f32.mrf.mxu0
        %3991 = vmatprep.mubr.f32.mxu0 0.0
        %3992 = vmatmul.mubr.f32.gmra.mxu0 %v3780
        %v3993 = vpop.f32.mrf.mxu0
        %v3994 = vadd.f32 0.0, %v3993
        %v3995 = vpop.f32.mrf.mxu0
        %3996 = vmatprep.mubr.f32.mxu0 0.0
        %3997 = vmatmul.mubr.f32.gmra.mxu0 %v3783
        %v3998 = vpop.f32.mrf.mxu0
        %v3999 = vadd.f32 0.0, %v3998
        %v4000 = vpop.f32.mrf.mxu0
        %4001 = vmatprep.mubr.f32.mxu0 0.0
        %4002 = vmatmul.mubr.f32.gmra.mxu0 %v3786
        %v4003 = vpop.f32.mrf.mxu0
        %v4004 = vadd.f32 0.0, %v4003
        %v4005 = vpop.f32.mrf.mxu0
        %4006 = vmatprep.mubr.f32.mxu0 0.0
        %4007 = vmatmul.mubr.f32.gmra.mxu0 %v3789
        %v4008 = vpop.f32.mrf.mxu0
        %v4009 = vadd.f32 0.0, %v4008
        %v4010 = vpop.f32.mrf.mxu0
        %4011 = vmatprep.mubr.f32.mxu0 0.0
        %4012 = vmatmul.mubr.f32.gmra.mxu0 %v3792
        %v4013 = vpop.f32.mrf.mxu0
        %v4014 = vadd.f32 0.0, %v4013
        %v4015 = vpop.f32.mrf.mxu0
        %4016 = vmatprep.mubr.f32.mxu0 0.0
        %4017 = vmatmul.mubr.f32.gmra.mxu0 %v3795
        %v4018 = vpop.f32.mrf.mxu0
        %v4019 = vadd.f32 0.0, %v4018
        %v4020 = vpop.f32.mrf.mxu0
        %4021 = vdwg.mxu0
        %v4022 = vadd.f32 %v3634, %v3864
        %v4023 = vadd.f32 %v3635, %v3869
        %v4024 = vadd.f32 %v3636, %v3874
        %v4025 = vadd.f32 %v3637, %v3879
        %v4026 = vadd.f32 %v3638, %v3884
        %v4027 = vadd.f32 %v3639, %v3889
        %v4028 = vadd.f32 %v3640, %v3894
        %v4029 = vadd.f32 %v3641, %v3899
        %v4030 = vadd.f32 %v3642, %v3904
        %v4031 = vadd.f32 %v3643, %v3909
        %v4032 = vadd.f32 %v3644, %v3914
        %v4033 = vadd.f32 %v3645, %v3919
        %v4034 = vadd.f32 %v3646, %v3924
        %v4035 = vadd.f32 %v3647, %v3929
        %v4036 = vadd.f32 %v3648, %v3934
        %v4037 = vadd.f32 %v3649, %v3939
        %v4038 = vadd.f32 %v3650, %v3944
        %v4039 = vadd.f32 %v3651, %v3949
        %v4040 = vadd.f32 %v3652, %v3954
        %v4041 = vadd.f32 %v3653, %v3959
        %v4042 = vadd.f32 %v3654, %v3964
        %v4043 = vadd.f32 %v3655, %v3969
        %v4044 = vadd.f32 %v3656, %v3974
        %v4045 = vadd.f32 %v3657, %v3979
        %v4046 = vadd.f32 %v3658, %v3984
        %v4047 = vadd.f32 %v3659, %v3989
        %v4048 = vadd.f32 %v3660, %v3994
        %v4049 = vadd.f32 %v3661, %v3999
        %v4050 = vadd.f32 %v3662, %v4004
        %v4051 = vadd.f32 %v3663, %v4009
        %v4052 = vadd.f32 %v3664, %v4014
        %v4053 = vadd.f32 %v3665, %v4019
        %s4054 = scalar_lea.vmem [#allocation2], 48
        %v4055 = vld [vmem:[%s4054] sm:$0xff]
        %v4056 = vld [vmem:[%s4054 + $0x8] sm:$0xff]
        %v4057 = vld [vmem:[%s4054 + $0x18] sm:$0xff]
        %v4058 = vld [vmem:[%s4054 + $0x20] sm:$0xff]
        %v4059 = vld [vmem:[%s4054 + $0x30] sm:$0xff]
        %v4060 = vld [vmem:[%s4054 + $0x38] sm:$0xff]
        %v4061 = vld [vmem:[%s4054 + $0x48] sm:$0xff]
        %v4062 = vld [vmem:[%s4054 + $0x50] sm:$0xff]
        %v4063 = vld [vmem:[%s4054 + $0x60] sm:$0xff]
        %v4064 = vld [vmem:[%s4054 + $0x68] sm:$0xff]
        %v4065 = vld [vmem:[%s4054 + $0x78] sm:$0xff]
        %v4066 = vld [vmem:[%s4054 + $0x80] sm:$0xff]
        %v4067 = vld [vmem:[%s4054 + $0x90] sm:$0xff]
        %v4068 = vld [vmem:[%s4054 + $0x98] sm:$0xff]
        %v4069 = vld [vmem:[%s4054 + $0xa8] sm:$0xff]
        %v4070 = vld [vmem:[%s4054 + $0xb0] sm:$0xff]
        %v4071 = vld [vmem:[%s4054 + $0xc0] sm:$0xff]
        %v4072 = vld [vmem:[%s4054 + $0xc8] sm:$0xff]
        %v4073 = vld [vmem:[%s4054 + $0xd8] sm:$0xff]
        %v4074 = vld [vmem:[%s4054 + $0xe0] sm:$0xff]
        %v4075 = vld [vmem:[%s4054 + $0xf0] sm:$0xff]
        %v4076 = vld [vmem:[%s4054 + $0xf8] sm:$0xff]
        %v4077 = vld [vmem:[%s4054 + $0x108] sm:$0xff]
        %v4078 = vld [vmem:[%s4054 + $0x110] sm:$0xff]
        %v4079 = vld [vmem:[%s4054 + $0x120] sm:$0xff]
        %v4080 = vld [vmem:[%s4054 + $0x128] sm:$0xff]
        %v4081 = vld [vmem:[%s4054 + $0x138] sm:$0xff]
        %v4082 = vld [vmem:[%s4054 + $0x140] sm:$0xff]
        %v4083 = vld [vmem:[%s4054 + $0x150] sm:$0xff]
        %v4084 = vld [vmem:[%s4054 + $0x158] sm:$0xff]
        %v4085 = vld [vmem:[%s4054 + $0x168] sm:$0xff]
        %v4086 = vld [vmem:[%s4054 + $0x170] sm:$0xff]
        %s4087 = scalar_lea.vmem %s5, 96
        %v4088 = vld [vmem:[%s4087] sm:$0xff]
        %v4089 = vld [vmem:[%s4087 + $0x8] sm:$0xff]
        %v4091 = vsel %vm412, %v4055, 0
        %v4094 = vsel %vm412, %v4056, 0
        %v4097 = vsel %vm412, %v4057, 0
        %v4100 = vsel %vm412, %v4058, 0
        %v4103 = vsel %vm412, %v4059, 0
        %v4106 = vsel %vm412, %v4060, 0
        %v4109 = vsel %vm412, %v4061, 0
        %v4112 = vsel %vm412, %v4062, 0
        %v4115 = vsel %vm412, %v4063, 0
        %v4118 = vsel %vm412, %v4064, 0
        %v4121 = vsel %vm412, %v4065, 0
        %v4124 = vsel %vm412, %v4066, 0
        %v4127 = vsel %vm412, %v4067, 0
        %v4130 = vsel %vm412, %v4068, 0
        %v4133 = vsel %vm412, %v4069, 0
        %v4136 = vsel %vm412, %v4070, 0
        %v4139 = vsel %vm412, %v4071, 0
        %v4142 = vsel %vm412, %v4072, 0
        %v4145 = vsel %vm412, %v4073, 0
        %v4148 = vsel %vm412, %v4074, 0
        %v4151 = vsel %vm412, %v4075, 0
        %v4154 = vsel %vm412, %v4076, 0
        %v4157 = vsel %vm412, %v4077, 0
        %v4160 = vsel %vm412, %v4078, 0
        %v4163 = vsel %vm412, %v4079, 0
        %v4166 = vsel %vm412, %v4080, 0
        %v4169 = vsel %vm412, %v4081, 0
        %v4172 = vsel %vm412, %v4082, 0
        %v4175 = vsel %vm412, %v4083, 0
        %v4178 = vsel %vm412, %v4084, 0
        %v4181 = vsel %vm412, %v4085, 0
        %v4184 = vsel %vm412, %v4086, 0
        %4186 = vmatprep.subr.mxu0 0.0
        %4187 = vmatpush1.msra.mxu0 0.0
        %4188 = vmatprep.subr.mxu0 0.0
        %4189 = vmatpush1.msra.mxu0 0.0
        %4190 = vmatprep.subr.mxu0 0.0
        %4191 = vmatpush1.msra.mxu0 0.0
        %4192 = vmatprep.subr.mxu0 0.0
        %4193 = vmatpush1.msra.mxu0 0.0
        %4194 = vmatprep.subr.mxu0 0.0
        %4195 = vmatpush1.msra.mxu0 0.0
        %4196 = vmatprep.subr.mxu0 0.0
        %4197 = vmatpush1.msra.mxu0 0.0
        %4198 = vmatprep.subr.mxu0 0.0
        %4199 = vmatpush1.msra.mxu0 0.0
        %4200 = vmatprep.subr.mxu0 0.0
        %4201 = vmatpush1.msra.mxu0 0.0
        %4202 = vmatprep.subr.mxu0 0.0
        %4203 = vmatpush1.msra.mxu0 0.0
        %4204 = vmatprep.subr.mxu0 0.0
        %4205 = vmatpush1.msra.mxu0 0.0
        %4206 = vmatprep.subr.mxu0 0.0
        %4207 = vmatpush1.msra.mxu0 0.0
        %4208 = vmatprep.subr.mxu0 0.0
        %4209 = vmatpush1.msra.mxu0 0.0
        %4210 = vmatprep.subr.mxu0 0.0
        %4211 = vmatpush1.msra.mxu0 0.0
        %4212 = vmatprep.subr.mxu0 0.0
        %4213 = vmatpush1.msra.mxu0 0.0
        %4214 = vmatprep.subr.mxu0 0.0
        %4215 = vmatpush1.msra.mxu0 %v4089
        %4216 = vmatprep.subr.mxu0 0.0
        %4217 = vmatpush1.msra.mxu0 %v4088
        %4218 = vmatprep.subr.mxu0 0.0
        %4219 = vmatpush2.msra.mxu0 0.0
        %4220 = vmatprep.subr.mxu0 0.0
        %4221 = vmatpush2.msra.mxu0 0.0
        %4222 = vmatprep.subr.mxu0 0.0
        %4223 = vmatpush2.msra.mxu0 0.0
        %4224 = vmatprep.subr.mxu0 0.0
        %4225 = vmatpush2.msra.mxu0 0.0
        %4226 = vmatprep.subr.mxu0 0.0
        %4227 = vmatpush2.msra.mxu0 0.0
        %4228 = vmatprep.subr.mxu0 0.0
        %4229 = vmatpush2.msra.mxu0 0.0
        %4230 = vmatprep.subr.mxu0 0.0
        %4231 = vmatpush2.msra.mxu0 0.0
        %4232 = vmatprep.subr.mxu0 0.0
        %4233 = vmatpush2.msra.mxu0 0.0
        %4234 = vmatprep.subr.mxu0 0.0
        %4235 = vmatpush2.msra.mxu0 0.0
        %4236 = vmatprep.subr.mxu0 0.0
        %4237 = vmatpush2.msra.mxu0 0.0
        %4238 = vmatprep.subr.mxu0 0.0
        %4239 = vmatpush2.msra.mxu0 0.0
        %4240 = vmatprep.subr.mxu0 0.0
        %4241 = vmatpush2.msra.mxu0 0.0
        %4242 = vmatprep.subr.mxu0 0.0
        %4243 = vmatpush2.msra.mxu0 0.0
        %4244 = vmatprep.subr.mxu0 0.0
        %4245 = vmatpush2.msra.mxu0 0.0
        %4246 = vmatprep.subr.mxu0 0.0
        %4247 = vmatpush2.msra.mxu0 0.0
        %4248 = vmatprep.subr.mxu0 0.0
        %4249 = vmatpush2.msra.mxu0 0.0
        %4250 = vmatprep.mubr.f32.mxu0 0.0
        %4251 = vmatmul.mubr.f32.gmra.mxu0 %v4091
        %v4252 = vpop.f32.mrf.mxu0
        %v4253 = vadd.f32 0.0, %v4252
        %v4254 = vpop.f32.mrf.mxu0
        %4255 = vmatprep.mubr.f32.mxu0 0.0
        %4256 = vmatmul.mubr.f32.gmra.mxu0 %v4094
        %v4257 = vpop.f32.mrf.mxu0
        %v4258 = vadd.f32 0.0, %v4257
        %v4259 = vpop.f32.mrf.mxu0
        %4260 = vmatprep.mubr.f32.mxu0 0.0
        %4261 = vmatmul.mubr.f32.gmra.mxu0 %v4097
        %v4262 = vpop.f32.mrf.mxu0
        %v4263 = vadd.f32 0.0, %v4262
        %v4264 = vpop.f32.mrf.mxu0
        %4265 = vmatprep.mubr.f32.mxu0 0.0
        %4266 = vmatmul.mubr.f32.gmra.mxu0 %v4100
        %v4267 = vpop.f32.mrf.mxu0
        %v4268 = vadd.f32 0.0, %v4267
        %v4269 = vpop.f32.mrf.mxu0
        %4270 = vmatprep.mubr.f32.mxu0 0.0
        %4271 = vmatmul.mubr.f32.gmra.mxu0 %v4103
        %v4272 = vpop.f32.mrf.mxu0
        %v4273 = vadd.f32 0.0, %v4272
        %v4274 = vpop.f32.mrf.mxu0
        %4275 = vmatprep.mubr.f32.mxu0 0.0
        %4276 = vmatmul.mubr.f32.gmra.mxu0 %v4106
        %v4277 = vpop.f32.mrf.mxu0
        %v4278 = vadd.f32 0.0, %v4277
        %v4279 = vpop.f32.mrf.mxu0
        %4280 = vmatprep.mubr.f32.mxu0 0.0
        %4281 = vmatmul.mubr.f32.gmra.mxu0 %v4109
        %v4282 = vpop.f32.mrf.mxu0
        %v4283 = vadd.f32 0.0, %v4282
        %v4284 = vpop.f32.mrf.mxu0
        %4285 = vmatprep.mubr.f32.mxu0 0.0
        %4286 = vmatmul.mubr.f32.gmra.mxu0 %v4112
        %v4287 = vpop.f32.mrf.mxu0
        %v4288 = vadd.f32 0.0, %v4287
        %v4289 = vpop.f32.mrf.mxu0
        %4290 = vmatprep.mubr.f32.mxu0 0.0
        %4291 = vmatmul.mubr.f32.gmra.mxu0 %v4115
        %v4292 = vpop.f32.mrf.mxu0
        %v4293 = vadd.f32 0.0, %v4292
        %v4294 = vpop.f32.mrf.mxu0
        %4295 = vmatprep.mubr.f32.mxu0 0.0
        %4296 = vmatmul.mubr.f32.gmra.mxu0 %v4118
        %v4297 = vpop.f32.mrf.mxu0
        %v4298 = vadd.f32 0.0, %v4297
        %v4299 = vpop.f32.mrf.mxu0
        %4300 = vmatprep.mubr.f32.mxu0 0.0
        %4301 = vmatmul.mubr.f32.gmra.mxu0 %v4121
        %v4302 = vpop.f32.mrf.mxu0
        %v4303 = vadd.f32 0.0, %v4302
        %v4304 = vpop.f32.mrf.mxu0
        %4305 = vmatprep.mubr.f32.mxu0 0.0
        %4306 = vmatmul.mubr.f32.gmra.mxu0 %v4124
        %v4307 = vpop.f32.mrf.mxu0
        %v4308 = vadd.f32 0.0, %v4307
        %v4309 = vpop.f32.mrf.mxu0
        %4310 = vmatprep.mubr.f32.mxu0 0.0
        %4311 = vmatmul.mubr.f32.gmra.mxu0 %v4127
        %v4312 = vpop.f32.mrf.mxu0
        %v4313 = vadd.f32 0.0, %v4312
        %v4314 = vpop.f32.mrf.mxu0
        %4315 = vmatprep.mubr.f32.mxu0 0.0
        %4316 = vmatmul.mubr.f32.gmra.mxu0 %v4130
        %v4317 = vpop.f32.mrf.mxu0
        %v4318 = vadd.f32 0.0, %v4317
        %v4319 = vpop.f32.mrf.mxu0
        %4320 = vmatprep.mubr.f32.mxu0 0.0
        %4321 = vmatmul.mubr.f32.gmra.mxu0 %v4133
        %v4322 = vpop.f32.mrf.mxu0
        %v4323 = vadd.f32 0.0, %v4322
        %v4324 = vpop.f32.mrf.mxu0
        %4325 = vmatprep.mubr.f32.mxu0 0.0
        %4326 = vmatmul.mubr.f32.gmra.mxu0 %v4136
        %v4327 = vpop.f32.mrf.mxu0
        %v4328 = vadd.f32 0.0, %v4327
        %v4329 = vpop.f32.mrf.mxu0
        %4330 = vmatprep.mubr.f32.mxu0 0.0
        %4331 = vmatmul.mubr.f32.gmra.mxu0 %v4139
        %v4332 = vpop.f32.mrf.mxu0
        %v4333 = vadd.f32 0.0, %v4332
        %v4334 = vpop.f32.mrf.mxu0
        %4335 = vmatprep.mubr.f32.mxu0 0.0
        %4336 = vmatmul.mubr.f32.gmra.mxu0 %v4142
        %v4337 = vpop.f32.mrf.mxu0
        %v4338 = vadd.f32 0.0, %v4337
        %v4339 = vpop.f32.mrf.mxu0
        %4340 = vmatprep.mubr.f32.mxu0 0.0
        %4341 = vmatmul.mubr.f32.gmra.mxu0 %v4145
        %v4342 = vpop.f32.mrf.mxu0
        %v4343 = vadd.f32 0.0, %v4342
        %v4344 = vpop.f32.mrf.mxu0
        %4345 = vmatprep.mubr.f32.mxu0 0.0
        %4346 = vmatmul.mubr.f32.gmra.mxu0 %v4148
        %v4347 = vpop.f32.mrf.mxu0
        %v4348 = vadd.f32 0.0, %v4347
        %v4349 = vpop.f32.mrf.mxu0
        %4350 = vmatprep.mubr.f32.mxu0 0.0
        %4351 = vmatmul.mubr.f32.gmra.mxu0 %v4151
        %v4352 = vpop.f32.mrf.mxu0
        %v4353 = vadd.f32 0.0, %v4352
        %v4354 = vpop.f32.mrf.mxu0
        %4355 = vmatprep.mubr.f32.mxu0 0.0
        %4356 = vmatmul.mubr.f32.gmra.mxu0 %v4154
        %v4357 = vpop.f32.mrf.mxu0
        %v4358 = vadd.f32 0.0, %v4357
        %v4359 = vpop.f32.mrf.mxu0
        %4360 = vmatprep.mubr.f32.mxu0 0.0
        %4361 = vmatmul.mubr.f32.gmra.mxu0 %v4157
        %v4362 = vpop.f32.mrf.mxu0
        %v4363 = vadd.f32 0.0, %v4362
        %v4364 = vpop.f32.mrf.mxu0
        %4365 = vmatprep.mubr.f32.mxu0 0.0
        %4366 = vmatmul.mubr.f32.gmra.mxu0 %v4160
        %v4367 = vpop.f32.mrf.mxu0
        %v4368 = vadd.f32 0.0, %v4367
        %v4369 = vpop.f32.mrf.mxu0
        %4370 = vmatprep.mubr.f32.mxu0 0.0
        %4371 = vmatmul.mubr.f32.gmra.mxu0 %v4163
        %v4372 = vpop.f32.mrf.mxu0
        %v4373 = vadd.f32 0.0, %v4372
        %v4374 = vpop.f32.mrf.mxu0
        %4375 = vmatprep.mubr.f32.mxu0 0.0
        %4376 = vmatmul.mubr.f32.gmra.mxu0 %v4166
        %v4377 = vpop.f32.mrf.mxu0
        %v4378 = vadd.f32 0.0, %v4377
        %v4379 = vpop.f32.mrf.mxu0
        %4380 = vmatprep.mubr.f32.mxu0 0.0
        %4381 = vmatmul.mubr.f32.gmra.mxu0 %v4169
        %v4382 = vpop.f32.mrf.mxu0
        %v4383 = vadd.f32 0.0, %v4382
        %v4384 = vpop.f32.mrf.mxu0
        %4385 = vmatprep.mubr.f32.mxu0 0.0
        %4386 = vmatmul.mubr.f32.gmra.mxu0 %v4172
        %v4387 = vpop.f32.mrf.mxu0
        %v4388 = vadd.f32 0.0, %v4387
        %v4389 = vpop.f32.mrf.mxu0
        %4390 = vmatprep.mubr.f32.mxu0 0.0
        %4391 = vmatmul.mubr.f32.gmra.mxu0 %v4175
        %v4392 = vpop.f32.mrf.mxu0
        %v4393 = vadd.f32 0.0, %v4392
        %v4394 = vpop.f32.mrf.mxu0
        %4395 = vmatprep.mubr.f32.mxu0 0.0
        %4396 = vmatmul.mubr.f32.gmra.mxu0 %v4178
        %v4397 = vpop.f32.mrf.mxu0
        %v4398 = vadd.f32 0.0, %v4397
        %v4399 = vpop.f32.mrf.mxu0
        %4400 = vmatprep.mubr.f32.mxu0 0.0
        %4401 = vmatmul.mubr.f32.gmra.mxu0 %v4181
        %v4402 = vpop.f32.mrf.mxu0
        %v4403 = vadd.f32 0.0, %v4402
        %v4404 = vpop.f32.mrf.mxu0
        %4405 = vmatprep.mubr.f32.mxu0 0.0
        %4406 = vmatmul.mubr.f32.gmra.mxu0 %v4184
        %v4407 = vpop.f32.mrf.mxu0
        %v4408 = vadd.f32 0.0, %v4407
        %v4409 = vpop.f32.mrf.mxu0
        %4410 = vdwg.mxu0
        %v4411 = vadd.f32 %v4022, %v4253
        %v4412 = vadd.f32 %v4023, %v4258
        %v4413 = vadd.f32 %v4024, %v4263
        %v4414 = vadd.f32 %v4025, %v4268
        %v4415 = vadd.f32 %v4026, %v4273
        %v4416 = vadd.f32 %v4027, %v4278
        %v4417 = vadd.f32 %v4028, %v4283
        %v4418 = vadd.f32 %v4029, %v4288
        %v4419 = vadd.f32 %v4030, %v4293
        %v4420 = vadd.f32 %v4031, %v4298
        %v4421 = vadd.f32 %v4032, %v4303
        %v4422 = vadd.f32 %v4033, %v4308
        %v4423 = vadd.f32 %v4034, %v4313
        %v4424 = vadd.f32 %v4035, %v4318
        %v4425 = vadd.f32 %v4036, %v4323
        %v4426 = vadd.f32 %v4037, %v4328
        %v4427 = vadd.f32 %v4038, %v4333
        %v4428 = vadd.f32 %v4039, %v4338
        %v4429 = vadd.f32 %v4040, %v4343
        %v4430 = vadd.f32 %v4041, %v4348
        %v4431 = vadd.f32 %v4042, %v4353
        %v4432 = vadd.f32 %v4043, %v4358
        %v4433 = vadd.f32 %v4044, %v4363
        %v4434 = vadd.f32 %v4045, %v4368
        %v4435 = vadd.f32 %v4046, %v4373
        %v4436 = vadd.f32 %v4047, %v4378
        %v4437 = vadd.f32 %v4048, %v4383
        %v4438 = vadd.f32 %v4049, %v4388
        %v4439 = vadd.f32 %v4050, %v4393
        %v4440 = vadd.f32 %v4051, %v4398
        %v4441 = vadd.f32 %v4052, %v4403
        %v4442 = vadd.f32 %v4053, %v4408
        %v4443 = vld [vmem:[%s4054 + $0x1] sm:$0xff]
        %v4444 = vld [vmem:[%s4054 + $0x9] sm:$0xff]
        %v4445 = vld [vmem:[%s4054 + $0x19] sm:$0xff]
        %v4446 = vld [vmem:[%s4054 + $0x21] sm:$0xff]
        %v4447 = vld [vmem:[%s4054 + $0x31] sm:$0xff]
        %v4448 = vld [vmem:[%s4054 + $0x39] sm:$0xff]
        %v4449 = vld [vmem:[%s4054 + $0x49] sm:$0xff]
        %v4450 = vld [vmem:[%s4054 + $0x51] sm:$0xff]
        %v4451 = vld [vmem:[%s4054 + $0x61] sm:$0xff]
        %v4452 = vld [vmem:[%s4054 + $0x69] sm:$0xff]
        %v4453 = vld [vmem:[%s4054 + $0x79] sm:$0xff]
        %v4454 = vld [vmem:[%s4054 + $0x81] sm:$0xff]
        %v4455 = vld [vmem:[%s4054 + $0x91] sm:$0xff]
        %v4456 = vld [vmem:[%s4054 + $0x99] sm:$0xff]
        %v4457 = vld [vmem:[%s4054 + $0xa9] sm:$0xff]
        %v4458 = vld [vmem:[%s4054 + $0xb1] sm:$0xff]
        %v4459 = vld [vmem:[%s4054 + $0xc1] sm:$0xff]
        %v4460 = vld [vmem:[%s4054 + $0xc9] sm:$0xff]
        %v4461 = vld [vmem:[%s4054 + $0xd9] sm:$0xff]
        %v4462 = vld [vmem:[%s4054 + $0xe1] sm:$0xff]
        %v4463 = vld [vmem:[%s4054 + $0xf1] sm:$0xff]
        %v4464 = vld [vmem:[%s4054 + $0xf9] sm:$0xff]
        %v4465 = vld [vmem:[%s4054 + $0x109] sm:$0xff]
        %v4466 = vld [vmem:[%s4054 + $0x111] sm:$0xff]
        %v4467 = vld [vmem:[%s4054 + $0x121] sm:$0xff]
        %v4468 = vld [vmem:[%s4054 + $0x129] sm:$0xff]
        %v4469 = vld [vmem:[%s4054 + $0x139] sm:$0xff]
        %v4470 = vld [vmem:[%s4054 + $0x141] sm:$0xff]
        %v4471 = vld [vmem:[%s4054 + $0x151] sm:$0xff]
        %v4472 = vld [vmem:[%s4054 + $0x159] sm:$0xff]
        %v4473 = vld [vmem:[%s4054 + $0x169] sm:$0xff]
        %v4474 = vld [vmem:[%s4054 + $0x171] sm:$0xff]
        %s4475 = scalar_lea.vmem %s5, 112
        %v4476 = vld [vmem:[%s4475] sm:$0xff]
        %v4477 = vld [vmem:[%s4475 + $0x8] sm:$0xff]
        %v4479 = vsel %vm412, %v4443, 0
        %v4482 = vsel %vm412, %v4444, 0
        %v4485 = vsel %vm412, %v4445, 0
        %v4488 = vsel %vm412, %v4446, 0
        %v4491 = vsel %vm412, %v4447, 0
        %v4494 = vsel %vm412, %v4448, 0
        %v4497 = vsel %vm412, %v4449, 0
        %v4500 = vsel %vm412, %v4450, 0
        %v4503 = vsel %vm412, %v4451, 0
        %v4506 = vsel %vm412, %v4452, 0
        %v4509 = vsel %vm412, %v4453, 0
        %v4512 = vsel %vm412, %v4454, 0
        %v4515 = vsel %vm412, %v4455, 0
        %v4518 = vsel %vm412, %v4456, 0
        %v4521 = vsel %vm412, %v4457, 0
        %v4524 = vsel %vm412, %v4458, 0
        %v4527 = vsel %vm412, %v4459, 0
        %v4530 = vsel %vm412, %v4460, 0
        %v4533 = vsel %vm412, %v4461, 0
        %v4536 = vsel %vm412, %v4462, 0
        %v4539 = vsel %vm412, %v4463, 0
        %v4542 = vsel %vm412, %v4464, 0
        %v4545 = vsel %vm412, %v4465, 0
        %v4548 = vsel %vm412, %v4466, 0
        %v4551 = vsel %vm412, %v4467, 0
        %v4554 = vsel %vm412, %v4468, 0
        %v4557 = vsel %vm412, %v4469, 0
        %v4560 = vsel %vm412, %v4470, 0
        %v4563 = vsel %vm412, %v4471, 0
        %v4566 = vsel %vm412, %v4472, 0
        %v4569 = vsel %vm412, %v4473, 0
        %v4572 = vsel %vm412, %v4474, 0
        %4574 = vmatprep.subr.mxu0 0.0
        %4575 = vmatpush1.msra.mxu0 0.0
        %4576 = vmatprep.subr.mxu0 0.0
        %4577 = vmatpush1.msra.mxu0 0.0
        %4578 = vmatprep.subr.mxu0 0.0
        %4579 = vmatpush1.msra.mxu0 0.0
        %4580 = vmatprep.subr.mxu0 0.0
        %4581 = vmatpush1.msra.mxu0 0.0
        %4582 = vmatprep.subr.mxu0 0.0
        %4583 = vmatpush1.msra.mxu0 0.0
        %4584 = vmatprep.subr.mxu0 0.0
        %4585 = vmatpush1.msra.mxu0 0.0
        %4586 = vmatprep.subr.mxu0 0.0
        %4587 = vmatpush1.msra.mxu0 0.0
        %4588 = vmatprep.subr.mxu0 0.0
        %4589 = vmatpush1.msra.mxu0 0.0
        %4590 = vmatprep.subr.mxu0 0.0
        %4591 = vmatpush1.msra.mxu0 0.0
        %4592 = vmatprep.subr.mxu0 0.0
        %4593 = vmatpush1.msra.mxu0 0.0
        %4594 = vmatprep.subr.mxu0 0.0
        %4595 = vmatpush1.msra.mxu0 0.0
        %4596 = vmatprep.subr.mxu0 0.0
        %4597 = vmatpush1.msra.mxu0 0.0
        %4598 = vmatprep.subr.mxu0 0.0
        %4599 = vmatpush1.msra.mxu0 0.0
        %4600 = vmatprep.subr.mxu0 0.0
        %4601 = vmatpush1.msra.mxu0 0.0
        %4602 = vmatprep.subr.mxu0 0.0
        %4603 = vmatpush1.msra.mxu0 %v4477
        %4604 = vmatprep.subr.mxu0 0.0
        %4605 = vmatpush1.msra.mxu0 %v4476
        %4606 = vmatprep.subr.mxu0 0.0
        %4607 = vmatpush2.msra.mxu0 0.0
        %4608 = vmatprep.subr.mxu0 0.0
        %4609 = vmatpush2.msra.mxu0 0.0
        %4610 = vmatprep.subr.mxu0 0.0
        %4611 = vmatpush2.msra.mxu0 0.0
        %4612 = vmatprep.subr.mxu0 0.0
        %4613 = vmatpush2.msra.mxu0 0.0
        %4614 = vmatprep.subr.mxu0 0.0
        %4615 = vmatpush2.msra.mxu0 0.0
        %4616 = vmatprep.subr.mxu0 0.0
        %4617 = vmatpush2.msra.mxu0 0.0
        %4618 = vmatprep.subr.mxu0 0.0
        %4619 = vmatpush2.msra.mxu0 0.0
        %4620 = vmatprep.subr.mxu0 0.0
        %4621 = vmatpush2.msra.mxu0 0.0
        %4622 = vmatprep.subr.mxu0 0.0
        %4623 = vmatpush2.msra.mxu0 0.0
        %4624 = vmatprep.subr.mxu0 0.0
        %4625 = vmatpush2.msra.mxu0 0.0
        %4626 = vmatprep.subr.mxu0 0.0
        %4627 = vmatpush2.msra.mxu0 0.0
        %4628 = vmatprep.subr.mxu0 0.0
        %4629 = vmatpush2.msra.mxu0 0.0
        %4630 = vmatprep.subr.mxu0 0.0
        %4631 = vmatpush2.msra.mxu0 0.0
        %4632 = vmatprep.subr.mxu0 0.0
        %4633 = vmatpush2.msra.mxu0 0.0
        %4634 = vmatprep.subr.mxu0 0.0
        %4635 = vmatpush2.msra.mxu0 0.0
        %4636 = vmatprep.subr.mxu0 0.0
        %4637 = vmatpush2.msra.mxu0 0.0
        %4638 = vmatprep.mubr.f32.mxu0 0.0
        %4639 = vmatmul.mubr.f32.gmra.mxu0 %v4479
        %v4640 = vpop.f32.mrf.mxu0
        %v4641 = vadd.f32 0.0, %v4640
        %v4642 = vpop.f32.mrf.mxu0
        %4643 = vmatprep.mubr.f32.mxu0 0.0
        %4644 = vmatmul.mubr.f32.gmra.mxu0 %v4482
        %v4645 = vpop.f32.mrf.mxu0
        %v4646 = vadd.f32 0.0, %v4645
        %v4647 = vpop.f32.mrf.mxu0
        %4648 = vmatprep.mubr.f32.mxu0 0.0
        %4649 = vmatmul.mubr.f32.gmra.mxu0 %v4485
        %v4650 = vpop.f32.mrf.mxu0
        %v4651 = vadd.f32 0.0, %v4650
        %v4652 = vpop.f32.mrf.mxu0
        %4653 = vmatprep.mubr.f32.mxu0 0.0
        %4654 = vmatmul.mubr.f32.gmra.mxu0 %v4488
        %v4655 = vpop.f32.mrf.mxu0
        %v4656 = vadd.f32 0.0, %v4655
        %v4657 = vpop.f32.mrf.mxu0
        %4658 = vmatprep.mubr.f32.mxu0 0.0
        %4659 = vmatmul.mubr.f32.gmra.mxu0 %v4491
        %v4660 = vpop.f32.mrf.mxu0
        %v4661 = vadd.f32 0.0, %v4660
        %v4662 = vpop.f32.mrf.mxu0
        %4663 = vmatprep.mubr.f32.mxu0 0.0
        %4664 = vmatmul.mubr.f32.gmra.mxu0 %v4494
        %v4665 = vpop.f32.mrf.mxu0
        %v4666 = vadd.f32 0.0, %v4665
        %v4667 = vpop.f32.mrf.mxu0
        %4668 = vmatprep.mubr.f32.mxu0 0.0
        %4669 = vmatmul.mubr.f32.gmra.mxu0 %v4497
        %v4670 = vpop.f32.mrf.mxu0
        %v4671 = vadd.f32 0.0, %v4670
        %v4672 = vpop.f32.mrf.mxu0
        %4673 = vmatprep.mubr.f32.mxu0 0.0
        %4674 = vmatmul.mubr.f32.gmra.mxu0 %v4500
        %v4675 = vpop.f32.mrf.mxu0
        %v4676 = vadd.f32 0.0, %v4675
        %v4677 = vpop.f32.mrf.mxu0
        %4678 = vmatprep.mubr.f32.mxu0 0.0
        %4679 = vmatmul.mubr.f32.gmra.mxu0 %v4503
        %v4680 = vpop.f32.mrf.mxu0
        %v4681 = vadd.f32 0.0, %v4680
        %v4682 = vpop.f32.mrf.mxu0
        %4683 = vmatprep.mubr.f32.mxu0 0.0
        %4684 = vmatmul.mubr.f32.gmra.mxu0 %v4506
        %v4685 = vpop.f32.mrf.mxu0
        %v4686 = vadd.f32 0.0, %v4685
        %v4687 = vpop.f32.mrf.mxu0
        %4688 = vmatprep.mubr.f32.mxu0 0.0
        %4689 = vmatmul.mubr.f32.gmra.mxu0 %v4509
        %v4690 = vpop.f32.mrf.mxu0
        %v4691 = vadd.f32 0.0, %v4690
        %v4692 = vpop.f32.mrf.mxu0
        %4693 = vmatprep.mubr.f32.mxu0 0.0
        %4694 = vmatmul.mubr.f32.gmra.mxu0 %v4512
        %v4695 = vpop.f32.mrf.mxu0
        %v4696 = vadd.f32 0.0, %v4695
        %v4697 = vpop.f32.mrf.mxu0
        %4698 = vmatprep.mubr.f32.mxu0 0.0
        %4699 = vmatmul.mubr.f32.gmra.mxu0 %v4515
        %v4700 = vpop.f32.mrf.mxu0
        %v4701 = vadd.f32 0.0, %v4700
        %v4702 = vpop.f32.mrf.mxu0
        %4703 = vmatprep.mubr.f32.mxu0 0.0
        %4704 = vmatmul.mubr.f32.gmra.mxu0 %v4518
        %v4705 = vpop.f32.mrf.mxu0
        %v4706 = vadd.f32 0.0, %v4705
        %v4707 = vpop.f32.mrf.mxu0
        %4708 = vmatprep.mubr.f32.mxu0 0.0
        %4709 = vmatmul.mubr.f32.gmra.mxu0 %v4521
        %v4710 = vpop.f32.mrf.mxu0
        %v4711 = vadd.f32 0.0, %v4710
        %v4712 = vpop.f32.mrf.mxu0
        %4713 = vmatprep.mubr.f32.mxu0 0.0
        %4714 = vmatmul.mubr.f32.gmra.mxu0 %v4524
        %v4715 = vpop.f32.mrf.mxu0
        %v4716 = vadd.f32 0.0, %v4715
        %v4717 = vpop.f32.mrf.mxu0
        %4718 = vmatprep.mubr.f32.mxu0 0.0
        %4719 = vmatmul.mubr.f32.gmra.mxu0 %v4527
        %v4720 = vpop.f32.mrf.mxu0
        %v4721 = vadd.f32 0.0, %v4720
        %v4722 = vpop.f32.mrf.mxu0
        %4723 = vmatprep.mubr.f32.mxu0 0.0
        %4724 = vmatmul.mubr.f32.gmra.mxu0 %v4530
        %v4725 = vpop.f32.mrf.mxu0
        %v4726 = vadd.f32 0.0, %v4725
        %v4727 = vpop.f32.mrf.mxu0
        %4728 = vmatprep.mubr.f32.mxu0 0.0
        %4729 = vmatmul.mubr.f32.gmra.mxu0 %v4533
        %v4730 = vpop.f32.mrf.mxu0
        %v4731 = vadd.f32 0.0, %v4730
        %v4732 = vpop.f32.mrf.mxu0
        %4733 = vmatprep.mubr.f32.mxu0 0.0
        %4734 = vmatmul.mubr.f32.gmra.mxu0 %v4536
        %v4735 = vpop.f32.mrf.mxu0
        %v4736 = vadd.f32 0.0, %v4735
        %v4737 = vpop.f32.mrf.mxu0
        %4738 = vmatprep.mubr.f32.mxu0 0.0
        %4739 = vmatmul.mubr.f32.gmra.mxu0 %v4539
        %v4740 = vpop.f32.mrf.mxu0
        %v4741 = vadd.f32 0.0, %v4740
        %v4742 = vpop.f32.mrf.mxu0
        %4743 = vmatprep.mubr.f32.mxu0 0.0
        %4744 = vmatmul.mubr.f32.gmra.mxu0 %v4542
        %v4745 = vpop.f32.mrf.mxu0
        %v4746 = vadd.f32 0.0, %v4745
        %v4747 = vpop.f32.mrf.mxu0
        %4748 = vmatprep.mubr.f32.mxu0 0.0
        %4749 = vmatmul.mubr.f32.gmra.mxu0 %v4545
        %v4750 = vpop.f32.mrf.mxu0
        %v4751 = vadd.f32 0.0, %v4750
        %v4752 = vpop.f32.mrf.mxu0
        %4753 = vmatprep.mubr.f32.mxu0 0.0
        %4754 = vmatmul.mubr.f32.gmra.mxu0 %v4548
        %v4755 = vpop.f32.mrf.mxu0
        %v4756 = vadd.f32 0.0, %v4755
        %v4757 = vpop.f32.mrf.mxu0
        %4758 = vmatprep.mubr.f32.mxu0 0.0
        %4759 = vmatmul.mubr.f32.gmra.mxu0 %v4551
        %v4760 = vpop.f32.mrf.mxu0
        %v4761 = vadd.f32 0.0, %v4760
        %v4762 = vpop.f32.mrf.mxu0
        %4763 = vmatprep.mubr.f32.mxu0 0.0
        %4764 = vmatmul.mubr.f32.gmra.mxu0 %v4554
        %v4765 = vpop.f32.mrf.mxu0
        %v4766 = vadd.f32 0.0, %v4765
        %v4767 = vpop.f32.mrf.mxu0
        %4768 = vmatprep.mubr.f32.mxu0 0.0
        %4769 = vmatmul.mubr.f32.gmra.mxu0 %v4557
        %v4770 = vpop.f32.mrf.mxu0
        %v4771 = vadd.f32 0.0, %v4770
        %v4772 = vpop.f32.mrf.mxu0
        %4773 = vmatprep.mubr.f32.mxu0 0.0
        %4774 = vmatmul.mubr.f32.gmra.mxu0 %v4560
        %v4775 = vpop.f32.mrf.mxu0
        %v4776 = vadd.f32 0.0, %v4775
        %v4777 = vpop.f32.mrf.mxu0
        %4778 = vmatprep.mubr.f32.mxu0 0.0
        %4779 = vmatmul.mubr.f32.gmra.mxu0 %v4563
        %v4780 = vpop.f32.mrf.mxu0
        %v4781 = vadd.f32 0.0, %v4780
        %v4782 = vpop.f32.mrf.mxu0
        %4783 = vmatprep.mubr.f32.mxu0 0.0
        %4784 = vmatmul.mubr.f32.gmra.mxu0 %v4566
        %v4785 = vpop.f32.mrf.mxu0
        %v4786 = vadd.f32 0.0, %v4785
        %v4787 = vpop.f32.mrf.mxu0
        %4788 = vmatprep.mubr.f32.mxu0 0.0
        %4789 = vmatmul.mubr.f32.gmra.mxu0 %v4569
        %v4790 = vpop.f32.mrf.mxu0
        %v4791 = vadd.f32 0.0, %v4790
        %v4792 = vpop.f32.mrf.mxu0
        %4793 = vmatprep.mubr.f32.mxu0 0.0
        %4794 = vmatmul.mubr.f32.gmra.mxu0 %v4572
        %v4795 = vpop.f32.mrf.mxu0
        %v4796 = vadd.f32 0.0, %v4795
        %v4797 = vpop.f32.mrf.mxu0
        %4798 = vdwg.mxu0
        %v4799 = vadd.f32 %v4411, %v4641
        %v4800 = vadd.f32 %v4412, %v4646
        %v4801 = vadd.f32 %v4413, %v4651
        %v4802 = vadd.f32 %v4414, %v4656
        %v4803 = vadd.f32 %v4415, %v4661
        %v4804 = vadd.f32 %v4416, %v4666
        %v4805 = vadd.f32 %v4417, %v4671
        %v4806 = vadd.f32 %v4418, %v4676
        %v4807 = vadd.f32 %v4419, %v4681
        %v4808 = vadd.f32 %v4420, %v4686
        %v4809 = vadd.f32 %v4421, %v4691
        %v4810 = vadd.f32 %v4422, %v4696
        %v4811 = vadd.f32 %v4423, %v4701
        %v4812 = vadd.f32 %v4424, %v4706
        %v4813 = vadd.f32 %v4425, %v4711
        %v4814 = vadd.f32 %v4426, %v4716
        %v4815 = vadd.f32 %v4427, %v4721
        %v4816 = vadd.f32 %v4428, %v4726
        %v4817 = vadd.f32 %v4429, %v4731
        %v4818 = vadd.f32 %v4430, %v4736
        %v4819 = vadd.f32 %v4431, %v4741
        %v4820 = vadd.f32 %v4432, %v4746
        %v4821 = vadd.f32 %v4433, %v4751
        %v4822 = vadd.f32 %v4434, %v4756
        %v4823 = vadd.f32 %v4435, %v4761
        %v4824 = vadd.f32 %v4436, %v4766
        %v4825 = vadd.f32 %v4437, %v4771
        %v4826 = vadd.f32 %v4438, %v4776
        %v4827 = vadd.f32 %v4439, %v4781
        %v4828 = vadd.f32 %v4440, %v4786
        %v4829 = vadd.f32 %v4441, %v4791
        %v4830 = vadd.f32 %v4442, %v4796
        %v4831 = vld [vmem:[%s4054 + $0x2] sm:$0xff]
        %v4832 = vld [vmem:[%s4054 + $0xa] sm:$0xff]
        %v4833 = vld [vmem:[%s4054 + $0x1a] sm:$0xff]
        %v4834 = vld [vmem:[%s4054 + $0x22] sm:$0xff]
        %v4835 = vld [vmem:[%s4054 + $0x32] sm:$0xff]
        %v4836 = vld [vmem:[%s4054 + $0x3a] sm:$0xff]
        %v4837 = vld [vmem:[%s4054 + $0x4a] sm:$0xff]
        %v4838 = vld [vmem:[%s4054 + $0x52] sm:$0xff]
        %v4839 = vld [vmem:[%s4054 + $0x62] sm:$0xff]
        %v4840 = vld [vmem:[%s4054 + $0x6a] sm:$0xff]
        %v4841 = vld [vmem:[%s4054 + $0x7a] sm:$0xff]
        %v4842 = vld [vmem:[%s4054 + $0x82] sm:$0xff]
        %v4843 = vld [vmem:[%s4054 + $0x92] sm:$0xff]
        %v4844 = vld [vmem:[%s4054 + $0x9a] sm:$0xff]
        %v4845 = vld [vmem:[%s4054 + $0xaa] sm:$0xff]
        %v4846 = vld [vmem:[%s4054 + $0xb2] sm:$0xff]
        %v4847 = vld [vmem:[%s4054 + $0xc2] sm:$0xff]
        %v4848 = vld [vmem:[%s4054 + $0xca] sm:$0xff]
        %v4849 = vld [vmem:[%s4054 + $0xda] sm:$0xff]
        %v4850 = vld [vmem:[%s4054 + $0xe2] sm:$0xff]
        %v4851 = vld [vmem:[%s4054 + $0xf2] sm:$0xff]
        %v4852 = vld [vmem:[%s4054 + $0xfa] sm:$0xff]
        %v4853 = vld [vmem:[%s4054 + $0x10a] sm:$0xff]
        %v4854 = vld [vmem:[%s4054 + $0x112] sm:$0xff]
        %v4855 = vld [vmem:[%s4054 + $0x122] sm:$0xff]
        %v4856 = vld [vmem:[%s4054 + $0x12a] sm:$0xff]
        %v4857 = vld [vmem:[%s4054 + $0x13a] sm:$0xff]
        %v4858 = vld [vmem:[%s4054 + $0x142] sm:$0xff]
        %v4859 = vld [vmem:[%s4054 + $0x152] sm:$0xff]
        %v4860 = vld [vmem:[%s4054 + $0x15a] sm:$0xff]
        %v4861 = vld [vmem:[%s4054 + $0x16a] sm:$0xff]
        %v4862 = vld [vmem:[%s4054 + $0x172] sm:$0xff]
        %s4863 = scalar_lea.vmem %s5, 128
        %v4864 = vld [vmem:[%s4863] sm:$0xff]
        %v4865 = vld [vmem:[%s4863 + $0x8] sm:$0xff]
        %v4867 = vsel %vm412, %v4831, 0
        %v4870 = vsel %vm412, %v4832, 0
        %v4873 = vsel %vm412, %v4833, 0
        %v4876 = vsel %vm412, %v4834, 0
        %v4879 = vsel %vm412, %v4835, 0
        %v4882 = vsel %vm412, %v4836, 0
        %v4885 = vsel %vm412, %v4837, 0
        %v4888 = vsel %vm412, %v4838, 0
        %v4891 = vsel %vm412, %v4839, 0
        %v4894 = vsel %vm412, %v4840, 0
        %v4897 = vsel %vm412, %v4841, 0
        %v4900 = vsel %vm412, %v4842, 0
        %v4903 = vsel %vm412, %v4843, 0
        %v4906 = vsel %vm412, %v4844, 0
        %v4909 = vsel %vm412, %v4845, 0
        %v4912 = vsel %vm412, %v4846, 0
        %v4915 = vsel %vm412, %v4847, 0
        %v4918 = vsel %vm412, %v4848, 0
        %v4921 = vsel %vm412, %v4849, 0
        %v4924 = vsel %vm412, %v4850, 0
        %v4927 = vsel %vm412, %v4851, 0
        %v4930 = vsel %vm412, %v4852, 0
        %v4933 = vsel %vm412, %v4853, 0
        %v4936 = vsel %vm412, %v4854, 0
        %v4939 = vsel %vm412, %v4855, 0
        %v4942 = vsel %vm412, %v4856, 0
        %v4945 = vsel %vm412, %v4857, 0
        %v4948 = vsel %vm412, %v4858, 0
        %v4951 = vsel %vm412, %v4859, 0
        %v4954 = vsel %vm412, %v4860, 0
        %v4957 = vsel %vm412, %v4861, 0
        %v4960 = vsel %vm412, %v4862, 0
        %4962 = vmatprep.subr.mxu0 0.0
        %4963 = vmatpush1.msra.mxu0 0.0
        %4964 = vmatprep.subr.mxu0 0.0
        %4965 = vmatpush1.msra.mxu0 0.0
        %4966 = vmatprep.subr.mxu0 0.0
        %4967 = vmatpush1.msra.mxu0 0.0
        %4968 = vmatprep.subr.mxu0 0.0
        %4969 = vmatpush1.msra.mxu0 0.0
        %4970 = vmatprep.subr.mxu0 0.0
        %4971 = vmatpush1.msra.mxu0 0.0
        %4972 = vmatprep.subr.mxu0 0.0
        %4973 = vmatpush1.msra.mxu0 0.0
        %4974 = vmatprep.subr.mxu0 0.0
        %4975 = vmatpush1.msra.mxu0 0.0
        %4976 = vmatprep.subr.mxu0 0.0
        %4977 = vmatpush1.msra.mxu0 0.0
        %4978 = vmatprep.subr.mxu0 0.0
        %4979 = vmatpush1.msra.mxu0 0.0
        %4980 = vmatprep.subr.mxu0 0.0
        %4981 = vmatpush1.msra.mxu0 0.0
        %4982 = vmatprep.subr.mxu0 0.0
        %4983 = vmatpush1.msra.mxu0 0.0
        %4984 = vmatprep.subr.mxu0 0.0
        %4985 = vmatpush1.msra.mxu0 0.0
        %4986 = vmatprep.subr.mxu0 0.0
        %4987 = vmatpush1.msra.mxu0 0.0
        %4988 = vmatprep.subr.mxu0 0.0
        %4989 = vmatpush1.msra.mxu0 0.0
        %4990 = vmatprep.subr.mxu0 0.0
        %4991 = vmatpush1.msra.mxu0 %v4865
        %4992 = vmatprep.subr.mxu0 0.0
        %4993 = vmatpush1.msra.mxu0 %v4864
        %4994 = vmatprep.subr.mxu0 0.0
        %4995 = vmatpush2.msra.mxu0 0.0
        %4996 = vmatprep.subr.mxu0 0.0
        %4997 = vmatpush2.msra.mxu0 0.0
        %4998 = vmatprep.subr.mxu0 0.0
        %4999 = vmatpush2.msra.mxu0 0.0
        %5000 = vmatprep.subr.mxu0 0.0
        %5001 = vmatpush2.msra.mxu0 0.0
        %5002 = vmatprep.subr.mxu0 0.0
        %5003 = vmatpush2.msra.mxu0 0.0
        %5004 = vmatprep.subr.mxu0 0.0
        %5005 = vmatpush2.msra.mxu0 0.0
        %5006 = vmatprep.subr.mxu0 0.0
        %5007 = vmatpush2.msra.mxu0 0.0
        %5008 = vmatprep.subr.mxu0 0.0
        %5009 = vmatpush2.msra.mxu0 0.0
        %5010 = vmatprep.subr.mxu0 0.0
        %5011 = vmatpush2.msra.mxu0 0.0
        %5012 = vmatprep.subr.mxu0 0.0
        %5013 = vmatpush2.msra.mxu0 0.0
        %5014 = vmatprep.subr.mxu0 0.0
        %5015 = vmatpush2.msra.mxu0 0.0
        %5016 = vmatprep.subr.mxu0 0.0
        %5017 = vmatpush2.msra.mxu0 0.0
        %5018 = vmatprep.subr.mxu0 0.0
        %5019 = vmatpush2.msra.mxu0 0.0
        %5020 = vmatprep.subr.mxu0 0.0
        %5021 = vmatpush2.msra.mxu0 0.0
        %5022 = vmatprep.subr.mxu0 0.0
        %5023 = vmatpush2.msra.mxu0 0.0
        %5024 = vmatprep.subr.mxu0 0.0
        %5025 = vmatpush2.msra.mxu0 0.0
        %5026 = vmatprep.mubr.f32.mxu0 0.0
        %5027 = vmatmul.mubr.f32.gmra.mxu0 %v4867
        %v5028 = vpop.f32.mrf.mxu0
        %v5029 = vadd.f32 0.0, %v5028
        %v5030 = vpop.f32.mrf.mxu0
        %5031 = vmatprep.mubr.f32.mxu0 0.0
        %5032 = vmatmul.mubr.f32.gmra.mxu0 %v4870
        %v5033 = vpop.f32.mrf.mxu0
        %v5034 = vadd.f32 0.0, %v5033
        %v5035 = vpop.f32.mrf.mxu0
        %5036 = vmatprep.mubr.f32.mxu0 0.0
        %5037 = vmatmul.mubr.f32.gmra.mxu0 %v4873
        %v5038 = vpop.f32.mrf.mxu0
        %v5039 = vadd.f32 0.0, %v5038
        %v5040 = vpop.f32.mrf.mxu0
        %5041 = vmatprep.mubr.f32.mxu0 0.0
        %5042 = vmatmul.mubr.f32.gmra.mxu0 %v4876
        %v5043 = vpop.f32.mrf.mxu0
        %v5044 = vadd.f32 0.0, %v5043
        %v5045 = vpop.f32.mrf.mxu0
        %5046 = vmatprep.mubr.f32.mxu0 0.0
        %5047 = vmatmul.mubr.f32.gmra.mxu0 %v4879
        %v5048 = vpop.f32.mrf.mxu0
        %v5049 = vadd.f32 0.0, %v5048
        %v5050 = vpop.f32.mrf.mxu0
        %5051 = vmatprep.mubr.f32.mxu0 0.0
        %5052 = vmatmul.mubr.f32.gmra.mxu0 %v4882
        %v5053 = vpop.f32.mrf.mxu0
        %v5054 = vadd.f32 0.0, %v5053
        %v5055 = vpop.f32.mrf.mxu0
        %5056 = vmatprep.mubr.f32.mxu0 0.0
        %5057 = vmatmul.mubr.f32.gmra.mxu0 %v4885
        %v5058 = vpop.f32.mrf.mxu0
        %v5059 = vadd.f32 0.0, %v5058
        %v5060 = vpop.f32.mrf.mxu0
        %5061 = vmatprep.mubr.f32.mxu0 0.0
        %5062 = vmatmul.mubr.f32.gmra.mxu0 %v4888
        %v5063 = vpop.f32.mrf.mxu0
        %v5064 = vadd.f32 0.0, %v5063
        %v5065 = vpop.f32.mrf.mxu0
        %5066 = vmatprep.mubr.f32.mxu0 0.0
        %5067 = vmatmul.mubr.f32.gmra.mxu0 %v4891
        %v5068 = vpop.f32.mrf.mxu0
        %v5069 = vadd.f32 0.0, %v5068
        %v5070 = vpop.f32.mrf.mxu0
        %5071 = vmatprep.mubr.f32.mxu0 0.0
        %5072 = vmatmul.mubr.f32.gmra.mxu0 %v4894
        %v5073 = vpop.f32.mrf.mxu0
        %v5074 = vadd.f32 0.0, %v5073
        %v5075 = vpop.f32.mrf.mxu0
        %5076 = vmatprep.mubr.f32.mxu0 0.0
        %5077 = vmatmul.mubr.f32.gmra.mxu0 %v4897
        %v5078 = vpop.f32.mrf.mxu0
        %v5079 = vadd.f32 0.0, %v5078
        %v5080 = vpop.f32.mrf.mxu0
        %5081 = vmatprep.mubr.f32.mxu0 0.0
        %5082 = vmatmul.mubr.f32.gmra.mxu0 %v4900
        %v5083 = vpop.f32.mrf.mxu0
        %v5084 = vadd.f32 0.0, %v5083
        %v5085 = vpop.f32.mrf.mxu0
        %5086 = vmatprep.mubr.f32.mxu0 0.0
        %5087 = vmatmul.mubr.f32.gmra.mxu0 %v4903
        %v5088 = vpop.f32.mrf.mxu0
        %v5089 = vadd.f32 0.0, %v5088
        %v5090 = vpop.f32.mrf.mxu0
        %5091 = vmatprep.mubr.f32.mxu0 0.0
        %5092 = vmatmul.mubr.f32.gmra.mxu0 %v4906
        %v5093 = vpop.f32.mrf.mxu0
        %v5094 = vadd.f32 0.0, %v5093
        %v5095 = vpop.f32.mrf.mxu0
        %5096 = vmatprep.mubr.f32.mxu0 0.0
        %5097 = vmatmul.mubr.f32.gmra.mxu0 %v4909
        %v5098 = vpop.f32.mrf.mxu0
        %v5099 = vadd.f32 0.0, %v5098
        %v5100 = vpop.f32.mrf.mxu0
        %5101 = vmatprep.mubr.f32.mxu0 0.0
        %5102 = vmatmul.mubr.f32.gmra.mxu0 %v4912
        %v5103 = vpop.f32.mrf.mxu0
        %v5104 = vadd.f32 0.0, %v5103
        %v5105 = vpop.f32.mrf.mxu0
        %5106 = vmatprep.mubr.f32.mxu0 0.0
        %5107 = vmatmul.mubr.f32.gmra.mxu0 %v4915
        %v5108 = vpop.f32.mrf.mxu0
        %v5109 = vadd.f32 0.0, %v5108
        %v5110 = vpop.f32.mrf.mxu0
        %5111 = vmatprep.mubr.f32.mxu0 0.0
        %5112 = vmatmul.mubr.f32.gmra.mxu0 %v4918
        %v5113 = vpop.f32.mrf.mxu0
        %v5114 = vadd.f32 0.0, %v5113
        %v5115 = vpop.f32.mrf.mxu0
        %5116 = vmatprep.mubr.f32.mxu0 0.0
        %5117 = vmatmul.mubr.f32.gmra.mxu0 %v4921
        %v5118 = vpop.f32.mrf.mxu0
        %v5119 = vadd.f32 0.0, %v5118
        %v5120 = vpop.f32.mrf.mxu0
        %5121 = vmatprep.mubr.f32.mxu0 0.0
        %5122 = vmatmul.mubr.f32.gmra.mxu0 %v4924
        %v5123 = vpop.f32.mrf.mxu0
        %v5124 = vadd.f32 0.0, %v5123
        %v5125 = vpop.f32.mrf.mxu0
        %5126 = vmatprep.mubr.f32.mxu0 0.0
        %5127 = vmatmul.mubr.f32.gmra.mxu0 %v4927
        %v5128 = vpop.f32.mrf.mxu0
        %v5129 = vadd.f32 0.0, %v5128
        %v5130 = vpop.f32.mrf.mxu0
        %5131 = vmatprep.mubr.f32.mxu0 0.0
        %5132 = vmatmul.mubr.f32.gmra.mxu0 %v4930
        %v5133 = vpop.f32.mrf.mxu0
        %v5134 = vadd.f32 0.0, %v5133
        %v5135 = vpop.f32.mrf.mxu0
        %5136 = vmatprep.mubr.f32.mxu0 0.0
        %5137 = vmatmul.mubr.f32.gmra.mxu0 %v4933
        %v5138 = vpop.f32.mrf.mxu0
        %v5139 = vadd.f32 0.0, %v5138
        %v5140 = vpop.f32.mrf.mxu0
        %5141 = vmatprep.mubr.f32.mxu0 0.0
        %5142 = vmatmul.mubr.f32.gmra.mxu0 %v4936
        %v5143 = vpop.f32.mrf.mxu0
        %v5144 = vadd.f32 0.0, %v5143
        %v5145 = vpop.f32.mrf.mxu0
        %5146 = vmatprep.mubr.f32.mxu0 0.0
        %5147 = vmatmul.mubr.f32.gmra.mxu0 %v4939
        %v5148 = vpop.f32.mrf.mxu0
        %v5149 = vadd.f32 0.0, %v5148
        %v5150 = vpop.f32.mrf.mxu0
        %5151 = vmatprep.mubr.f32.mxu0 0.0
        %5152 = vmatmul.mubr.f32.gmra.mxu0 %v4942
        %v5153 = vpop.f32.mrf.mxu0
        %v5154 = vadd.f32 0.0, %v5153
        %v5155 = vpop.f32.mrf.mxu0
        %5156 = vmatprep.mubr.f32.mxu0 0.0
        %5157 = vmatmul.mubr.f32.gmra.mxu0 %v4945
        %v5158 = vpop.f32.mrf.mxu0
        %v5159 = vadd.f32 0.0, %v5158
        %v5160 = vpop.f32.mrf.mxu0
        %5161 = vmatprep.mubr.f32.mxu0 0.0
        %5162 = vmatmul.mubr.f32.gmra.mxu0 %v4948
        %v5163 = vpop.f32.mrf.mxu0
        %v5164 = vadd.f32 0.0, %v5163
        %v5165 = vpop.f32.mrf.mxu0
        %5166 = vmatprep.mubr.f32.mxu0 0.0
        %5167 = vmatmul.mubr.f32.gmra.mxu0 %v4951
        %v5168 = vpop.f32.mrf.mxu0
        %v5169 = vadd.f32 0.0, %v5168
        %v5170 = vpop.f32.mrf.mxu0
        %5171 = vmatprep.mubr.f32.mxu0 0.0
        %5172 = vmatmul.mubr.f32.gmra.mxu0 %v4954
        %v5173 = vpop.f32.mrf.mxu0
        %v5174 = vadd.f32 0.0, %v5173
        %v5175 = vpop.f32.mrf.mxu0
        %5176 = vmatprep.mubr.f32.mxu0 0.0
        %5177 = vmatmul.mubr.f32.gmra.mxu0 %v4957
        %v5178 = vpop.f32.mrf.mxu0
        %v5179 = vadd.f32 0.0, %v5178
        %v5180 = vpop.f32.mrf.mxu0
        %5181 = vmatprep.mubr.f32.mxu0 0.0
        %5182 = vmatmul.mubr.f32.gmra.mxu0 %v4960
        %v5183 = vpop.f32.mrf.mxu0
        %v5184 = vadd.f32 0.0, %v5183
        %v5185 = vpop.f32.mrf.mxu0
        %5186 = vdwg.mxu0
        %v5187 = vadd.f32 %v4799, %v5029
        %v5188 = vadd.f32 %v4800, %v5034
        %v5189 = vadd.f32 %v4801, %v5039
        %v5190 = vadd.f32 %v4802, %v5044
        %v5191 = vadd.f32 %v4803, %v5049
        %v5192 = vadd.f32 %v4804, %v5054
        %v5193 = vadd.f32 %v4805, %v5059
        %v5194 = vadd.f32 %v4806, %v5064
        %v5195 = vadd.f32 %v4807, %v5069
        %v5196 = vadd.f32 %v4808, %v5074
        %v5197 = vadd.f32 %v4809, %v5079
        %v5198 = vadd.f32 %v4810, %v5084
        %v5199 = vadd.f32 %v4811, %v5089
        %v5200 = vadd.f32 %v4812, %v5094
        %v5201 = vadd.f32 %v4813, %v5099
        %v5202 = vadd.f32 %v4814, %v5104
        %v5203 = vadd.f32 %v4815, %v5109
        %v5204 = vadd.f32 %v4816, %v5114
        %v5205 = vadd.f32 %v4817, %v5119
        %v5206 = vadd.f32 %v4818, %v5124
        %v5207 = vadd.f32 %v4819, %v5129
        %v5208 = vadd.f32 %v4820, %v5134
        %v5209 = vadd.f32 %v4821, %v5139
        %v5210 = vadd.f32 %v4822, %v5144
        %v5211 = vadd.f32 %v4823, %v5149
        %v5212 = vadd.f32 %v4824, %v5154
        %v5213 = vadd.f32 %v4825, %v5159
        %v5214 = vadd.f32 %v4826, %v5164
        %v5215 = vadd.f32 %v4827, %v5169
        %v5216 = vadd.f32 %v4828, %v5174
        %v5217 = vadd.f32 %v4829, %v5179
        %v5218 = vadd.f32 %v4830, %v5184
        %v5219 = vld [vmem:[%s6] sm:$0x1]
        %v5221 = vlaneseq
        %v5222 = vshrl.u32 %v5221, 7
        %v5223 = vsub.s32 0, %v5222
        %v5224 = vrot.slane %v5219, %v5223
        %v5226 = vadd.f32 %v5187, %v5224
        %v5227 = vadd.f32 %v5188, %v5224
        %v5228 = vadd.f32 %v5189, %v5224
        %v5229 = vadd.f32 %v5190, %v5224
        %v5230 = vadd.f32 %v5191, %v5224
        %v5231 = vadd.f32 %v5192, %v5224
        %v5232 = vadd.f32 %v5193, %v5224
        %v5233 = vadd.f32 %v5194, %v5224
        %v5234 = vadd.f32 %v5195, %v5224
        %v5235 = vadd.f32 %v5196, %v5224
        %v5236 = vadd.f32 %v5197, %v5224
        %v5237 = vadd.f32 %v5198, %v5224
        %v5238 = vadd.f32 %v5199, %v5224
        %v5239 = vadd.f32 %v5200, %v5224
        %v5240 = vadd.f32 %v5201, %v5224
        %v5241 = vadd.f32 %v5202, %v5224
        %v5242 = vadd.f32 %v5203, %v5224
        %v5243 = vadd.f32 %v5204, %v5224
        %v5244 = vadd.f32 %v5205, %v5224
        %v5245 = vadd.f32 %v5206, %v5224
        %v5246 = vadd.f32 %v5207, %v5224
        %v5247 = vadd.f32 %v5208, %v5224
        %v5248 = vadd.f32 %v5209, %v5224
        %v5249 = vadd.f32 %v5210, %v5224
        %v5250 = vadd.f32 %v5211, %v5224
        %v5251 = vadd.f32 %v5212, %v5224
        %v5252 = vadd.f32 %v5213, %v5224
        %v5253 = vadd.f32 %v5214, %v5224
        %v5254 = vadd.f32 %v5215, %v5224
        %v5255 = vadd.f32 %v5216, %v5224
        %v5256 = vadd.f32 %v5217, %v5224
        %v5257 = vadd.f32 %v5218, %v5224
        %vm5258 = vcmask 261120
        %v5259 = vsel %vm5258, %v5226, 0.0
        %v5260 = vsel %vm5258, %v5227, 0.0
        %v5261 = vadd.f32 %v5259, %v5260
        %v5262 = vsel %vm5258, %v5228, 0.0
        %v5263 = vadd.f32 %v5261, %v5262
        %v5264 = vsel %vm5258, %v5229, 0.0
        %v5265 = vadd.f32 %v5263, %v5264
        %v5266 = vsel %vm5258, %v5230, 0.0
        %v5267 = vadd.f32 %v5265, %v5266
        %v5268 = vsel %vm5258, %v5231, 0.0
        %v5269 = vadd.f32 %v5267, %v5268
        %v5270 = vsel %vm5258, %v5232, 0.0
        %v5271 = vadd.f32 %v5269, %v5270
        %v5272 = vsel %vm5258, %v5233, 0.0
        %v5273 = vadd.f32 %v5271, %v5272
        %v5274 = vsel %vm5258, %v5234, 0.0
        %v5275 = vadd.f32 %v5273, %v5274
        %v5276 = vsel %vm5258, %v5235, 0.0
        %v5277 = vadd.f32 %v5275, %v5276
        %v5278 = vsel %vm5258, %v5236, 0.0
        %v5279 = vadd.f32 %v5277, %v5278
        %v5280 = vsel %vm5258, %v5237, 0.0
        %v5281 = vadd.f32 %v5279, %v5280
        %v5282 = vsel %vm5258, %v5238, 0.0
        %v5283 = vadd.f32 %v5281, %v5282
        %v5284 = vsel %vm5258, %v5239, 0.0
        %v5285 = vadd.f32 %v5283, %v5284
        %v5286 = vsel %vm5258, %v5240, 0.0
        %v5287 = vadd.f32 %v5285, %v5286
        %v5288 = vsel %vm5258, %v5241, 0.0
        %v5289 = vadd.f32 %v5287, %v5288
        %v5290 = vsel %vm5258, %v5242, 0.0
        %v5291 = vadd.f32 %v5289, %v5290
        %v5292 = vsel %vm5258, %v5243, 0.0
        %v5293 = vadd.f32 %v5291, %v5292
        %v5294 = vsel %vm5258, %v5244, 0.0
        %v5295 = vadd.f32 %v5293, %v5294
        %v5296 = vsel %vm5258, %v5245, 0.0
        %v5297 = vadd.f32 %v5295, %v5296
        %v5298 = vsel %vm5258, %v5246, 0.0
        %v5299 = vadd.f32 %v5297, %v5298
        %v5300 = vsel %vm5258, %v5247, 0.0
        %v5301 = vadd.f32 %v5299, %v5300
        %v5302 = vsel %vm5258, %v5248, 0.0
        %v5303 = vadd.f32 %v5301, %v5302
        %v5304 = vsel %vm5258, %v5249, 0.0
        %v5305 = vadd.f32 %v5303, %v5304
        %v5306 = vsel %vm5258, %v5250, 0.0
        %v5307 = vadd.f32 %v5305, %v5306
        %v5308 = vsel %vm5258, %v5251, 0.0
        %v5309 = vadd.f32 %v5307, %v5308
        %v5310 = vsel %vm5258, %v5252, 0.0
        %v5311 = vadd.f32 %v5309, %v5310
        %v5312 = vsel %vm5258, %v5253, 0.0
        %v5313 = vadd.f32 %v5311, %v5312
        %v5314 = vsel %vm5258, %v5254, 0.0
        %v5315 = vadd.f32 %v5313, %v5314
        %v5316 = vsel %vm5258, %v5255, 0.0
        %v5317 = vadd.f32 %v5315, %v5316
        %v5318 = vsel %vm5258, %v5256, 0.0
        %v5319 = vadd.f32 %v5317, %v5318
        %v5320 = vsel %vm5258, %v5257, 0.0
        %v5321 = vadd.f32 %v5319, %v5320
        %v5322 = vrot.slane %v5321, 4
        %v5323 = vadd.f32 %v5321, %v5322
        %v5324 = vrot.slane %v5323, 2
        %v5325 = vadd.f32 %v5323, %v5324
        %v5326 = vrot.slane %v5325, 1
        %v5327 = vadd.f32 %v5325, %v5326
        %v5328 = vmul.f32 %v5226, %v5226
        %v5329 = vmul.f32 %v5227, %v5227
        %v5330 = vmul.f32 %v5228, %v5228
        %v5331 = vmul.f32 %v5229, %v5229
        %v5332 = vmul.f32 %v5230, %v5230
        %v5333 = vmul.f32 %v5231, %v5231
        %v5334 = vmul.f32 %v5232, %v5232
        %v5335 = vmul.f32 %v5233, %v5233
        %v5336 = vmul.f32 %v5234, %v5234
        %v5337 = vmul.f32 %v5235, %v5235
        %v5338 = vmul.f32 %v5236, %v5236
        %v5339 = vmul.f32 %v5237, %v5237
        %v5340 = vmul.f32 %v5238, %v5238
        %v5341 = vmul.f32 %v5239, %v5239
        %v5342 = vmul.f32 %v5240, %v5240
        %v5343 = vmul.f32 %v5241, %v5241
        %v5344 = vmul.f32 %v5242, %v5242
        %v5345 = vmul.f32 %v5243, %v5243
        %v5346 = vmul.f32 %v5244, %v5244
        %v5347 = vmul.f32 %v5245, %v5245
        %v5348 = vmul.f32 %v5246, %v5246
        %v5349 = vmul.f32 %v5247, %v5247
        %v5350 = vmul.f32 %v5248, %v5248
        %v5351 = vmul.f32 %v5249, %v5249
        %v5352 = vmul.f32 %v5250, %v5250
        %v5353 = vmul.f32 %v5251, %v5251
        %v5354 = vmul.f32 %v5252, %v5252
        %v5355 = vmul.f32 %v5253, %v5253
        %v5356 = vmul.f32 %v5254, %v5254
        %v5357 = vmul.f32 %v5255, %v5255
        %v5358 = vmul.f32 %v5256, %v5256
        %v5359 = vmul.f32 %v5257, %v5257
        %v5360 = vsel %vm5258, %v5328, 0.0
        %v5361 = vsel %vm5258, %v5329, 0.0
        %v5362 = vadd.f32 %v5360, %v5361
        %v5363 = vsel %vm5258, %v5330, 0.0
        %v5364 = vadd.f32 %v5362, %v5363
        %v5365 = vsel %vm5258, %v5331, 0.0
        %v5366 = vadd.f32 %v5364, %v5365
        %v5367 = vsel %vm5258, %v5332, 0.0
        %v5368 = vadd.f32 %v5366, %v5367
        %v5369 = vsel %vm5258, %v5333, 0.0
        %v5370 = vadd.f32 %v5368, %v5369
        %v5371 = vsel %vm5258, %v5334, 0.0
        %v5372 = vadd.f32 %v5370, %v5371
        %v5373 = vsel %vm5258, %v5335, 0.0
        %v5374 = vadd.f32 %v5372, %v5373
        %v5375 = vsel %vm5258, %v5336, 0.0
        %v5376 = vadd.f32 %v5374, %v5375
        %v5377 = vsel %vm5258, %v5337, 0.0
        %v5378 = vadd.f32 %v5376, %v5377
        %v5379 = vsel %vm5258, %v5338, 0.0
        %v5380 = vadd.f32 %v5378, %v5379
        %v5381 = vsel %vm5258, %v5339, 0.0
        %v5382 = vadd.f32 %v5380, %v5381
        %v5383 = vsel %vm5258, %v5340, 0.0
        %v5384 = vadd.f32 %v5382, %v5383
        %v5385 = vsel %vm5258, %v5341, 0.0
        %v5386 = vadd.f32 %v5384, %v5385
        %v5387 = vsel %vm5258, %v5342, 0.0
        %v5388 = vadd.f32 %v5386, %v5387
        %v5389 = vsel %vm5258, %v5343, 0.0
        %v5390 = vadd.f32 %v5388, %v5389
        %v5391 = vsel %vm5258, %v5344, 0.0
        %v5392 = vadd.f32 %v5390, %v5391
        %v5393 = vsel %vm5258, %v5345, 0.0
        %v5394 = vadd.f32 %v5392, %v5393
        %v5395 = vsel %vm5258, %v5346, 0.0
        %v5396 = vadd.f32 %v5394, %v5395
        %v5397 = vsel %vm5258, %v5347, 0.0
        %v5398 = vadd.f32 %v5396, %v5397
        %v5399 = vsel %vm5258, %v5348, 0.0
        %v5400 = vadd.f32 %v5398, %v5399
        %v5401 = vsel %vm5258, %v5349, 0.0
        %v5402 = vadd.f32 %v5400, %v5401
        %v5403 = vsel %vm5258, %v5350, 0.0
        %v5404 = vadd.f32 %v5402, %v5403
        %v5405 = vsel %vm5258, %v5351, 0.0
        %v5406 = vadd.f32 %v5404, %v5405
        %v5407 = vsel %vm5258, %v5352, 0.0
        %v5408 = vadd.f32 %v5406, %v5407
        %v5409 = vsel %vm5258, %v5353, 0.0
        %v5410 = vadd.f32 %v5408, %v5409
        %v5411 = vsel %vm5258, %v5354, 0.0
        %v5412 = vadd.f32 %v5410, %v5411
        %v5413 = vsel %vm5258, %v5355, 0.0
        %v5414 = vadd.f32 %v5412, %v5413
        %v5415 = vsel %vm5258, %v5356, 0.0
        %v5416 = vadd.f32 %v5414, %v5415
        %v5417 = vsel %vm5258, %v5357, 0.0
        %v5418 = vadd.f32 %v5416, %v5417
        %v5419 = vsel %vm5258, %v5358, 0.0
        %v5420 = vadd.f32 %v5418, %v5419
        %v5421 = vsel %vm5258, %v5359, 0.0
        %v5422 = vadd.f32 %v5420, %v5421
        %v5423 = vrot.slane %v5422, 4
        %v5424 = vadd.f32 %v5422, %v5423
        %v5425 = vrot.slane %v5424, 2
        %v5426 = vadd.f32 %v5424, %v5425
        %v5427 = vrot.slane %v5426, 1
        %v5428 = vadd.f32 %v5426, %v5427
        %v5429 = vld [vmem:[%s9] sm:$0xff]
        %v5430 = vld [vmem:[%s9 + $0x8] sm:$0xff]
        %v5431 = vld [vmem:[%s9 + $0x10] sm:$0xff]
        %v5432 = vld [vmem:[%s9 + $0x18] sm:$0xff]
        %v5434 = vsel %vm5258, %v5327, 0
        %5436 = vmatprep.subr.mxu0 0.0
        %5437 = vmatpush1.msra.mxu0 0.0
        %5438 = vmatprep.subr.mxu0 0.0
        %5439 = vmatpush1.msra.mxu0 0.0
        %5440 = vmatprep.subr.mxu0 0.0
        %5441 = vmatpush1.msra.mxu0 0.0
        %5442 = vmatprep.subr.mxu0 0.0
        %5443 = vmatpush1.msra.mxu0 0.0
        %5444 = vmatprep.subr.mxu0 0.0
        %5445 = vmatpush1.msra.mxu0 0.0
        %5446 = vmatprep.subr.mxu0 0.0
        %5447 = vmatpush1.msra.mxu0 0.0
        %5448 = vmatprep.subr.mxu0 0.0
        %5449 = vmatpush1.msra.mxu0 0.0
        %5450 = vmatprep.subr.mxu0 0.0
        %5451 = vmatpush1.msra.mxu0 0.0
        %5452 = vmatprep.subr.mxu0 0.0
        %5453 = vmatpush1.msra.mxu0 0.0
        %5454 = vmatprep.subr.mxu0 0.0
        %5455 = vmatpush1.msra.mxu0 0.0
        %5456 = vmatprep.subr.mxu0 0.0
        %5457 = vmatpush1.msra.mxu0 0.0
        %5458 = vmatprep.subr.mxu0 0.0
        %5459 = vmatpush1.msra.mxu0 0.0
        %5460 = vmatprep.subr.mxu0 0.0
        %5461 = vmatpush1.msra.mxu0 %v5432
        %5462 = vmatprep.subr.mxu0 0.0
        %5463 = vmatpush1.msra.mxu0 %v5431
        %5464 = vmatprep.subr.mxu0 0.0
        %5465 = vmatpush1.msra.mxu0 %v5430
        %5466 = vmatprep.subr.mxu0 0.0
        %5467 = vmatpush1.msra.mxu0 %v5429
        %5468 = vmatprep.subr.mxu0 0.0
        %5469 = vmatpush2.msra.mxu0 0.0
        %5470 = vmatprep.subr.mxu0 0.0
        %5471 = vmatpush2.msra.mxu0 0.0
        %5472 = vmatprep.subr.mxu0 0.0
        %5473 = vmatpush2.msra.mxu0 0.0
        %5474 = vmatprep.subr.mxu0 0.0
        %5475 = vmatpush2.msra.mxu0 0.0
        %5476 = vmatprep.subr.mxu0 0.0
        %5477 = vmatpush2.msra.mxu0 0.0
        %5478 = vmatprep.subr.mxu0 0.0
        %5479 = vmatpush2.msra.mxu0 0.0
        %5480 = vmatprep.subr.mxu0 0.0
        %5481 = vmatpush2.msra.mxu0 0.0
        %5482 = vmatprep.subr.mxu0 0.0
        %5483 = vmatpush2.msra.mxu0 0.0
        %5484 = vmatprep.subr.mxu0 0.0
        %5485 = vmatpush2.msra.mxu0 0.0
        %5486 = vmatprep.subr.mxu0 0.0
        %5487 = vmatpush2.msra.mxu0 0.0
        %5488 = vmatprep.subr.mxu0 0.0
        %5489 = vmatpush2.msra.mxu0 0.0
        %5490 = vmatprep.subr.mxu0 0.0
        %5491 = vmatpush2.msra.mxu0 0.0
        %5492 = vmatprep.subr.mxu0 0.0
        %5493 = vmatpush2.msra.mxu0 0.0
        %5494 = vmatprep.subr.mxu0 0.0
        %5495 = vmatpush2.msra.mxu0 0.0
        %5496 = vmatprep.subr.mxu0 0.0
        %5497 = vmatpush2.msra.mxu0 0.0
        %5498 = vmatprep.subr.mxu0 0.0
        %5499 = vmatpush2.msra.mxu0 0.0
        %5500 = vmatprep.mubr.f32.mxu0 0.0
        %5501 = vmatmul.mubr.f32.gmra.mxu0 %v5434
        %v5502 = vpop.f32.mrf.mxu0
        %v5503 = vadd.f32 0.0, %v5502
        %v5504 = vpop.f32.mrf.mxu0
        %5505 = vdwg.mxu0
        %v5507 = vsel %vm5258, %v5428, 0
        %5509 = vmatprep.subr.mxu0 0.0
        %5510 = vmatpush1.msra.mxu0 0.0
        %5511 = vmatprep.subr.mxu0 0.0
        %5512 = vmatpush1.msra.mxu0 0.0
        %5513 = vmatprep.subr.mxu0 0.0
        %5514 = vmatpush1.msra.mxu0 0.0
        %5515 = vmatprep.subr.mxu0 0.0
        %5516 = vmatpush1.msra.mxu0 0.0
        %5517 = vmatprep.subr.mxu0 0.0
        %5518 = vmatpush1.msra.mxu0 0.0
        %5519 = vmatprep.subr.mxu0 0.0
        %5520 = vmatpush1.msra.mxu0 0.0
        %5521 = vmatprep.subr.mxu0 0.0
        %5522 = vmatpush1.msra.mxu0 0.0
        %5523 = vmatprep.subr.mxu0 0.0
        %5524 = vmatpush1.msra.mxu0 0.0
        %5525 = vmatprep.subr.mxu0 0.0
        %5526 = vmatpush1.msra.mxu0 0.0
        %5527 = vmatprep.subr.mxu0 0.0
        %5528 = vmatpush1.msra.mxu0 0.0
        %5529 = vmatprep.subr.mxu0 0.0
        %5530 = vmatpush1.msra.mxu0 0.0
        %5531 = vmatprep.subr.mxu0 0.0
        %5532 = vmatpush1.msra.mxu0 0.0
        %5533 = vmatprep.subr.mxu0 0.0
        %5534 = vmatpush1.msra.mxu0 %v5432
        %5535 = vmatprep.subr.mxu0 0.0
        %5536 = vmatpush1.msra.mxu0 %v5431
        %5537 = vmatprep.subr.mxu0 0.0
        %5538 = vmatpush1.msra.mxu0 %v5430
        %5539 = vmatprep.subr.mxu0 0.0
        %5540 = vmatpush1.msra.mxu0 %v5429
        %5541 = vmatprep.subr.mxu0 0.0
        %5542 = vmatpush2.msra.mxu0 0.0
        %5543 = vmatprep.subr.mxu0 0.0
        %5544 = vmatpush2.msra.mxu0 0.0
        %5545 = vmatprep.subr.mxu0 0.0
        %5546 = vmatpush2.msra.mxu0 0.0
        %5547 = vmatprep.subr.mxu0 0.0
        %5548 = vmatpush2.msra.mxu0 0.0
        %5549 = vmatprep.subr.mxu0 0.0
        %5550 = vmatpush2.msra.mxu0 0.0
        %5551 = vmatprep.subr.mxu0 0.0
        %5552 = vmatpush2.msra.mxu0 0.0
        %5553 = vmatprep.subr.mxu0 0.0
        %5554 = vmatpush2.msra.mxu0 0.0
        %5555 = vmatprep.subr.mxu0 0.0
        %5556 = vmatpush2.msra.mxu0 0.0
        %5557 = vmatprep.subr.mxu0 0.0
        %5558 = vmatpush2.msra.mxu0 0.0
        %5559 = vmatprep.subr.mxu0 0.0
        %5560 = vmatpush2.msra.mxu0 0.0
        %5561 = vmatprep.subr.mxu0 0.0
        %5562 = vmatpush2.msra.mxu0 0.0
        %5563 = vmatprep.subr.mxu0 0.0
        %5564 = vmatpush2.msra.mxu0 0.0
        %5565 = vmatprep.subr.mxu0 0.0
        %5566 = vmatpush2.msra.mxu0 0.0
        %5567 = vmatprep.subr.mxu0 0.0
        %5568 = vmatpush2.msra.mxu0 0.0
        %5569 = vmatprep.subr.mxu0 0.0
        %5570 = vmatpush2.msra.mxu0 0.0
        %5571 = vmatprep.subr.mxu0 0.0
        %5572 = vmatpush2.msra.mxu0 0.0
        %5573 = vmatprep.mubr.f32.mxu0 0.0
        %5574 = vmatmul.mubr.f32.gmra.mxu0 %v5507
        %v5575 = vpop.f32.mrf.mxu0
        %v5576 = vadd.f32 0.0, %v5575
        %v5577 = vpop.f32.mrf.mxu0
        %5578 = vdwg.mxu0
        %v5579 = vrcp.pop 1024.0
        %v5580 = vmul.f32 %v5503, %v5579
        %v5581 = vmul.f32 %v5576, %v5579
        %v5582 = vmul.f32 %v5580, %v5580
        %v5583 = vsub.f32 %v5581, %v5582
        %v5584 = vmax.f32 %v5583, 0.0
        %v5585 = vadd.f32 %v5584, 1e-05
        %v5586 = vrsqrt.pop %v5585
        %v5587 = vlaneseq
        %v5588 = vshrl.u32 %v5587, 7
        %v5589 = vsub.s32 0, %v5588
        %v5590 = vrot.slane %v5580, %v5589
        %v5591 = vsub.f32 %v5226, %v5590
        %v5592 = vsub.f32 %v5227, %v5590
        %v5593 = vsub.f32 %v5228, %v5590
        %v5594 = vsub.f32 %v5229, %v5590
        %v5595 = vsub.f32 %v5230, %v5590
        %v5596 = vsub.f32 %v5231, %v5590
        %v5597 = vsub.f32 %v5232, %v5590
        %v5598 = vsub.f32 %v5233, %v5590
        %v5599 = vsub.f32 %v5234, %v5590
        %v5600 = vsub.f32 %v5235, %v5590
        %v5601 = vsub.f32 %v5236, %v5590
        %v5602 = vsub.f32 %v5237, %v5590
        %v5603 = vsub.f32 %v5238, %v5590
        %v5604 = vsub.f32 %v5239, %v5590
        %v5605 = vsub.f32 %v5240, %v5590
        %v5606 = vsub.f32 %v5241, %v5590
        %v5607 = vsub.f32 %v5242, %v5590
        %v5608 = vsub.f32 %v5243, %v5590
        %v5609 = vsub.f32 %v5244, %v5590
        %v5610 = vsub.f32 %v5245, %v5590
        %v5611 = vsub.f32 %v5246, %v5590
        %v5612 = vsub.f32 %v5247, %v5590
        %v5613 = vsub.f32 %v5248, %v5590
        %v5614 = vsub.f32 %v5249, %v5590
        %v5615 = vsub.f32 %v5250, %v5590
        %v5616 = vsub.f32 %v5251, %v5590
        %v5617 = vsub.f32 %v5252, %v5590
        %v5618 = vsub.f32 %v5253, %v5590
        %v5619 = vsub.f32 %v5254, %v5590
        %v5620 = vsub.f32 %v5255, %v5590
        %v5621 = vsub.f32 %v5256, %v5590
        %v5622 = vsub.f32 %v5257, %v5590
        %v5623 = vlaneseq
        %v5624 = vshrl.u32 %v5623, 7
        %v5625 = vsub.s32 0, %v5624
        %v5626 = vrot.slane %v5586, %v5625
        %v5627 = vmul.f32 %v5591, %v5626
        %v5628 = vmul.f32 %v5592, %v5626
        %v5629 = vmul.f32 %v5593, %v5626
        %v5630 = vmul.f32 %v5594, %v5626
        %v5631 = vmul.f32 %v5595, %v5626
        %v5632 = vmul.f32 %v5596, %v5626
        %v5633 = vmul.f32 %v5597, %v5626
        %v5634 = vmul.f32 %v5598, %v5626
        %v5635 = vmul.f32 %v5599, %v5626
        %v5636 = vmul.f32 %v5600, %v5626
        %v5637 = vmul.f32 %v5601, %v5626
        %v5638 = vmul.f32 %v5602, %v5626
        %v5639 = vmul.f32 %v5603, %v5626
        %v5640 = vmul.f32 %v5604, %v5626
        %v5641 = vmul.f32 %v5605, %v5626
        %v5642 = vmul.f32 %v5606, %v5626
        %v5643 = vmul.f32 %v5607, %v5626
        %v5644 = vmul.f32 %v5608, %v5626
        %v5645 = vmul.f32 %v5609, %v5626
        %v5646 = vmul.f32 %v5610, %v5626
        %v5647 = vmul.f32 %v5611, %v5626
        %v5648 = vmul.f32 %v5612, %v5626
        %v5649 = vmul.f32 %v5613, %v5626
        %v5650 = vmul.f32 %v5614, %v5626
        %v5651 = vmul.f32 %v5615, %v5626
        %v5652 = vmul.f32 %v5616, %v5626
        %v5653 = vmul.f32 %v5617, %v5626
        %v5654 = vmul.f32 %v5618, %v5626
        %v5655 = vmul.f32 %v5619, %v5626
        %v5656 = vmul.f32 %v5620, %v5626
        %v5657 = vmul.f32 %v5621, %v5626
        %v5658 = vmul.f32 %v5622, %v5626
        %v5659 = vld [vmem:[%s7] sm:$0x1]
        %v5661 = vlaneseq
        %v5662 = vshrl.u32 %v5661, 7
        %v5663 = vsub.s32 0, %v5662
        %v5664 = vrot.slane %v5659, %v5663
        %v5666 = vmul.f32 %v5627, %v5664
        %v5667 = vmul.f32 %v5628, %v5664
        %v5668 = vmul.f32 %v5629, %v5664
        %v5669 = vmul.f32 %v5630, %v5664
        %v5670 = vmul.f32 %v5631, %v5664
        %v5671 = vmul.f32 %v5632, %v5664
        %v5672 = vmul.f32 %v5633, %v5664
        %v5673 = vmul.f32 %v5634, %v5664
        %v5674 = vmul.f32 %v5635, %v5664
        %v5675 = vmul.f32 %v5636, %v5664
        %v5676 = vmul.f32 %v5637, %v5664
        %v5677 = vmul.f32 %v5638, %v5664
        %v5678 = vmul.f32 %v5639, %v5664
        %v5679 = vmul.f32 %v5640, %v5664
        %v5680 = vmul.f32 %v5641, %v5664
        %v5681 = vmul.f32 %v5642, %v5664
        %v5682 = vmul.f32 %v5643, %v5664
        %v5683 = vmul.f32 %v5644, %v5664
        %v5684 = vmul.f32 %v5645, %v5664
        %v5685 = vmul.f32 %v5646, %v5664
        %v5686 = vmul.f32 %v5647, %v5664
        %v5687 = vmul.f32 %v5648, %v5664
        %v5688 = vmul.f32 %v5649, %v5664
        %v5689 = vmul.f32 %v5650, %v5664
        %v5690 = vmul.f32 %v5651, %v5664
        %v5691 = vmul.f32 %v5652, %v5664
        %v5692 = vmul.f32 %v5653, %v5664
        %v5693 = vmul.f32 %v5654, %v5664
        %v5694 = vmul.f32 %v5655, %v5664
        %v5695 = vmul.f32 %v5656, %v5664
        %v5696 = vmul.f32 %v5657, %v5664
        %v5697 = vmul.f32 %v5658, %v5664
        %v5698 = vld [vmem:[%s8] sm:$0x1]
        %v5700 = vlaneseq
        %v5701 = vshrl.u32 %v5700, 7
        %v5702 = vsub.s32 0, %v5701
        %v5703 = vrot.slane %v5698, %v5702
        %v5705 = vadd.f32 %v5666, %v5703
        %v5706 = vadd.f32 %v5667, %v5703
        %v5707 = vadd.f32 %v5668, %v5703
        %v5708 = vadd.f32 %v5669, %v5703
        %v5709 = vadd.f32 %v5670, %v5703
        %v5710 = vadd.f32 %v5671, %v5703
        %v5711 = vadd.f32 %v5672, %v5703
        %v5712 = vadd.f32 %v5673, %v5703
        %v5713 = vadd.f32 %v5674, %v5703
        %v5714 = vadd.f32 %v5675, %v5703
        %v5715 = vadd.f32 %v5676, %v5703
        %v5716 = vadd.f32 %v5677, %v5703
        %v5717 = vadd.f32 %v5678, %v5703
        %v5718 = vadd.f32 %v5679, %v5703
        %v5719 = vadd.f32 %v5680, %v5703
        %v5720 = vadd.f32 %v5681, %v5703
        %v5721 = vadd.f32 %v5682, %v5703
        %v5722 = vadd.f32 %v5683, %v5703
        %v5723 = vadd.f32 %v5684, %v5703
        %v5724 = vadd.f32 %v5685, %v5703
        %v5725 = vadd.f32 %v5686, %v5703
        %v5726 = vadd.f32 %v5687, %v5703
        %v5727 = vadd.f32 %v5688, %v5703
        %v5728 = vadd.f32 %v5689, %v5703
        %v5729 = vadd.f32 %v5690, %v5703
        %v5730 = vadd.f32 %v5691, %v5703
        %v5731 = vadd.f32 %v5692, %v5703
        %v5732 = vadd.f32 %v5693, %v5703
        %v5733 = vadd.f32 %v5694, %v5703
        %v5734 = vadd.f32 %v5695, %v5703
        %v5735 = vadd.f32 %v5696, %v5703
        %v5736 = vadd.f32 %v5697, %v5703
        %v5737 = vxor.u32 %v5705, 2147483648
        %v5738 = vxor.u32 %v5706, 2147483648
        %v5739 = vxor.u32 %v5707, 2147483648
        %v5740 = vxor.u32 %v5708, 2147483648
        %v5741 = vxor.u32 %v5709, 2147483648
        %v5742 = vxor.u32 %v5710, 2147483648
        %v5743 = vxor.u32 %v5711, 2147483648
        %v5744 = vxor.u32 %v5712, 2147483648
        %v5745 = vxor.u32 %v5713, 2147483648
        %v5746 = vxor.u32 %v5714, 2147483648
        %v5747 = vxor.u32 %v5715, 2147483648
        %v5748 = vxor.u32 %v5716, 2147483648
        %v5749 = vxor.u32 %v5717, 2147483648
        %v5750 = vxor.u32 %v5718, 2147483648
        %v5751 = vxor.u32 %v5719, 2147483648
        %v5752 = vxor.u32 %v5720, 2147483648
        %v5753 = vxor.u32 %v5721, 2147483648
        %v5754 = vxor.u32 %v5722, 2147483648
        %v5755 = vxor.u32 %v5723, 2147483648
        %v5756 = vxor.u32 %v5724, 2147483648
        %v5757 = vxor.u32 %v5725, 2147483648
        %v5758 = vxor.u32 %v5726, 2147483648
        %v5759 = vxor.u32 %v5727, 2147483648
        %v5760 = vxor.u32 %v5728, 2147483648
        %v5761 = vxor.u32 %v5729, 2147483648
        %v5762 = vxor.u32 %v5730, 2147483648
        %v5763 = vxor.u32 %v5731, 2147483648
        %v5764 = vxor.u32 %v5732, 2147483648
        %v5765 = vxor.u32 %v5733, 2147483648
        %v5766 = vxor.u32 %v5734, 2147483648
        %v5767 = vxor.u32 %v5735, 2147483648
        %v5768 = vxor.u32 %v5736, 2147483648
        %v5769 = vmul.f32 %v5737, 1.442695
        %v5770 = vpow.pop %v5769
        %v5771 = vmul.f32 %v5738, 1.442695
        %v5772 = vpow.pop %v5771
        %v5773 = vmul.f32 %v5739, 1.442695
        %v5774 = vpow.pop %v5773
        %v5775 = vmul.f32 %v5740, 1.442695
        %v5776 = vpow.pop %v5775
        %v5777 = vmul.f32 %v5741, 1.442695
        %v5778 = vpow.pop %v5777
        %v5779 = vmul.f32 %v5742, 1.442695
        %v5780 = vpow.pop %v5779
        %v5781 = vmul.f32 %v5743, 1.442695
        %v5782 = vpow.pop %v5781
        %v5783 = vmul.f32 %v5744, 1.442695
        %v5784 = vpow.pop %v5783
        %v5785 = vmul.f32 %v5745, 1.442695
        %v5786 = vpow.pop %v5785
        %v5787 = vmul.f32 %v5746, 1.442695
        %v5788 = vpow.pop %v5787
        %v5789 = vmul.f32 %v5747, 1.442695
        %v5790 = vpow.pop %v5789
        %v5791 = vmul.f32 %v5748, 1.442695
        %v5792 = vpow.pop %v5791
        %v5793 = vmul.f32 %v5749, 1.442695
        %v5794 = vpow.pop %v5793
        %v5795 = vmul.f32 %v5750, 1.442695
        %v5796 = vpow.pop %v5795
        %v5797 = vmul.f32 %v5751, 1.442695
        %v5798 = vpow.pop %v5797
        %v5799 = vmul.f32 %v5752, 1.442695
        %v5800 = vpow.pop %v5799
        %v5801 = vmul.f32 %v5753, 1.442695
        %v5802 = vpow.pop %v5801
        %v5803 = vmul.f32 %v5754, 1.442695
        %v5804 = vpow.pop %v5803
        %v5805 = vmul.f32 %v5755, 1.442695
        %v5806 = vpow.pop %v5805
        %v5807 = vmul.f32 %v5756, 1.442695
        %v5808 = vpow.pop %v5807
        %v5809 = vmul.f32 %v5757, 1.442695
        %v5810 = vpow.pop %v5809
        %v5811 = vmul.f32 %v5758, 1.442695
        %v5812 = vpow.pop %v5811
        %v5813 = vmul.f32 %v5759, 1.442695
        %v5814 = vpow.pop %v5813
        %v5815 = vmul.f32 %v5760, 1.442695
        %v5816 = vpow.pop %v5815
        %v5817 = vmul.f32 %v5761, 1.442695
        %v5818 = vpow.pop %v5817
        %v5819 = vmul.f32 %v5762, 1.442695
        %v5820 = vpow.pop %v5819
        %v5821 = vmul.f32 %v5763, 1.442695
        %v5822 = vpow.pop %v5821
        %v5823 = vmul.f32 %v5764, 1.442695
        %v5824 = vpow.pop %v5823
        %v5825 = vmul.f32 %v5765, 1.442695
        %v5826 = vpow.pop %v5825
        %v5827 = vmul.f32 %v5766, 1.442695
        %v5828 = vpow.pop %v5827
        %v5829 = vmul.f32 %v5767, 1.442695
        %v5830 = vpow.pop %v5829
        %v5831 = vmul.f32 %v5768, 1.442695
        %v5832 = vpow.pop %v5831
        %v5833 = vadd.f32 %v5770, 1.0
        %v5834 = vadd.f32 %v5772, 1.0
        %v5835 = vadd.f32 %v5774, 1.0
        %v5836 = vadd.f32 %v5776, 1.0
        %v5837 = vadd.f32 %v5778, 1.0
        %v5838 = vadd.f32 %v5780, 1.0
        %v5839 = vadd.f32 %v5782, 1.0
        %v5840 = vadd.f32 %v5784, 1.0
        %v5841 = vadd.f32 %v5786, 1.0
        %v5842 = vadd.f32 %v5788, 1.0
        %v5843 = vadd.f32 %v5790, 1.0
        %v5844 = vadd.f32 %v5792, 1.0
        %v5845 = vadd.f32 %v5794, 1.0
        %v5846 = vadd.f32 %v5796, 1.0
        %v5847 = vadd.f32 %v5798, 1.0
        %v5848 = vadd.f32 %v5800, 1.0
        %v5849 = vadd.f32 %v5802, 1.0
        %v5850 = vadd.f32 %v5804, 1.0
        %v5851 = vadd.f32 %v5806, 1.0
        %v5852 = vadd.f32 %v5808, 1.0
        %v5853 = vadd.f32 %v5810, 1.0
        %v5854 = vadd.f32 %v5812, 1.0
        %v5855 = vadd.f32 %v5814, 1.0
        %v5856 = vadd.f32 %v5816, 1.0
        %v5857 = vadd.f32 %v5818, 1.0
        %v5858 = vadd.f32 %v5820, 1.0
        %v5859 = vadd.f32 %v5822, 1.0
        %v5860 = vadd.f32 %v5824, 1.0
        %v5861 = vadd.f32 %v5826, 1.0
        %v5862 = vadd.f32 %v5828, 1.0
        %v5863 = vadd.f32 %v5830, 1.0
        %v5864 = vadd.f32 %v5832, 1.0
        %v5865 = vrcp.pop %v5833
        %v5866 = vmul.f32 1.0, %v5865
        %v5867 = vrcp.pop %v5834
        %v5868 = vmul.f32 1.0, %v5867
        %v5869 = vrcp.pop %v5835
        %v5870 = vmul.f32 1.0, %v5869
        %v5871 = vrcp.pop %v5836
        %v5872 = vmul.f32 1.0, %v5871
        %v5873 = vrcp.pop %v5837
        %v5874 = vmul.f32 1.0, %v5873
        %v5875 = vrcp.pop %v5838
        %v5876 = vmul.f32 1.0, %v5875
        %v5877 = vrcp.pop %v5839
        %v5878 = vmul.f32 1.0, %v5877
        %v5879 = vrcp.pop %v5840
        %v5880 = vmul.f32 1.0, %v5879
        %v5881 = vrcp.pop %v5841
        %v5882 = vmul.f32 1.0, %v5881
        %v5883 = vrcp.pop %v5842
        %v5884 = vmul.f32 1.0, %v5883
        %v5885 = vrcp.pop %v5843
        %v5886 = vmul.f32 1.0, %v5885
        %v5887 = vrcp.pop %v5844
        %v5888 = vmul.f32 1.0, %v5887
        %v5889 = vrcp.pop %v5845
        %v5890 = vmul.f32 1.0, %v5889
        %v5891 = vrcp.pop %v5846
        %v5892 = vmul.f32 1.0, %v5891
        %v5893 = vrcp.pop %v5847
        %v5894 = vmul.f32 1.0, %v5893
        %v5895 = vrcp.pop %v5848
        %v5896 = vmul.f32 1.0, %v5895
        %v5897 = vrcp.pop %v5849
        %v5898 = vmul.f32 1.0, %v5897
        %v5899 = vrcp.pop %v5850
        %v5900 = vmul.f32 1.0, %v5899
        %v5901 = vrcp.pop %v5851
        %v5902 = vmul.f32 1.0, %v5901
        %v5903 = vrcp.pop %v5852
        %v5904 = vmul.f32 1.0, %v5903
        %v5905 = vrcp.pop %v5853
        %v5906 = vmul.f32 1.0, %v5905
        %v5907 = vrcp.pop %v5854
        %v5908 = vmul.f32 1.0, %v5907
        %v5909 = vrcp.pop %v5855
        %v5910 = vmul.f32 1.0, %v5909
        %v5911 = vrcp.pop %v5856
        %v5912 = vmul.f32 1.0, %v5911
        %v5913 = vrcp.pop %v5857
        %v5914 = vmul.f32 1.0, %v5913
        %v5915 = vrcp.pop %v5858
        %v5916 = vmul.f32 1.0, %v5915
        %v5917 = vrcp.pop %v5859
        %v5918 = vmul.f32 1.0, %v5917
        %v5919 = vrcp.pop %v5860
        %v5920 = vmul.f32 1.0, %v5919
        %v5921 = vrcp.pop %v5861
        %v5922 = vmul.f32 1.0, %v5921
        %v5923 = vrcp.pop %v5862
        %v5924 = vmul.f32 1.0, %v5923
        %v5925 = vrcp.pop %v5863
        %v5926 = vmul.f32 1.0, %v5925
        %v5927 = vrcp.pop %v5864
        %v5928 = vmul.f32 1.0, %v5927
        %v5929 = vmul.f32 %v5705, %v5866
        %v5930 = vmul.f32 %v5706, %v5868
        %v5931 = vmul.f32 %v5707, %v5870
        %v5932 = vmul.f32 %v5708, %v5872
        %v5933 = vmul.f32 %v5709, %v5874
        %v5934 = vmul.f32 %v5710, %v5876
        %v5935 = vmul.f32 %v5711, %v5878
        %v5936 = vmul.f32 %v5712, %v5880
        %v5937 = vmul.f32 %v5713, %v5882
        %v5938 = vmul.f32 %v5714, %v5884
        %v5939 = vmul.f32 %v5715, %v5886
        %v5940 = vmul.f32 %v5716, %v5888
        %v5941 = vmul.f32 %v5717, %v5890
        %v5942 = vmul.f32 %v5718, %v5892
        %v5943 = vmul.f32 %v5719, %v5894
        %v5944 = vmul.f32 %v5720, %v5896
        %v5945 = vmul.f32 %v5721, %v5898
        %v5946 = vmul.f32 %v5722, %v5900
        %v5947 = vmul.f32 %v5723, %v5902
        %v5948 = vmul.f32 %v5724, %v5904
        %v5949 = vmul.f32 %v5725, %v5906
        %v5950 = vmul.f32 %v5726, %v5908
        %v5951 = vmul.f32 %v5727, %v5910
        %v5952 = vmul.f32 %v5728, %v5912
        %v5953 = vmul.f32 %v5729, %v5914
        %v5954 = vmul.f32 %v5730, %v5916
        %v5955 = vmul.f32 %v5731, %v5918
        %v5956 = vmul.f32 %v5732, %v5920
        %v5957 = vmul.f32 %v5733, %v5922
        %v5958 = vmul.f32 %v5734, %v5924
        %v5959 = vmul.f32 %v5735, %v5926
        %v5960 = vmul.f32 %v5736, %v5928
        %5961 = vst.msk [vmem:[%s352] sm:$0xff] %vm5258, %v5929
        %5962 = vst.msk [vmem:[%s352 + $0x8] sm:$0xff] %vm5258, %v5930
        %5963 = vst.msk [vmem:[%s352 + $0x10] sm:$0xff] %vm5258, %v5931
        %5964 = vst.msk [vmem:[%s352 + $0x18] sm:$0xff] %vm5258, %v5932
        %5965 = vst.msk [vmem:[%s352 + $0x20] sm:$0xff] %vm5258, %v5933
        %5966 = vst.msk [vmem:[%s352 + $0x28] sm:$0xff] %vm5258, %v5934
        %5967 = vst.msk [vmem:[%s352 + $0x30] sm:$0xff] %vm5258, %v5935
        %5968 = vst.msk [vmem:[%s352 + $0x38] sm:$0xff] %vm5258, %v5936
        %5969 = vst.msk [vmem:[%s352 + $0x40] sm:$0xff] %vm5258, %v5937
        %5970 = vst.msk [vmem:[%s352 + $0x48] sm:$0xff] %vm5258, %v5938
        %5971 = vst.msk [vmem:[%s352 + $0x50] sm:$0xff] %vm5258, %v5939
        %5972 = vst.msk [vmem:[%s352 + $0x58] sm:$0xff] %vm5258, %v5940
        %5973 = vst.msk [vmem:[%s352 + $0x60] sm:$0xff] %vm5258, %v5941
        %5974 = vst.msk [vmem:[%s352 + $0x68] sm:$0xff] %vm5258, %v5942
        %5975 = vst.msk [vmem:[%s352 + $0x70] sm:$0xff] %vm5258, %v5943
        %5976 = vst.msk [vmem:[%s352 + $0x78] sm:$0xff] %vm5258, %v5944
        %5977 = vst.msk [vmem:[%s352 + $0x80] sm:$0xff] %vm5258, %v5945
        %5978 = vst.msk [vmem:[%s352 + $0x88] sm:$0xff] %vm5258, %v5946
        %5979 = vst.msk [vmem:[%s352 + $0x90] sm:$0xff] %vm5258, %v5947
        %5980 = vst.msk [vmem:[%s352 + $0x98] sm:$0xff] %vm5258, %v5948
        %5981 = vst.msk [vmem:[%s352 + $0xa0] sm:$0xff] %vm5258, %v5949
        %5982 = vst.msk [vmem:[%s352 + $0xa8] sm:$0xff] %vm5258, %v5950
        %5983 = vst.msk [vmem:[%s352 + $0xb0] sm:$0xff] %vm5258, %v5951
        %5984 = vst.msk [vmem:[%s352 + $0xb8] sm:$0xff] %vm5258, %v5952
        %5985 = vst.msk [vmem:[%s352 + $0xc0] sm:$0xff] %vm5258, %v5953
        %5986 = vst.msk [vmem:[%s352 + $0xc8] sm:$0xff] %vm5258, %v5954
        %5987 = vst.msk [vmem:[%s352 + $0xd0] sm:$0xff] %vm5258, %v5955
        %5988 = vst.msk [vmem:[%s352 + $0xd8] sm:$0xff] %vm5258, %v5956
        %5989 = vst.msk [vmem:[%s352 + $0xe0] sm:$0xff] %vm5258, %v5957
        %5990 = vst.msk [vmem:[%s352 + $0xe8] sm:$0xff] %vm5258, %v5958
        %5991 = vst.msk [vmem:[%s352 + $0xf0] sm:$0xff] %vm5258, %v5959
        %5992 = vst.msk [vmem:[%s352 + $0xf8] sm:$0xff] %vm5258, %v5960
        %s5993 = sand.u32 %s247, 1
        %s5994 = scalar_lea.sflag [#allocation4], %s5993
        %s5995 = sand.u32 %s247, 1
        %s5996 = smul.addr %s5995, 256
        %s5997 = scalar_lea.vmem [#allocation3], %s5996
        // Predicated region
        $region61: #{tpu_custom_call.1} parent=59 // pred_check
          %p5998 = pneg %p257
        $region62: #{tpu_custom_call.1} parent=59 // pred_check_branch
          %6000 = sbr.rel (%p5998) target = $region64
        $region63: #{tpu_custom_call.1} parent=59 // pred_region
          %s6002 = ssub.s32 4096, 4096
          %6003 = vsyncadd %s5994, %s6002
          %s6004 = smul.addr %s24, 32
          %s6005 = smul.addr %s6004, 128
          %s6006 = scalar_lea.hbm %s10, %s6005
          %s6007 = sshll.u32 %s5997, 4
          %s6008 = int_to_ptr.vmem [resolvable:$true] %s6007
          %6013 = dma.vmem_to_hbm [thread:$0]  %s6008, 4096, %s6006, %s5994, 128, 128, 8
        $region64: #{tpu_custom_call.1} parent=59 // pred_fallthru
          _
      $region60: #{tpu_custom_call.1} parent=5 // pred_fallthru
        _
      %p6014 = scmp.le.s32.totalorder 2, %s19
      // Predicated region
      $region65: #{tpu_custom_call.1} parent=5 // pred_check
        %p6015 = pneg %p6014
      $region66: #{tpu_custom_call.1} parent=5 // pred_check_branch
        %6017 = sbr.rel (%p6015) target = $region68
      $region67: #{tpu_custom_call.1} parent=5 // pred_region
        %s6018 = ssub.s32 %s19, 2
        // Predicated region
        $region69: #{tpu_custom_call.1} parent=67 // pred_check
          %p6019 = pneg %p263
        $region70: #{tpu_custom_call.1} parent=67 // pred_check_branch
          %6021 = sbr.rel (%p6019) target = $region72
        $region71: #{tpu_custom_call.1} parent=67 // pred_region
          %s6022 = sand.u32 %s248, 1
          %s6023 = scalar_lea.sflag [#allocation4], %s6022
          %s6024 = sand.u32 %s248, 1
          %s6025 = smul.addr %s6024, 256
          %s6026 = scalar_lea.vmem [#allocation3], %s6025
          %6027 = dma.done %s6023, 4096
        $region72: #{tpu_custom_call.1} parent=67 // pred_fallthru
          _
      $region68: #{tpu_custom_call.1} parent=5 // pred_fallthru
        _
    $region6: #{tpu_custom_call.1} parent=1 // loop_footer
      %s23 = sadd.s32 1, %s19
    $region7: #{tpu_custom_call.1} parent=1 // loop_footer_branch
      %18 = sbr.rel target = $region3
    $region8: #{tpu_custom_call.1} parent=1 // loop_exit
      _
    %6028 = vsyncpa [#allocation4], 1
    %s6029 = scalar_lea.sflag [#allocation4], 1
    %6030 = vsyncpa %s6029, 1

</llo_original>
